<compile_context>
chip_gen: v6e
topology: v6e:2x2x1
jax: 0.10.0
libtpu: 0.0.40
codegen_flags: <defaults>
</compile_context>

<pallas_src>
import jax
import jax.numpy as jnp
from jax.experimental import pallas as pl
from jax.experimental.pallas import tpu as pltpu

EPS = 1e-5


# --------------------------------------------------------------------------
# helpers
def _largest_tile(total, align, cap):
    """Largest t <= cap with t % align == 0 and total % t == 0 (else total)."""
    best = None
    t = align
    while t <= min(total, cap):
        if total % t == 0:
            best = t
        t += align
    return best if best is not None else total


def _pick_row_block(ho, wo, cin, cpg, budget=8 * 1024 * 1024):
    """Output-row block: biggest multiple-of-8 divisor of ho under the VMEM
    budget, falling back to the full extent (always a legal block shape)."""
    def bytes_for(r):
        return (4 * cin + cpg) * r * wo * 4 * 2   # 4 quadrants + out, 2x buffered
    best = None
    r = 8
    while r <= ho:
        if ho % r == 0 and bytes_for(r) <= budget:
            best = r
        r += 8
    return best if best is not None else ho


# --------------------------------------------------------------------------
# kernel A: per-input-channel first/second moments (Gram matrix + sums)
def _moments_kernel(x_ref, g_ref):
    @pl.when((pl.program_id(0) == 0) & (pl.program_id(1) == 0))
    def _():
        g_ref[...] = jnp.zeros_like(g_ref)

    x = x_ref[0]                                         # (Cin, T)
    cin = x.shape[0]
    cols = [jnp.sum(x * x[j:j + 1, :], axis=1, keepdims=True)
            for j in range(cin)]                         # G[:, j]
    cols.append(jnp.sum(x, axis=1, keepdims=True))       # S
    g_ref[...] += jnp.concatenate(cols, axis=1)          # (Cin, Cin + 1)


def input_moments(x):
    """x: (N,Cin,H,W) -> (Cin,Cin+1): [:, :Cin]=sum x_i*x_j, [:, Cin]=sum x_i."""
    N, Cin, H, W = x.shape
    HW = H * W
    T = _largest_tile(HW, 128, 64 * 1024)
    x_flat = x.reshape(N, Cin, HW)                       # free reshape
    return pl.pallas_call(
        _moments_kernel,
        out_shape=jax.ShapeDtypeStruct((Cin, Cin + 1), jnp.float32),
        grid=(N, HW // T),
        in_specs=[pl.BlockSpec((1, Cin, T), lambda n, t: (n, 0, t))],
        out_specs=pl.BlockSpec((Cin, Cin + 1), lambda n, t: (0, 0)),
        compiler_params=pltpu.CompilerParams(
            dimension_semantics=("arbitrary", "arbitrary")),
    )(x_flat)


# --------------------------------------------------------------------------
# kernel B: fused 1x1 conv + BN apply + ReLU + 2x2/2 max-pool (NCHW in/out)
def _fused_conv_bn_pool_kernel(w_ref, s_ref, x00_ref, x01_ref, x10_ref,
                               x11_ref, o_ref):
    # w_ref: (Cout, Cin) SMEM -- conv weights pre-scaled by the BN scale
    # s_ref: (Cout,)     SMEM -- per-channel shift (conv bias + BN folded in)
    # xij_ref: (1, Cin, R, Wo) VMEM -- the 4 pool taps of the padded input
    # o_ref:  (1, CPG, R, Wo)  VMEM -- this step's output-channel group
    cg = pl.program_id(2)
    cpg = o_ref.shape[1]
    cin = x00_ref.shape[1]
    quads = (x00_ref, x01_ref, x10_ref, x11_ref)

    for co in range(cpg):                                # static unroll
        c = cg * cpg + co

        def conv(q_ref):
            acc = q_ref[0, 0] * w_ref[c, 0]
            for ci in range(1, cin):
                acc = acc + q_ref[0, ci] * w_ref[c, ci]
            return acc

        z = conv(quads[0])
        for q in quads[1:]:
            z = jnp.maximum(z, conv(q))                  # 2x2 max-pool
        o_ref[0, co] = jnp.maximum(z + s_ref[c], 0.0)    # shift + ReLU


def fused_conv_bn_pool(x00, x01, x10, x11, wz, sh):
    N, Cin, Ho, Wo = x00.shape
    Cout = wz.shape[0]
    CG = 2 if Cout % 2 == 0 else 1          # >=2 parallel grid steps (v7x, N=1)
    cpg = Cout // CG
    R = _pick_row_block(Ho, Wo, Cin, cpg)
    smem = pl.BlockSpec(memory_space=pltpu.MemorySpace.SMEM)
    q_spec = pl.BlockSpec((1, Cin, R, Wo), lambda n, h, cg: (n, 0, h, 0))
    return pl.pallas_call(
        _fused_conv_bn_pool_kernel,
        out_shape=jax.ShapeDtypeStruct((N, Cout, Ho, Wo), jnp.float32),
        grid=(N, Ho // R, CG),               # CG innermost: input block reused
        in_specs=[smem, smem, q_spec, q_spec, q_spec, q_spec],
        out_specs=pl.BlockSpec((1, cpg, R, Wo),
                               lambda n, h, cg: (n, cg, h, 0)),
        compiler_params=pltpu.CompilerParams(
            dimension_semantics=("parallel", "parallel", "parallel"),
            vmem_limit_bytes=48 * 1024 * 1024),
    )(wz, sh, x00, x01, x10, x11)


# --------------------------------------------------------------------------
# full forward
def model_forward(x, w_conv, b_conv, gamma, beta):
    N, Cin, H, W = x.shape
    Cout = w_conv.shape[0]
    if H % 2 != 0 or W % 2 != 0:
        # TODO(synk): odd spatial sizes (pool would drop the last padded row/col).
        raise NotImplementedError("even H and W required")
    Hp, Wp = H + 2, W + 2
    Ho, Wo = Hp // 2, Wp // 2
    W3 = w_conv.reshape(Cout, Cin).astype(jnp.float32)

    # 1) BN batch statistics of the padded conv output from input moments only.
    g = input_moments(x)
    G3 = g[:, :Cin]                                   # sum_p x_i x_j
    S = g[:, Cin]                                     # sum_p x_i
    P = jnp.float32(N * Hp * Wp)                      # padded pixel count
    m0 = (W3 @ S) / P                                 # mean of conv w/o bias
    ex2 = jnp.einsum("ci,ij,cj->c", W3, G3, W3) / P   # E[(conv w/o bias)^2]
    var = jnp.maximum(ex2 - m0 * m0, 0.0)
    mean = m0 + b_conv
    scale = gamma * jax.lax.rsqrt(var + EPS)
    shift = beta - mean * scale
    wz = W3 * scale[:, None]                          # BN scale folded into W
    sh = b_conv * scale + shift                       # bias + BN shift folded
    # TODO(synk): running_mean / running_var updates are not produced.

    # 2) the 4 max-pool taps as even/odd views of the zero-padded *input*.
    xp = jnp.pad(x, ((0, 0), (0, 0), (1, 1), (1, 1)))
    x00 = xp[:, :, 0::2, 0::2]
    x01 = xp[:, :, 0::2, 1::2]
    x10 = xp[:, :, 1::2, 0::2]
    x11 = xp[:, :, 1::2, 1::2]

    # 3) fused conv + BN + ReLU + pool, emitted directly in NCHW.
    return fused_conv_bn_pool(x00, x01, x10, x11, wz, sh)


# --------------------------------------------------------------------------
# pure-JAX reference
def reference(x, w_conv, b_conv, gamma, beta):
    y = jax.lax.conv_general_dilated(
        x, w_conv, window_strides=(1, 1), padding=((1, 1), (1, 1)),
        dimension_numbers=("NCHW", "OIHW", "NCHW"),
        precision=jax.lax.Precision.HIGHEST)
    y = y + b_conv[None, :, None, None]
    m = jnp.mean(y, axis=(0, 2, 3), keepdims=True)
    v = jnp.mean((y - m) ** 2, axis=(0, 2, 3), keepdims=True)
    y = (y - m) * jax.lax.rsqrt(v + EPS) * gamma[None, :, None, None] \
        + beta[None, :, None, None]
    y = jnp.maximum(y, 0.0)
    return jax.lax.reduce_window(y, -jnp.inf, jax.lax.max,
                                 (1, 1, 2, 2), (1, 1, 2, 2), "VALID")


if __name__ == "__main__":
    key = jax.random.PRNGKey(0)
    k1, k2, kx = jax.random.split(key, 3)
    w_conv = 0.1 * jax.random.normal(k1, (16, 3, 1, 1), jnp.float32)
    b_conv = 0.1 * jax.random.normal(k2, (16,), jnp.float32)
    gamma = jnp.ones((16,), jnp.float32)
    beta = jnp.zeros((16,), jnp.float32)

    # Small input consistent with (1, 3, 448, 448): batch=2, C=3, 16x16.
    x = jax.random.normal(kx, (2, 3, 16, 16), jnp.float32)

    out = jax.jit(model_forward)(x, w_conv, b_conv, gamma, beta)
    out = jax.block_until_ready(out)

    ref = reference(x, w_conv, b_conv, gamma, beta)
    assert out.shape == (2, 16, 9, 9), out.shape
    assert jnp.allclose(out, ref, rtol=1e-4, atol=1e-4), \
        float(jnp.max(jnp.abs(out - ref)))

    print("KERNEL_OK")
</pallas_src>

<mosaic_0001>
module attributes {stable_mosaic.version = 11 : i64} {
  func.func @_moments_kernel(%arg0: i32, %arg1: i32, %arg2: memref<1x3x256xf32, #tpu.memory_space<vmem>>, %arg3: memref<3x4xf32, #tpu.memory_space<vmem>>) attributes {dimension_semantics = [#tpu.dimension_semantics<arbitrary>, #tpu.dimension_semantics<arbitrary>], iteration_bounds = array<i64: 2, 1>, scalar_prefetch = 0 : i64, scratch_operands = 0 : i64, tpu.core_type = #tpu.core_type<tc>, window_params = [{transform_indices = @transform_0, window_bounds = array<i64: 1, 3, 256>}, {pipeline_mode = #tpu.pipeline_mode<synchronous>, transform_indices = @transform_1, window_bounds = array<i64: 3, 4>}]} {
    %c0_i32 = arith.constant 0 : i32
    %0 = arith.cmpi eq, %arg0, %c0_i32 : i32
    %c0_i32_0 = arith.constant 0 : i32
    %1 = arith.cmpi eq, %arg1, %c0_i32_0 : i32
    %2 = arith.andi %0, %1 : i1
    %3 = arith.extui %2 : i1 to i32
    %c0_i32_1 = arith.constant 0 : i32
    %4 = arith.cmpi ne, %3, %c0_i32_1 : i32
    scf.if %4 {
      %cst_11 = arith.constant 0.000000e+00 : f32
      %28 = vector.broadcast %cst_11 : f32 to vector<3x4xf32>
      %c0_12 = arith.constant 0 : index
      %c0_13 = arith.constant 0 : index
      %29 = vector.load %arg3[%c0_12, %c0_13] : memref<3x4xf32, #tpu.memory_space<vmem>>, vector<3x4xf32>
      tpu.vector_store %arg3[%c0_12, %c0_13], %28 {strides = array<i32>} : memref<3x4xf32, #tpu.memory_space<vmem>>, vector<3x4xf32>,
    } else {
    }
    %c0 = arith.constant 0 : index
    %c0_2 = arith.constant 0 : index
    %c0_3 = arith.constant 0 : index
    %5 = vector.load %arg2[%c0, %c0_2, %c0_3] : memref<1x3x256xf32, #tpu.memory_space<vmem>>, vector<1x3x256xf32>
    %6 = vector.shape_cast %5 : vector<1x3x256xf32> to vector<3x256xf32>
    %7 = vector.extract_strided_slice %6 {offsets = [0, 0], sizes = [1, 256], strides = [1, 1]} : vector<3x256xf32> to vector<1x256xf32>
    %8 = vector.broadcast %7 : vector<1x256xf32> to vector<3x256xf32>
    %9 = arith.mulf %6, %8 : vector<3x256xf32>
    %cst = arith.constant dense<0.000000e+00> : vector<3xf32>
    %10 = vector.multi_reduction <add>, %9, %cst [1] : vector<3x256xf32> to vector<3xf32>
    %11 = vector.shape_cast %10 : vector<3xf32> to vector<3x1xf32>
    %12 = vector.extract_strided_slice %6 {offsets = [1, 0], sizes = [1, 256], strides = [1, 1]} : vector<3x256xf32> to vector<1x256xf32>
    %13 = vector.broadcast %12 : vector<1x256xf32> to vector<3x256xf32>
    %14 = arith.mulf %6, %13 : vector<3x256xf32>
    %cst_4 = arith.constant dense<0.000000e+00> : vector<3xf32>
    %15 = vector.multi_reduction <add>, %14, %cst_4 [1] : vector<3x256xf32> to vector<3xf32>
    %16 = vector.shape_cast %15 : vector<3xf32> to vector<3x1xf32>
    %17 = vector.extract_strided_slice %6 {offsets = [2, 0], sizes = [1, 256], strides = [1, 1]} : vector<3x256xf32> to vector<1x256xf32>
    %18 = vector.broadcast %17 : vector<1x256xf32> to vector<3x256xf32>
    %19 = arith.mulf %6, %18 : vector<3x256xf32>
    %cst_5 = arith.constant dense<0.000000e+00> : vector<3xf32>
    %20 = vector.multi_reduction <add>, %19, %cst_5 [1] : vector<3x256xf32> to vector<3xf32>
    %21 = vector.shape_cast %20 : vector<3xf32> to vector<3x1xf32>
    %cst_6 = arith.constant dense<0.000000e+00> : vector<3xf32>
    %22 = vector.multi_reduction <add>, %6, %cst_6 [1] : vector<3x256xf32> to vector<3xf32>
    %23 = vector.shape_cast %22 : vector<3xf32> to vector<3x1xf32>
    %c0_7 = arith.constant 0 : index
    %c0_8 = arith.constant 0 : index
    %24 = vector.load %arg3[%c0_7, %c0_8] : memref<3x4xf32, #tpu.memory_space<vmem>>, vector<3x4xf32>
    %25 = tpu.concatenate %11, %16, %21, %23 in 1 : vector<3x1xf32>, vector<3x1xf32>, vector<3x1xf32>, vector<3x1xf32> -> vector<3x4xf32>
    %26 = arith.addf %24, %25 : vector<3x4xf32>
    %c0_9 = arith.constant 0 : index
    %c0_10 = arith.constant 0 : index
    %27 = vector.load %arg3[%c0_9, %c0_10] : memref<3x4xf32, #tpu.memory_space<vmem>>, vector<3x4xf32>
    tpu.vector_store %arg3[%c0_9, %c0_10], %26 {strides = array<i32>} : memref<3x4xf32, #tpu.memory_space<vmem>>, vector<3x4xf32>,
    return
  }
  func.func @transform_0(%arg0: i32, %arg1: i32) -> (i32, i32, i32) {
    %c0_i32 = arith.constant 0 : i32
    %c0_i32_0 = arith.constant 0 : i32
    return %arg0, %c0_i32, %arg1 : i32, i32, i32
  }
  func.func @transform_1(%arg0: i32, %arg1: i32) -> (i32, i32) {
    %c0_i32 = arith.constant 0 : i32
    %c0_i32_0 = arith.constant 0 : i32
    %c0_i32_1 = arith.constant 0 : i32
    return %c0_i32, %c0_i32_0 : i32, i32
  }
}

module attributes {stable_mosaic.version = 11 : i64} {
  func.func @_fused_conv_bn_pool_kernel(%arg0: i32, %arg1: i32, %arg2: i32, %arg3: memref<16x3xf32, #tpu.memory_space<smem>>, %arg4: memref<16xf32, #tpu.memory_space<smem>>, %arg5: memref<1x3x9x9xf32, #tpu.memory_space<vmem>>, %arg6: memref<1x3x9x9xf32, #tpu.memory_space<vmem>>, %arg7: memref<1x3x9x9xf32, #tpu.memory_space<vmem>>, %arg8: memref<1x3x9x9xf32, #tpu.memory_space<vmem>>, %arg9: memref<1x8x9x9xf32, #tpu.memory_space<vmem>>) attributes {dimension_semantics = [#tpu.dimension_semantics<parallel>, #tpu.dimension_semantics<parallel>, #tpu.dimension_semantics<parallel>], iteration_bounds = array<i64: 2, 1, 2>, scalar_prefetch = 0 : i64, scratch_operands = 0 : i64, tpu.core_type = #tpu.core_type<tc>, window_params = [{transform_indices = @transform_0, window_bounds = array<i64: 16, 3>}, {transform_indices = @transform_1, window_bounds = array<i64: 16>}, {transform_indices = @transform_2, window_bounds = array<i64: 1, 3, 9, 9>}, {transform_indices = @transform_3, window_bounds = array<i64: 1, 3, 9, 9>}, {transform_indices = @transform_4, window_bounds = array<i64: 1, 3, 9, 9>}, {transform_indices = @transform_5, window_bounds = array<i64: 1, 3, 9, 9>}, {transform_indices = @transform_6, window_bounds = array<i64: 1, 8, 9, 9>}]} {
    %c8_i32 = arith.constant 8 : i32
    %0 = arith.muli %arg2, %c8_i32 : i32
    %c0_i32 = arith.constant 0 : i32
    %1 = arith.addi %0, %c0_i32 : i32
    %c0 = arith.constant 0 : index
    %c0_0 = arith.constant 0 : index
    %c0_1 = arith.constant 0 : index
    %c0_2 = arith.constant 0 : index
    %2 = vector.load %arg5[%c0, %c0_0, %c0_1, %c0_2] : memref<1x3x9x9xf32, #tpu.memory_space<vmem>>, vector<1x1x9x9xf32>
    %3 = vector.shape_cast %2 : vector<1x1x9x9xf32> to vector<9x9xf32>
    %4 = arith.index_cast %1 : i32 to index
    %c0_3 = arith.constant 0 : index
    %5 = memref.load %arg3[%4, %c0_3] : memref<16x3xf32, #tpu.memory_space<smem>>
    %6 = vector.broadcast %5 : f32 to vector<9x9xf32>
    %7 = arith.mulf %3, %6 : vector<9x9xf32>
    %c0_4 = arith.constant 0 : index
    %c1 = arith.constant 1 : index
    %c0_5 = arith.constant 0 : index
    %c0_6 = arith.constant 0 : index
    %8 = vector.load %arg5[%c0_4, %c1, %c0_5, %c0_6] : memref<1x3x9x9xf32, #tpu.memory_space<vmem>>, vector<1x1x9x9xf32>
    %9 = vector.shape_cast %8 : vector<1x1x9x9xf32> to vector<9x9xf32>
    %10 = arith.index_cast %1 : i32 to index
    %c1_7 = arith.constant 1 : index
    %11 = memref.load %arg3[%10, %c1_7] : memref<16x3xf32, #tpu.memory_space<smem>>
    %12 = vector.broadcast %11 : f32 to vector<9x9xf32>
    %13 = arith.mulf %9, %12 : vector<9x9xf32>
    %14 = arith.addf %7, %13 : vector<9x9xf32>
    %c0_8 = arith.constant 0 : index
    %c2 = arith.constant 2 : index
    %c0_9 = arith.constant 0 : index
    %c0_10 = arith.constant 0 : index
    %15 = vector.load %arg5[%c0_8, %c2, %c0_9, %c0_10] : memref<1x3x9x9xf32, #tpu.memory_space<vmem>>, vector<1x1x9x9xf32>
    %16 = vector.shape_cast %15 : vector<1x1x9x9xf32> to vector<9x9xf32>
    %17 = arith.index_cast %1 : i32 to index
    %c2_11 = arith.constant 2 : index
    %18 = memref.load %arg3[%17, %c2_11] : memref<16x3xf32, #tpu.memory_space<smem>>
    %19 = vector.broadcast %18 : f32 to vector<9x9xf32>
    %20 = arith.mulf %16, %19 : vector<9x9xf32>
    %21 = arith.addf %14, %20 : vector<9x9xf32>
    %c0_12 = arith.constant 0 : index
    %c0_13 = arith.constant 0 : index
    %c0_14 = arith.constant 0 : index
    %c0_15 = arith.constant 0 : index
    %22 = vector.load %arg6[%c0_12, %c0_13, %c0_14, %c0_15] : memref<1x3x9x9xf32, #tpu.memory_space<vmem>>, vector<1x1x9x9xf32>
    %23 = vector.shape_cast %22 : vector<1x1x9x9xf32> to vector<9x9xf32>
    %24 = arith.index_cast %1 : i32 to index
    %c0_16 = arith.constant 0 : index
    %25 = memref.load %arg3[%24, %c0_16] : memref<16x3xf32, #tpu.memory_space<smem>>
    %26 = vector.broadcast %25 : f32 to vector<9x9xf32>
    %27 = arith.mulf %23, %26 : vector<9x9xf32>
    %c0_17 = arith.constant 0 : index
    %c1_18 = arith.constant 1 : index
    %c0_19 = arith.constant 0 : index
    %c0_20 = arith.constant 0 : index
    %28 = vector.load %arg6[%c0_17, %c1_18, %c0_19, %c0_20] : memref<1x3x9x9xf32, #tpu.memory_space<vmem>>, vector<1x1x9x9xf32>
    %29 = vector.shape_cast %28 : vector<1x1x9x9xf32> to vector<9x9xf32>
    %30 = arith.index_cast %1 : i32 to index
    %c1_21 = arith.constant 1 : index
    %31 = memref.load %arg3[%30, %c1_21] : memref<16x3xf32, #tpu.memory_space<smem>>
    %32 = vector.broadcast %31 : f32 to vector<9x9xf32>
    %33 = arith.mulf %29, %32 : vector<9x9xf32>
    %34 = arith.addf %27, %33 : vector<9x9xf32>
    %c0_22 = arith.constant 0 : index
    %c2_23 = arith.constant 2 : index
    %c0_24 = arith.constant 0 : index
    %c0_25 = arith.constant 0 : index
    %35 = vector.load %arg6[%c0_22, %c2_23, %c0_24, %c0_25] : memref<1x3x9x9xf32, #tpu.memory_space<vmem>>, vector<1x1x9x9xf32>
    %36 = vector.shape_cast %35 : vector<1x1x9x9xf32> to vector<9x9xf32>
    %37 = arith.index_cast %1 : i32 to index
    %c2_26 = arith.constant 2 : index
    %38 = memref.load %arg3[%37, %c2_26] : memref<16x3xf32, #tpu.memory_space<smem>>
    %39 = vector.broadcast %38 : f32 to vector<9x9xf32>
    %40 = arith.mulf %36, %39 : vector<9x9xf32>
    %41 = arith.addf %34, %40 : vector<9x9xf32>
    %42 = arith.maximumf %21, %41 : vector<9x9xf32>
    %c0_27 = arith.constant 0 : index
    %c0_28 = arith.constant 0 : index
    %c0_29 = arith.constant 0 : index
    %c0_30 = arith.constant 0 : index
    %43 = vector.load %arg7[%c0_27, %c0_28, %c0_29, %c0_30] : memref<1x3x9x9xf32, #tpu.memory_space<vmem>>, vector<1x1x9x9xf32>
    %44 = vector.shape_cast %43 : vector<1x1x9x9xf32> to vector<9x9xf32>
    %45 = arith.index_cast %1 : i32 to index
    %c0_31 = arith.constant 0 : index
    %46 = memref.load %arg3[%45, %c0_31] : memref<16x3xf32, #tpu.memory_space<smem>>
    %47 = vector.broadcast %46 : f32 to vector<9x9xf32>
    %48 = arith.mulf %44, %47 : vector<9x9xf32>
    %c0_32 = arith.constant 0 : index
    %c1_33 = arith.constant 1 : index
    %c0_34 = arith.constant 0 : index
    %c0_35 = arith.constant 0 : index
    %49 = vector.load %arg7[%c0_32, %c1_33, %c0_34, %c0_35] : memref<1x3x9x9xf32, #tpu.memory_space<vmem>>, vector<1x1x9x9xf32>
    %50 = vector.shape_cast %49 : vector<1x1x9x9xf32> to vector<9x9xf32>
    %51 = arith.index_cast %1 : i32 to index
    %c1_36 = arith.constant 1 : index
    %52 = memref.load %arg3[%51, %c1_36] : memref<16x3xf32, #tpu.memory_space<smem>>
    %53 = vector.broadcast %52 : f32 to vector<9x9xf32>
    %54 = arith.mulf %50, %53 : vector<9x9xf32>
    %55 = arith.addf %48, %54 : vector<9x9xf32>
    %c0_37 = arith.constant 0 : index
    %c2_38 = arith.constant 2 : index
    %c0_39 = arith.constant 0 : index
    %c0_40 = arith.constant 0 : index
    %56 = vector.load %arg7[%c0_37, %c2_38, %c0_39, %c0_40] : memref<1x3x9x9xf32, #tpu.memory_space<vmem>>, vector<1x1x9x9xf32>
    %57 = vector.shape_cast %56 : vector<1x1x9x9xf32> to vector<9x9xf32>
    %58 = arith.index_cast %1 : i32 to index
    %c2_41 = arith.constant 2 : index
    %59 = memref.load %arg3[%58, %c2_41] : memref<16x3xf32, #tpu.memory_space<smem>>
    %60 = vector.broadcast %59 : f32 to vector<9x9xf32>
    %61 = arith.mulf %57, %60 : vector<9x9xf32>
    %62 = arith.addf %55, %61 : vector<9x9xf32>
    %63 = arith.maximumf %42, %62 : vector<9x9xf32>
    %c0_42 = arith.constant 0 : index
    %c0_43 = arith.constant 0 : index
    %c0_44 = arith.constant 0 : index
    %c0_45 = arith.constant 0 : index
    %64 = vector.load %arg8[%c0_42, %c0_43, %c0_44, %c0_45] : memref<1x3x9x9xf32, #tpu.memory_space<vmem>>, vector<1x1x9x9xf32>
    %65 = vector.shape_cast %64 : vector<1x1x9x9xf32> to vector<9x9xf32>
    %66 = arith.index_cast %1 : i32 to index
    %c0_46 = arith.constant 0 : index
    %67 = memref.load %arg3[%66, %c0_46] : memref<16x3xf32, #tpu.memory_space<smem>>
    %68 = vector.broadcast %67 : f32 to vector<9x9xf32>
    %69 = arith.mulf %65, %68 : vector<9x9xf32>
    %c0_47 = arith.constant 0 : index
    %c1_48 = arith.constant 1 : index
    %c0_49 = arith.constant 0 : index
    %c0_50 = arith.constant 0 : index
    %70 = vector.load %arg8[%c0_47, %c1_48, %c0_49, %c0_50] : memref<1x3x9x9xf32, #tpu.memory_space<vmem>>, vector<1x1x9x9xf32>
    %71 = vector.shape_cast %70 : vector<1x1x9x9xf32> to vector<9x9xf32>
    %72 = arith.index_cast %1 : i32 to index
    %c1_51 = arith.constant 1 : index
    %73 = memref.load %arg3[%72, %c1_51] : memref<16x3xf32, #tpu.memory_space<smem>>
    %74 = vector.broadcast %73 : f32 to vector<9x9xf32>
    %75 = arith.mulf %71, %74 : vector<9x9xf32>
    %76 = arith.addf %69, %75 : vector<9x9xf32>
    %c0_52 = arith.constant 0 : index
    %c2_53 = arith.constant 2 : index
    %c0_54 = arith.constant 0 : index
    %c0_55 = arith.constant 0 : index
    %77 = vector.load %arg8[%c0_52, %c2_53, %c0_54, %c0_55] : memref<1x3x9x9xf32, #tpu.memory_space<vmem>>, vector<1x1x9x9xf32>
    %78 = vector.shape_cast %77 : vector<1x1x9x9xf32> to vector<9x9xf32>
    %79 = arith.index_cast %1 : i32 to index
    %c2_56 = arith.constant 2 : index
    %80 = memref.load %arg3[%79, %c2_56] : memref<16x3xf32, #tpu.memory_space<smem>>
    %81 = vector.broadcast %80 : f32 to vector<9x9xf32>
    %82 = arith.mulf %78, %81 : vector<9x9xf32>
    %83 = arith.addf %76, %82 : vector<9x9xf32>
    %84 = arith.maximumf %63, %83 : vector<9x9xf32>
    %85 = arith.index_cast %1 : i32 to index
    %86 = memref.load %arg4[%85] : memref<16xf32, #tpu.memory_space<smem>>
    %87 = vector.broadcast %86 : f32 to vector<9x9xf32>
    %88 = arith.addf %84, %87 : vector<9x9xf32>
    %cst = arith.constant 0.000000e+00 : f32
    %89 = vector.broadcast %cst : f32 to vector<9x9xf32>
    %90 = arith.maximumf %88, %89 : vector<9x9xf32>
    %c0_57 = arith.constant 0 : index
    %c0_58 = arith.constant 0 : index
    %c0_59 = arith.constant 0 : index
    %c0_60 = arith.constant 0 : index
    %91 = vector.load %arg9[%c0_57, %c0_58, %c0_59, %c0_60] : memref<1x8x9x9xf32, #tpu.memory_space<vmem>>, vector<1x1x9x9xf32>
    %92 = vector.shape_cast %91 : vector<1x1x9x9xf32> to vector<9x9xf32>
    %93 = vector.shape_cast %90 : vector<9x9xf32> to vector<1x1x9x9xf32>
    tpu.vector_store %arg9[%c0_57, %c0_58, %c0_59, %c0_60], %93 {strides = array<i32>} : memref<1x8x9x9xf32, #tpu.memory_space<vmem>>, vector<1x1x9x9xf32>,
    %c8_i32_61 = arith.constant 8 : i32
    %94 = arith.muli %arg2, %c8_i32_61 : i32
    %c1_i32 = arith.constant 1 : i32
    %95 = arith.addi %94, %c1_i32 : i32
    %c0_62 = arith.constant 0 : index
    %c0_63 = arith.constant 0 : index
    %c0_64 = arith.constant 0 : index
    %c0_65 = arith.constant 0 : index
    %96 = vector.load %arg5[%c0_62, %c0_63, %c0_64, %c0_65] : memref<1x3x9x9xf32, #tpu.memory_space<vmem>>, vector<1x1x9x9xf32>
    %97 = vector.shape_cast %96 : vector<1x1x9x9xf32> to vector<9x9xf32>
    %98 = arith.index_cast %95 : i32 to index
    %c0_66 = arith.constant 0 : index
    %99 = memref.load %arg3[%98, %c0_66] : memref<16x3xf32, #tpu.memory_space<smem>>
    %100 = vector.broadcast %99 : f32 to vector<9x9xf32>
    %101 = arith.mulf %97, %100 : vector<9x9xf32>
    %c0_67 = arith.constant 0 : index
    %c1_68 = arith.constant 1 : index
    %c0_69 = arith.constant 0 : index
    %c0_70 = arith.constant 0 : index
    %102 = vector.load %arg5[%c0_67, %c1_68, %c0_69, %c0_70] : memref<1x3x9x9xf32, #tpu.memory_space<vmem>>, vector<1x1x9x9xf32>
    %103 = vector.shape_cast %102 : vector<1x1x9x9xf32> to vector<9x9xf32>
    %104 = arith.index_cast %95 : i32 to index
    %c1_71 = arith.constant 1 : index
    %105 = memref.load %arg3[%104, %c1_71] : memref<16x3xf32, #tpu.memory_space<smem>>
    %106 = vector.broadcast %105 : f32 to vector<9x9xf32>
    %107 = arith.mulf %103, %106 : vector<9x9xf32>
    %108 = arith.addf %101, %107 : vector<9x9xf32>
    %c0_72 = arith.constant 0 : index
    %c2_73 = arith.constant 2 : index
    %c0_74 = arith.constant 0 : index
    %c0_75 = arith.constant 0 : index
    %109 = vector.load %arg5[%c0_72, %c2_73, %c0_74, %c0_75] : memref<1x3x9x9xf32, #tpu.memory_space<vmem>>, vector<1x1x9x9xf32>
    %110 = vector.shape_cast %109 : vector<1x1x9x9xf32> to vector<9x9xf32>
    %111 = arith.index_cast %95 : i32 to index
    %c2_76 = arith.constant 2 : index
    %112 = memref.load %arg3[%111, %c2_76] : memref<16x3xf32, #tpu.memory_space<smem>>
    %113 = vector.broadcast %112 : f32 to vector<9x9xf32>
    %114 = arith.mulf %110, %113 : vector<9x9xf32>
    %115 = arith.addf %108, %114 : vector<9x9xf32>
    %c0_77 = arith.constant 0 : index
    %c0_78 = arith.constant 0 : index
    %c0_79 = arith.constant 0 : index
    %c0_80 = arith.constant 0 : index
    %116 = vector.load %arg6[%c0_77, %c0_78, %c0_79, %c0_80] : memref<1x3x9x9xf32, #tpu.memory_space<vmem>>, vector<1x1x9x9xf32>
    %117 = vector.shape_cast %116 : vector<1x1x9x9xf32> to vector<9x9xf32>
    %118 = arith.index_cast %95 : i32 to index
    %c0_81 = arith.constant 0 : index
    %119 = memref.load %arg3[%118, %c0_81] : memref<16x3xf32, #tpu.memory_space<smem>>
    %120 = vector.broadcast %119 : f32 to vector<9x9xf32>
    %121 = arith.mulf %117, %120 : vector<9x9xf32>
    %c0_82 = arith.constant 0 : index
    %c1_83 = arith.constant 1 : index
    %c0_84 = arith.constant 0 : index
    %c0_85 = arith.constant 0 : index
    %122 = vector.load %arg6[%c0_82, %c1_83, %c0_84, %c0_85] : memref<1x3x9x9xf32, #tpu.memory_space<vmem>>, vector<1x1x9x9xf32>
    %123 = vector.shape_cast %122 : vector<1x1x9x9xf32> to vector<9x9xf32>
    %124 = arith.index_cast %95 : i32 to index
    %c1_86 = arith.constant 1 : index
    %125 = memref.load %arg3[%124, %c1_86] : memref<16x3xf32, #tpu.memory_space<smem>>
    %126 = vector.broadcast %125 : f32 to vector<9x9xf32>
    %127 = arith.mulf %123, %126 : vector<9x9xf32>
    %128 = arith.addf %121, %127 : vector<9x9xf32>
    %c0_87 = arith.constant 0 : index
    %c2_88 = arith.constant 2 : index
    %c0_89 = arith.constant 0 : index
    %c0_90 = arith.constant 0 : index
    %129 = vector.load %arg6[%c0_87, %c2_88, %c0_89, %c0_90] : memref<1x3x9x9xf32, #tpu.memory_space<vmem>>, vector<1x1x9x9xf32>
    %130 = vector.shape_cast %129 : vector<1x1x9x9xf32> to vector<9x9xf32>
    %131 = arith.index_cast %95 : i32 to index
    %c2_91 = arith.constant 2 : index
    %132 = memref.load %arg3[%131, %c2_91] : memref<16x3xf32, #tpu.memory_space<smem>>
    %133 = vector.broadcast %132 : f32 to vector<9x9xf32>
    %134 = arith.mulf %130, %133 : vector<9x9xf32>
    %135 = arith.addf %128, %134 : vector<9x9xf32>
    %136 = arith.maximumf %115, %135 : vector<9x9xf32>
    %c0_92 = arith.constant 0 : index
    %c0_93 = arith.constant 0 : index
    %c0_94 = arith.constant 0 : index
    %c0_95 = arith.constant 0 : index
    %137 = vector.load %arg7[%c0_92, %c0_93, %c0_94, %c0_95] : memref<1x3x9x9xf32, #tpu.memory_space<vmem>>, vector<1x1x9x9xf32>
    %138 = vector.shape_cast %137 : vector<1x1x9x9xf32> to vector<9x9xf32>
    %139 = arith.index_cast %95 : i32 to index
    %c0_96 = arith.constant 0 : index
    %140 = memref.load %arg3[%139, %c0_96] : memref<16x3xf32, #tpu.memory_space<smem>>
    %141 = vector.broadcast %140 : f32 to vector<9x9xf32>
    %142 = arith.mulf %138, %141 : vector<9x9xf32>
    %c0_97 = arith.constant 0 : index
    %c1_98 = arith.constant 1 : index
    %c0_99 = arith.constant 0 : index
    %c0_100 = arith.constant 0 : index
    %143 = vector.load %arg7[%c0_97, %c1_98, %c0_99, %c0_100] : memref<1x3x9x9xf32, #tpu.memory_space<vmem>>, vector<1x1x9x9xf32>
    %144 = vector.shape_cast %143 : vector<1x1x9x9xf32> to vector<9x9xf32>
    %145 = arith.index_cast %95 : i32 to index
    %c1_101 = arith.constant 1 : index
    %146 = memref.load %arg3[%145, %c1_101] : memref<16x3xf32, #tpu.memory_space<smem>>
    %147 = vector.broadcast %146 : f32 to vector<9x9xf32>
    %148 = arith.mulf %144, %147 : vector<9x9xf32>
    %149 = arith.addf %142, %148 : vector<9x9xf32>
    %c0_102 = arith.constant 0 : index
    %c2_103 = arith.constant 2 : index
    %c0_104 = arith.constant 0 : index
    %c0_105 = arith.constant 0 : index
    %150 = vector.load %arg7[%c0_102, %c2_103, %c0_104, %c0_105] : memref<1x3x9x9xf32, #tpu.memory_space<vmem>>, vector<1x1x9x9xf32>
    %151 = vector.shape_cast %150 : vector<1x1x9x9xf32> to vector<9x9xf32>
    %152 = arith.index_cast %95 : i32 to index
    %c2_106 = arith.constant 2 : index
    %153 = memref.load %arg3[%152, %c2_106] : memref<16x3xf32, #tpu.memory_space<smem>>
    %154 = vector.broadcast %153 : f32 to vector<9x9xf32>
    %155 = arith.mulf %151, %154 : vector<9x9xf32>
    %156 = arith.addf %149, %155 : vector<9x9xf32>
    %157 = arith.maximumf %136, %156 : vector<9x9xf32>
    %c0_107 = arith.constant 0 : index
    %c0_108 = arith.constant 0 : index
    %c0_109 = arith.constant 0 : index
    %c0_110 = arith.constant 0 : index
    %158 = vector.load %arg8[%c0_107, %c0_108, %c0_109, %c0_110] : memref<1x3x9x9xf32, #tpu.memory_space<vmem>>, vector<1x1x9x9xf32>
    %159 = vector.shape_cast %158 : vector<1x1x9x9xf32> to vector<9x9xf32>
    %160 = arith.index_cast %95 : i32 to index
    %c0_111 = arith.constant 0 : index
    %161 = memref.load %arg3[%160, %c0_111] : memref<16x3xf32, #tpu.memory_space<smem>>
    %162 = vector.broadcast %161 : f32 to vector<9x9xf32>
    %163 = arith.mulf %159, %162 : vector<9x9xf32>
    %c0_112 = arith.constant 0 : index
    %c1_113 = arith.constant 1 : index
    %c0_114 = arith.constant 0 : index
    %c0_115 = arith.constant 0 : index
    %164 = vector.load %arg8[%c0_112, %c1_113, %c0_114, %c0_115] : memref<1x3x9x9xf32, #tpu.memory_space<vmem>>, vector<1x1x9x9xf32>
    %165 = vector.shape_cast %164 : vector<1x1x9x9xf32> to vector<9x9xf32>
    %166 = arith.index_cast %95 : i32 to index
    %c1_116 = arith.constant 1 : index
    %167 = memref.load %arg3[%166, %c1_116] : memref<16x3xf32, #tpu.memory_space<smem>>
    %168 = vector.broadcast %167 : f32 to vector<9x9xf32>
    %169 = arith.mulf %165, %168 : vector<9x9xf32>
    %170 = arith.addf %163, %169 : vector<9x9xf32>
    %c0_117 = arith.constant 0 : index
    %c2_118 = arith.constant 2 : index
    %c0_119 = arith.constant 0 : index
    %c0_120 = arith.constant 0 : index
    %171 = vector.load %arg8[%c0_117, %c2_118, %c0_119, %c0_120] : memref<1x3x9x9xf32, #tpu.memory_space<vmem>>, vector<1x1x9x9xf32>
    %172 = vector.shape_cast %171 : vector<1x1x9x9xf32> to vector<9x9xf32>
    %173 = arith.index_cast %95 : i32 to index
    %c2_121 = arith.constant 2 : index
    %174 = memref.load %arg3[%173, %c2_121] : memref<16x3xf32, #tpu.memory_space<smem>>
    %175 = vector.broadcast %174 : f32 to vector<9x9xf32>
    %176 = arith.mulf %172, %175 : vector<9x9xf32>
    %177 = arith.addf %170, %176 : vector<9x9xf32>
    %178 = arith.maximumf %157, %177 : vector<9x9xf32>
    %179 = arith.index_cast %95 : i32 to index
    %180 = memref.load %arg4[%179] : memref<16xf32, #tpu.memory_space<smem>>
    %181 = vector.broadcast %180 : f32 to vector<9x9xf32>
    %182 = arith.addf %178, %181 : vector<9x9xf32>
    %cst_122 = arith.constant 0.000000e+00 : f32
    %183 = vector.broadcast %cst_122 : f32 to vector<9x9xf32>
    %184 = arith.maximumf %182, %183 : vector<9x9xf32>
    %c0_123 = arith.constant 0 : index
    %c1_124 = arith.constant 1 : index
    %c0_125 = arith.constant 0 : index
    %c0_126 = arith.constant 0 : index
    %185 = vector.load %arg9[%c0_123, %c1_124, %c0_125, %c0_126] : memref<1x8x9x9xf32, #tpu.memory_space<vmem>>, vector<1x1x9x9xf32>
    %186 = vector.shape_cast %185 : vector<1x1x9x9xf32> to vector<9x9xf32>
    %187 = vector.shape_cast %184 : vector<9x9xf32> to vector<1x1x9x9xf32>
    tpu.vector_store %arg9[%c0_123, %c1_124, %c0_125, %c0_126], %187 {strides = array<i32>} : memref<1x8x9x9xf32, #tpu.memory_space<vmem>>, vector<1x1x9x9xf32>,
    %c8_i32_127 = arith.constant 8 : i32
    %188 = arith.muli %arg2, %c8_i32_127 : i32
    %c2_i32 = arith.constant 2 : i32
    %189 = arith.addi %188, %c2_i32 : i32
    %c0_128 = arith.constant 0 : index
    %c0_129 = arith.constant 0 : index
    %c0_130 = arith.constant 0 : index
    %c0_131 = arith.constant 0 : index
    %190 = vector.load %arg5[%c0_128, %c0_129, %c0_130, %c0_131] : memref<1x3x9x9xf32, #tpu.memory_space<vmem>>, vector<1x1x9x9xf32>
    %191 = vector.shape_cast %190 : vector<1x1x9x9xf32> to vector<9x9xf32>
    %192 = arith.index_cast %189 : i32 to index
    %c0_132 = arith.constant 0 : index
    %193 = memref.load %arg3[%192, %c0_132] : memref<16x3xf32, #tpu.memory_space<smem>>
    %194 = vector.broadcast %193 : f32 to vector<9x9xf32>
    %195 = arith.mulf %191, %194 : vector<9x9xf32>
    %c0_133 = arith.constant 0 : index
    %c1_134 = arith.constant 1 : index
    %c0_135 = arith.constant 0 : index
    %c0_136 = arith.constant 0 : index
    %196 = vector.load %arg5[%c0_133, %c1_134, %c0_135, %c0_136] : memref<1x3x9x9xf32, #tpu.memory_space<vmem>>, vector<1x1x9x9xf32>
    %197 = vector.shape_cast %196 : vector<1x1x9x9xf32> to vector<9x9xf32>
    %198 = arith.index_cast %189 : i32 to index
    %c1_137 = arith.constant 1 : index
    %199 = memref.load %arg3[%198, %c1_137] : memref<16x3xf32, #tpu.memory_space<smem>>
    %200 = vector.broadcast %199 : f32 to vector<9x9xf32>
    %201 = arith.mulf %197, %200 : vector<9x9xf32>
    %202 = arith.addf %195, %201 : vector<9x9xf32>
    %c0_138 = arith.constant 0 : index
    %c2_139 = arith.constant 2 : index
    %c0_140 = arith.constant 0 : index
    %c0_141 = arith.constant 0 : index
    %203 = vector.load %arg5[%c0_138, %c2_139, %c0_140, %c0_141] : memref<1x3x9x9xf32, #tpu.memory_space<vmem>>, vector<1x1x9x9xf32>
    %204 = vector.shape_cast %203 : vector<1x1x9x9xf32> to vector<9x9xf32>
    %205 = arith.index_cast %189 : i32 to index
    %c2_142 = arith.constant 2 : index
    %206 = memref.load %arg3[%205, %c2_142] : memref<16x3xf32, #tpu.memory_space<smem>>
    %207 = vector.broadcast %206 : f32 to vector<9x9xf32>
    %208 = arith.mulf %204, %207 : vector<9x9xf32>
    %209 = arith.addf %202, %208 : vector<9x9xf32>
    %c0_143 = arith.constant 0 : index
    %c0_144 = arith.constant 0 : index
    %c0_145 = arith.constant 0 : index
    %c0_146 = arith.constant 0 : index
    %210 = vector.load %arg6[%c0_143, %c0_144, %c0_145, %c0_146] : memref<1x3x9x9xf32, #tpu.memory_space<vmem>>, vector<1x1x9x9xf32>
    %211 = vector.shape_cast %210 : vector<1x1x9x9xf32> to vector<9x9xf32>
    %212 = arith.index_cast %189 : i32 to index
    %c0_147 = arith.constant 0 : index
    %213 = memref.load %arg3[%212, %c0_147] : memref<16x3xf32, #tpu.memory_space<smem>>
    %214 = vector.broadcast %213 : f32 to vector<9x9xf32>
    %215 = arith.mulf %211, %214 : vector<9x9xf32>
    %c0_148 = arith.constant 0 : index
    %c1_149 = arith.constant 1 : index
    %c0_150 = arith.constant 0 : index
    %c0_151 = arith.constant 0 : index
    %216 = vector.load %arg6[%c0_148, %c1_149, %c0_150, %c0_151] : memref<1x3x9x9xf32, #tpu.memory_space<vmem>>, vector<1x1x9x9xf32>
    %217 = vector.shape_cast %216 : vector<1x1x9x9xf32> to vector<9x9xf32>
    %218 = arith.index_cast %189 : i32 to index
    %c1_152 = arith.constant 1 : index
    %219 = memref.load %arg3[%218, %c1_152] : memref<16x3xf32, #tpu.memory_space<smem>>
    %220 = vector.broadcast %219 : f32 to vector<9x9xf32>
    %221 = arith.mulf %217, %220 : vector<9x9xf32>
    %222 = arith.addf %215, %221 : vector<9x9xf32>
    %c0_153 = arith.constant 0 : index
    %c2_154 = arith.constant 2 : index
    %c0_155 = arith.constant 0 : index
    %c0_156 = arith.constant 0 : index
    %223 = vector.load %arg6[%c0_153, %c2_154, %c0_155, %c0_156] : memref<1x3x9x9xf32, #tpu.memory_space<vmem>>, vector<1x1x9x9xf32>
    %224 = vector.shape_cast %223 : vector<1x1x9x9xf32> to vector<9x9xf32>
    %225 = arith.index_cast %189 : i32 to index
    %c2_157 = arith.constant 2 : index
    %226 = memref.load %arg3[%225, %c2_157] : memref<16x3xf32, #tpu.memory_space<smem>>
    %227 = vector.broadcast %226 : f32 to vector<9x9xf32>
    %228 = arith.mulf %224, %227 : vector<9x9xf32>
    %229 = arith.addf %222, %228 : vector<9x9xf32>
    %230 = arith.maximumf %209, %229 : vector<9x9xf32>
    %c0_158 = arith.constant 0 : index
    %c0_159 = arith.constant 0 : index
    %c0_160 = arith.constant 0 : index
    %c0_161 = arith.constant 0 : index
    %231 = vector.load %arg7[%c0_158, %c0_159, %c0_160, %c0_161] : memref<1x3x9x9xf32, #tpu.memory_space<vmem>>, vector<1x1x9x9xf32>
    %232 = vector.shape_cast %231 : vector<1x1x9x9xf32> to vector<9x9xf32>
    %233 = arith.index_cast %189 : i32 to index
    %c0_162 = arith.constant 0 : index
    %234 = memref.load %arg3[%233, %c0_162] : memref<16x3xf32, #tpu.memory_space<smem>>
    %235 = vector.broadcast %234 : f32 to vector<9x9xf32>
    %236 = arith.mulf %232, %235 : vector<9x9xf32>
    %c0_163 = arith.constant 0 : index
    %c1_164 = arith.constant 1 : index
    %c0_165 = arith.constant 0 : index
    %c0_166 = arith.constant 0 : index
    %237 = vector.load %arg7[%c0_163, %c1_164, %c0_165, %c0_166] : memref<1x3x9x9xf32, #tpu.memory_space<vmem>>, vector<1x1x9x9xf32>
    %238 = vector.shape_cast %237 : vector<1x1x9x9xf32> to vector<9x9xf32>
    %239 = arith.index_cast %189 : i32 to index
    %c1_167 = arith.constant 1 : index
    %240 = memref.load %arg3[%239, %c1_167] : memref<16x3xf32, #tpu.memory_space<smem>>
    %241 = vector.broadcast %240 : f32 to vector<9x9xf32>
    %242 = arith.mulf %238, %241 : vector<9x9xf32>
    %243 = arith.addf %236, %242 : vector<9x9xf32>
    %c0_168 = arith.constant 0 : index
    %c2_169 = arith.constant 2 : index
    %c0_170 = arith.constant 0 : index
    %c0_171 = arith.constant 0 : index
    %244 = vector.load %arg7[%c0_168, %c2_169, %c0_170, %c0_171] : memref<1x3x9x9xf32, #tpu.memory_space<vmem>>, vector<1x1x9x9xf32>
    %245 = vector.shape_cast %244 : vector<1x1x9x9xf32> to vector<9x9xf32>
    %246 = arith.index_cast %189 : i32 to index
    %c2_172 = arith.constant 2 : index
    %247 = memref.load %arg3[%246, %c2_172] : memref<16x3xf32, #tpu.memory_space<smem>>
    %248 = vector.broadcast %247 : f32 to vector<9x9xf32>
    %249 = arith.mulf %245, %248 : vector<9x9xf32>
    %250 = arith.addf %243, %249 : vector<9x9xf32>
    %251 = arith.maximumf %230, %250 : vector<9x9xf32>
    %c0_173 = arith.constant 0 : index
    %c0_174 = arith.constant 0 : index
    %c0_175 = arith.constant 0 : index
    %c0_176 = arith.constant 0 : index
    %252 = vector.load %arg8[%c0_173, %c0_174, %c0_175, %c0_176] : memref<1x3x9x9xf32, #tpu.memory_space<vmem>>, vector<1x1x9x9xf32>
    %253 = vector.shape_cast %252 : vector<1x1x9x9xf32> to vector<9x9xf32>
    %254 = arith.index_cast %189 : i32 to index
    %c0_177 = arith.constant 0 : index
    %255 = memref.load %arg3[%254, %c0_177] : memref<16x3xf32, #tpu.memory_space<smem>>
    %256 = vector.broadcast %255 : f32 to vector<9x9xf32>
    %257 = arith.mulf %253, %256 : vector<9x9xf32>
    %c0_178 = arith.constant 0 : index
    %c1_179 = arith.constant 1 : index
    %c0_180 = arith.constant 0 : index
    %c0_181 = arith.constant 0 : index
    %258 = vector.load %arg8[%c0_178, %c1_179, %c0_180, %c0_181] : memref<1x3x9x9xf32, #tpu.memory_space<vmem>>, vector<1x1x9x9xf32>
    %259 = vector.shape_cast %258 : vector<1x1x9x9xf32> to vector<9x9xf32>
    %260 = arith.index_cast %189 : i32 to index
    %c1_182 = arith.constant 1 : index
    %261 = memref.load %arg3[%260, %c1_182] : memref<16x3xf32, #tpu.memory_space<smem>>
    %262 = vector.broadcast %261 : f32 to vector<9x9xf32>
    %263 = arith.mulf %259, %262 : vector<9x9xf32>
    %264 = arith.addf %257, %263 : vector<9x9xf32>
    %c0_183 = arith.constant 0 : index
    %c2_184 = arith.constant 2 : index
    %c0_185 = arith.constant 0 : index
    %c0_186 = arith.constant 0 : index
    %265 = vector.load %arg8[%c0_183, %c2_184, %c0_185, %c0_186] : memref<1x3x9x9xf32, #tpu.memory_space<vmem>>, vector<1x1x9x9xf32>
    %266 = vector.shape_cast %265 : vector<1x1x9x9xf32> to vector<9x9xf32>
    %267 = arith.index_cast %189 : i32 to index
    %c2_187 = arith.constant 2 : index
    %268 = memref.load %arg3[%267, %c2_187] : memref<16x3xf32, #tpu.memory_space<smem>>
    %269 = vector.broadcast %268 : f32 to vector<9x9xf32>
    %270 = arith.mulf %266, %269 : vector<9x9xf32>
    %271 = arith.addf %264, %270 : vector<9x9xf32>
    %272 = arith.maximumf %251, %271 : vector<9x9xf32>
    %273 = arith.index_cast %189 : i32 to index
    %274 = memref.load %arg4[%273] : memref<16xf32, #tpu.memory_space<smem>>
    %275 = vector.broadcast %274 : f32 to vector<9x9xf32>
    %276 = arith.addf %272, %275 : vector<9x9xf32>
    %cst_188 = arith.constant 0.000000e+00 : f32
    %277 = vector.broadcast %cst_188 : f32 to vector<9x9xf32>
    %278 = arith.maximumf %276, %277 : vector<9x9xf32>
    %c0_189 = arith.constant 0 : index
    %c2_190 = arith.constant 2 : index
    %c0_191 = arith.constant 0 : index
    %c0_192 = arith.constant 0 : index
    %279 = vector.load %arg9[%c0_189, %c2_190, %c0_191, %c0_192] : memref<1x8x9x9xf32, #tpu.memory_space<vmem>>, vector<1x1x9x9xf32>
    %280 = vector.shape_cast %279 : vector<1x1x9x9xf32> to vector<9x9xf32>
    %281 = vector.shape_cast %278 : vector<9x9xf32> to vector<1x1x9x9xf32>
    tpu.vector_store %arg9[%c0_189, %c2_190, %c0_191, %c0_192], %281 {strides = array<i32>} : memref<1x8x9x9xf32, #tpu.memory_space<vmem>>, vector<1x1x9x9xf32>,
    %c8_i32_193 = arith.constant 8 : i32
    %282 = arith.muli %arg2, %c8_i32_193 : i32
    %c3_i32 = arith.constant 3 : i32
    %283 = arith.addi %282, %c3_i32 : i32
    %c0_194 = arith.constant 0 : index
    %c0_195 = arith.constant 0 : index
    %c0_196 = arith.constant 0 : index
    %c0_197 = arith.constant 0 : index
    %284 = vector.load %arg5[%c0_194, %c0_195, %c0_196, %c0_197] : memref<1x3x9x9xf32, #tpu.memory_space<vmem>>, vector<1x1x9x9xf32>
    %285 = vector.shape_cast %284 : vector<1x1x9x9xf32> to vector<9x9xf32>
    %286 = arith.index_cast %283 : i32 to index
    %c0_198 = arith.constant 0 : index
    %287 = memref.load %arg3[%286, %c0_198] : memref<16x3xf32, #tpu.memory_space<smem>>
    %288 = vector.broadcast %287 : f32 to vector<9x9xf32>
    %289 = arith.mulf %285, %288 : vector<9x9xf32>
    %c0_199 = arith.constant 0 : index
    %c1_200 = arith.constant 1 : index
    %c0_201 = arith.constant 0 : index
    %c0_202 = arith.constant 0 : index
    %290 = vector.load %arg5[%c0_199, %c1_200, %c0_201, %c0_202] : memref<1x3x9x9xf32, #tpu.memory_space<vmem>>, vector<1x1x9x9xf32>
    %291 = vector.shape_cast %290 : vector<1x1x9x9xf32> to vector<9x9xf32>
    %292 = arith.index_cast %283 : i32 to index
    %c1_203 = arith.constant 1 : index
    %293 = memref.load %arg3[%292, %c1_203] : memref<16x3xf32, #tpu.memory_space<smem>>
    %294 = vector.broadcast %293 : f32 to vector<9x9xf32>
    %295 = arith.mulf %291, %294 : vector<9x9xf32>
    %296 = arith.addf %289, %295 : vector<9x9xf32>
    %c0_204 = arith.constant 0 : index
    %c2_205 = arith.constant 2 : index
    %c0_206 = arith.constant 0 : index
    %c0_207 = arith.constant 0 : index
    %297 = vector.load %arg5[%c0_204, %c2_205, %c0_206, %c0_207] : memref<1x3x9x9xf32, #tpu.memory_space<vmem>>, vector<1x1x9x9xf32>
    %298 = vector.shape_cast %297 : vector<1x1x9x9xf32> to vector<9x9xf32>
    %299 = arith.index_cast %283 : i32 to index
    %c2_208 = arith.constant 2 : index
    %300 = memref.load %arg3[%299, %c2_208] : memref<16x3xf32, #tpu.memory_space<smem>>
    %301 = vector.broadcast %300 : f32 to vector<9x9xf32>
    %302 = arith.mulf %298, %301 : vector<9x9xf32>
    %303 = arith.addf %296, %302 : vector<9x9xf32>
    %c0_209 = arith.constant 0 : index
    %c0_210 = arith.constant 0 : index
    %c0_211 = arith.constant 0 : index
    %c0_212 = arith.constant 0 : index
    %304 = vector.load %arg6[%c0_209, %c0_210, %c0_211, %c0_212] : memref<1x3x9x9xf32, #tpu.memory_space<vmem>>, vector<1x1x9x9xf32>
    %305 = vector.shape_cast %304 : vector<1x1x9x9xf32> to vector<9x9xf32>
    %306 = arith.index_cast %283 : i32 to index
    %c0_213 = arith.constant 0 : index
    %307 = memref.load %arg3[%306, %c0_213] : memref<16x3xf32, #tpu.memory_space<smem>>
    %308 = vector.broadcast %307 : f32 to vector<9x9xf32>
    %309 = arith.mulf %305, %308 : vector<9x9xf32>
    %c0_214 = arith.constant 0 : index
    %c1_215 = arith.constant 1 : index
    %c0_216 = arith.constant 0 : index
    %c0_217 = arith.constant 0 : index
    %310 = vector.load %arg6[%c0_214, %c1_215, %c0_216, %c0_217] : memref<1x3x9x9xf32, #tpu.memory_space<vmem>>, vector<1x1x9x9xf32>
    %311 = vector.shape_cast %310 : vector<1x1x9x9xf32> to vector<9x9xf32>
    %312 = arith.index_cast %283 : i32 to index
    %c1_218 = arith.constant 1 : index
    %313 = memref.load %arg3[%312, %c1_218] : memref<16x3xf32, #tpu.memory_space<smem>>
    %314 = vector.broadcast %313 : f32 to vector<9x9xf32>
    %315 = arith.mulf %311, %314 : vector<9x9xf32>
    %316 = arith.addf %309, %315 : vector<9x9xf32>
    %c0_219 = arith.constant 0 : index
    %c2_220 = arith.constant 2 : index
    %c0_221 = arith.constant 0 : index
    %c0_222 = arith.constant 0 : index
    %317 = vector.load %arg6[%c0_219, %c2_220, %c0_221, %c0_222] : memref<1x3x9x9xf32, #tpu.memory_space<vmem>>, vector<1x1x9x9xf32>
    %318 = vector.shape_cast %317 : vector<1x1x9x9xf32> to vector<9x9xf32>
    %319 = arith.index_cast %283 : i32 to index
    %c2_223 = arith.constant 2 : index
    %320 = memref.load %arg3[%319, %c2_223] : memref<16x3xf32, #tpu.memory_space<smem>>
    %321 = vector.broadcast %320 : f32 to vector<9x9xf32>
    %322 = arith.mulf %318, %321 : vector<9x9xf32>
    %323 = arith.addf %316, %322 : vector<9x9xf32>
    %324 = arith.maximumf %303, %323 : vector<9x9xf32>
    %c0_224 = arith.constant 0 : index
    %c0_225 = arith.constant 0 : index
    %c0_226 = arith.constant 0 : index
    %c0_227 = arith.constant 0 : index
    %325 = vector.load %arg7[%c0_224, %c0_225, %c0_226, %c0_227] : memref<1x3x9x9xf32, #tpu.memory_space<vmem>>, vector<1x1x9x9xf32>
    %326 = vector.shape_cast %325 : vector<1x1x9x9xf32> to vector<9x9xf32>
    %327 = arith.index_cast %283 : i32 to index
    %c0_228 = arith.constant 0 : index
    %328 = memref.load %arg3[%327, %c0_228] : memref<16x3xf32, #tpu.memory_space<smem>>
    %329 = vector.broadcast %328 : f32 to vector<9x9xf32>
    %330 = arith.mulf %326, %329 : vector<9x9xf32>
    %c0_229 = arith.constant 0 : index
    %c1_230 = arith.constant 1 : index
    %c0_231 = arith.constant 0 : index
    %c0_232 = arith.constant 0 : index
    %331 = vector.load %arg7[%c0_229, %c1_230, %c0_231, %c0_232] : memref<1x3x9x9xf32, #tpu.memory_space<vmem>>, vector<1x1x9x9xf32>
    %332 = vector.shape_cast %331 : vector<1x1x9x9xf32> to vector<9x9xf32>
    %333 = arith.index_cast %283 : i32 to index
    %c1_233 = arith.constant 1 : index
    %334 = memref.load %arg3[%333, %c1_233] : memref<16x3xf32, #tpu.memory_space<smem>>
    %335 = vector.broadcast %334 : f32 to vector<9x9xf32>
    %336 = arith.mulf %332, %335 : vector<9x9xf32>
    %337 = arith.addf %330, %336 : vector<9x9xf32>
    %c0_234 = arith.constant 0 : index
    %c2_235 = arith.constant 2 : index
    %c0_236 = arith.constant 0 : index
    %c0_237 = arith.constant 0 : index
    %338 = vector.load %arg7[%c0_234, %c2_235, %c0_236, %c0_237] : memref<1x3x9x9xf32, #tpu.memory_space<vmem>>, vector<1x1x9x9xf32>
    %339 = vector.shape_cast %338 : vector<1x1x9x9xf32> to vector<9x9xf32>
    %340 = arith.index_cast %283 : i32 to index
    %c2_238 = arith.constant 2 : index
    %341 = memref.load %arg3[%340, %c2_238] : memref<16x3xf32, #tpu.memory_space<smem>>
    %342 = vector.broadcast %341 : f32 to vector<9x9xf32>
    %343 = arith.mulf %339, %342 : vector<9x9xf32>
    %344 = arith.addf %337, %343 : vector<9x9xf32>
    %345 = arith.maximumf %324, %344 : vector<9x9xf32>
    %c0_239 = arith.constant 0 : index
    %c0_240 = arith.constant 0 : index
    %c0_241 = arith.constant 0 : index
    %c0_242 = arith.constant 0 : index
    %346 = vector.load %arg8[%c0_239, %c0_240, %c0_241, %c0_242] : memref<1x3x9x9xf32, #tpu.memory_space<vmem>>, vector<1x1x9x9xf32>
    %347 = vector.shape_cast %346 : vector<1x1x9x9xf32> to vector<9x9xf32>
    %348 = arith.index_cast %283 : i32 to index
    %c0_243 = arith.constant 0 : index
    %349 = memref.load %arg3[%348, %c0_243] : memref<16x3xf32, #tpu.memory_space<smem>>
    %350 = vector.broadcast %349 : f32 to vector<9x9xf32>
    %351 = arith.mulf %347, %350 : vector<9x9xf32>
    %c0_244 = arith.constant 0 : index
    %c1_245 = arith.constant 1 : index
    %c0_246 = arith.constant 0 : index
    %c0_247 = arith.constant 0 : index
    %352 = vector.load %arg8[%c0_244, %c1_245, %c0_246, %c0_247] : memref<1x3x9x9xf32, #tpu.memory_space<vmem>>, vector<1x1x9x9xf32>
    %353 = vector.shape_cast %352 : vector<1x1x9x9xf32> to vector<9x9xf32>
    %354 = arith.index_cast %283 : i32 to index
    %c1_248 = arith.constant 1 : index
    %355 = memref.load %arg3[%354, %c1_248] : memref<16x3xf32, #tpu.memory_space<smem>>
    %356 = vector.broadcast %355 : f32 to vector<9x9xf32>
    %357 = arith.mulf %353, %356 : vector<9x9xf32>
    %358 = arith.addf %351, %357 : vector<9x9xf32>
    %c0_249 = arith.constant 0 : index
    %c2_250 = arith.constant 2 : index
    %c0_251 = arith.constant 0 : index
    %c0_252 = arith.constant 0 : index
    %359 = vector.load %arg8[%c0_249, %c2_250, %c0_251, %c0_252] : memref<1x3x9x9xf32, #tpu.memory_space<vmem>>, vector<1x1x9x9xf32>
    %360 = vector.shape_cast %359 : vector<1x1x9x9xf32> to vector<9x9xf32>
    %361 = arith.index_cast %283 : i32 to index
    %c2_253 = arith.constant 2 : index
    %362 = memref.load %arg3[%361, %c2_253] : memref<16x3xf32, #tpu.memory_space<smem>>
    %363 = vector.broadcast %362 : f32 to vector<9x9xf32>
    %364 = arith.mulf %360, %363 : vector<9x9xf32>
    %365 = arith.addf %358, %364 : vector<9x9xf32>
    %366 = arith.maximumf %345, %365 : vector<9x9xf32>
    %367 = arith.index_cast %283 : i32 to index
    %368 = memref.load %arg4[%367] : memref<16xf32, #tpu.memory_space<smem>>
    %369 = vector.broadcast %368 : f32 to vector<9x9xf32>
    %370 = arith.addf %366, %369 : vector<9x9xf32>
    %cst_254 = arith.constant 0.000000e+00 : f32
    %371 = vector.broadcast %cst_254 : f32 to vector<9x9xf32>
    %372 = arith.maximumf %370, %371 : vector<9x9xf32>
    %c0_255 = arith.constant 0 : index
    %c3 = arith.constant 3 : index
    %c0_256 = arith.constant 0 : index
    %c0_257 = arith.constant 0 : index
    %373 = vector.load %arg9[%c0_255, %c3, %c0_256, %c0_257] : memref<1x8x9x9xf32, #tpu.memory_space<vmem>>, vector<1x1x9x9xf32>
    %374 = vector.shape_cast %373 : vector<1x1x9x9xf32> to vector<9x9xf32>
    %375 = vector.shape_cast %372 : vector<9x9xf32> to vector<1x1x9x9xf32>
    tpu.vector_store %arg9[%c0_255, %c3, %c0_256, %c0_257], %375 {strides = array<i32>} : memref<1x8x9x9xf32, #tpu.memory_space<vmem>>, vector<1x1x9x9xf32>,
    %c8_i32_258 = arith.constant 8 : i32
    %376 = arith.muli %arg2, %c8_i32_258 : i32
    %c4_i32 = arith.constant 4 : i32
    %377 = arith.addi %376, %c4_i32 : i32
    %c0_259 = arith.constant 0 : index
    %c0_260 = arith.constant 0 : index
    %c0_261 = arith.constant 0 : index
    %c0_262 = arith.constant 0 : index
    %378 = vector.load %arg5[%c0_259, %c0_260, %c0_261, %c0_262] : memref<1x3x9x9xf32, #tpu.memory_space<vmem>>, vector<1x1x9x9xf32>
    %379 = vector.shape_cast %378 : vector<1x1x9x9xf32> to vector<9x9xf32>
    %380 = arith.index_cast %377 : i32 to index
    %c0_263 = arith.constant 0 : index
    %381 = memref.load %arg3[%380, %c0_263] : memref<16x3xf32, #tpu.memory_space<smem>>
    %382 = vector.broadcast %381 : f32 to vector<9x9xf32>
    %383 = arith.mulf %379, %382 : vector<9x9xf32>
    %c0_264 = arith.constant 0 : index
    %c1_265 = arith.constant 1 : index
    %c0_266 = arith.constant 0 : index
    %c0_267 = arith.constant 0 : index
    %384 = vector.load %arg5[%c0_264, %c1_265, %c0_266, %c0_267] : memref<1x3x9x9xf32, #tpu.memory_space<vmem>>, vector<1x1x9x9xf32>
    %385 = vector.shape_cast %384 : vector<1x1x9x9xf32> to vector<9x9xf32>
    %386 = arith.index_cast %377 : i32 to index
    %c1_268 = arith.constant 1 : index
    %387 = memref.load %arg3[%386, %c1_268] : memref<16x3xf32, #tpu.memory_space<smem>>
    %388 = vector.broadcast %387 : f32 to vector<9x9xf32>
    %389 = arith.mulf %385, %388 : vector<9x9xf32>
    %390 = arith.addf %383, %389 : vector<9x9xf32>
    %c0_269 = arith.constant 0 : index
    %c2_270 = arith.constant 2 : index
    %c0_271 = arith.constant 0 : index
    %c0_272 = arith.constant 0 : index
    %391 = vector.load %arg5[%c0_269, %c2_270, %c0_271, %c0_272] : memref<1x3x9x9xf32, #tpu.memory_space<vmem>>, vector<1x1x9x9xf32>
    %392 = vector.shape_cast %391 : vector<1x1x9x9xf32> to vector<9x9xf32>
    %393 = arith.index_cast %377 : i32 to index
    %c2_273 = arith.constant 2 : index
    %394 = memref.load %arg3[%393, %c2_273] : memref<16x3xf32, #tpu.memory_space<smem>>
    %395 = vector.broadcast %394 : f32 to vector<9x9xf32>
    %396 = arith.mulf %392, %395 : vector<9x9xf32>
    %397 = arith.addf %390, %396 : vector<9x9xf32>
    %c0_274 = arith.constant 0 : index
    %c0_275 = arith.constant 0 : index
    %c0_276 = arith.constant 0 : index
    %c0_277 = arith.constant 0 : index
    %398 = vector.load %arg6[%c0_274, %c0_275, %c0_276, %c0_277] : memref<1x3x9x9xf32, #tpu.memory_space<vmem>>, vector<1x1x9x9xf32>
    %399 = vector.shape_cast %398 : vector<1x1x9x9xf32> to vector<9x9xf32>
    %400 = arith.index_cast %377 : i32 to index
    %c0_278 = arith.constant 0 : index
    %401 = memref.load %arg3[%400, %c0_278] : memref<16x3xf32, #tpu.memory_space<smem>>
    %402 = vector.broadcast %401 : f32 to vector<9x9xf32>
    %403 = arith.mulf %399, %402 : vector<9x9xf32>
    %c0_279 = arith.constant 0 : index
    %c1_280 = arith.constant 1 : index
    %c0_281 = arith.constant 0 : index
    %c0_282 = arith.constant 0 : index
    %404 = vector.load %arg6[%c0_279, %c1_280, %c0_281, %c0_282] : memref<1x3x9x9xf32, #tpu.memory_space<vmem>>, vector<1x1x9x9xf32>
    %405 = vector.shape_cast %404 : vector<1x1x9x9xf32> to vector<9x9xf32>
    %406 = arith.index_cast %377 : i32 to index
    %c1_283 = arith.constant 1 : index
    %407 = memref.load %arg3[%406, %c1_283] : memref<16x3xf32, #tpu.memory_space<smem>>
    %408 = vector.broadcast %407 : f32 to vector<9x9xf32>
    %409 = arith.mulf %405, %408 : vector<9x9xf32>
    %410 = arith.addf %403, %409 : vector<9x9xf32>
    %c0_284 = arith.constant 0 : index
    %c2_285 = arith.constant 2 : index
    %c0_286 = arith.constant 0 : index
    %c0_287 = arith.constant 0 : index
    %411 = vector.load %arg6[%c0_284, %c2_285, %c0_286, %c0_287] : memref<1x3x9x9xf32, #tpu.memory_space<vmem>>, vector<1x1x9x9xf32>
    %412 = vector.shape_cast %411 : vector<1x1x9x9xf32> to vector<9x9xf32>
    %413 = arith.index_cast %377 : i32 to index
    %c2_288 = arith.constant 2 : index
    %414 = memref.load %arg3[%413, %c2_288] : memref<16x3xf32, #tpu.memory_space<smem>>
    %415 = vector.broadcast %414 : f32 to vector<9x9xf32>
    %416 = arith.mulf %412, %415 : vector<9x9xf32>
    %417 = arith.addf %410, %416 : vector<9x9xf32>
    %418 = arith.maximumf %397, %417 : vector<9x9xf32>
    %c0_289 = arith.constant 0 : index
    %c0_290 = arith.constant 0 : index
    %c0_291 = arith.constant 0 : index
    %c0_292 = arith.constant 0 : index
    %419 = vector.load %arg7[%c0_289, %c0_290, %c0_291, %c0_292] : memref<1x3x9x9xf32, #tpu.memory_space<vmem>>, vector<1x1x9x9xf32>
    %420 = vector.shape_cast %419 : vector<1x1x9x9xf32> to vector<9x9xf32>
    %421 = arith.index_cast %377 : i32 to index
    %c0_293 = arith.constant 0 : index
    %422 = memref.load %arg3[%421, %c0_293] : memref<16x3xf32, #tpu.memory_space<smem>>
    %423 = vector.broadcast %422 : f32 to vector<9x9xf32>
    %424 = arith.mulf %420, %423 : vector<9x9xf32>
    %c0_294 = arith.constant 0 : index
    %c1_295 = arith.constant 1 : index
    %c0_296 = arith.constant 0 : index
    %c0_297 = arith.constant 0 : index
    %425 = vector.load %arg7[%c0_294, %c1_295, %c0_296, %c0_297] : memref<1x3x9x9xf32, #tpu.memory_space<vmem>>, vector<1x1x9x9xf32>
    %426 = vector.shape_cast %425 : vector<1x1x9x9xf32> to vector<9x9xf32>
    %427 = arith.index_cast %377 : i32 to index
    %c1_298 = arith.constant 1 : index
    %428 = memref.load %arg3[%427, %c1_298] : memref<16x3xf32, #tpu.memory_space<smem>>
    %429 = vector.broadcast %428 : f32 to vector<9x9xf32>
    %430 = arith.mulf %426, %429 : vector<9x9xf32>
    %431 = arith.addf %424, %430 : vector<9x9xf32>
    %c0_299 = arith.constant 0 : index
    %c2_300 = arith.constant 2 : index
    %c0_301 = arith.constant 0 : index
    %c0_302 = arith.constant 0 : index
    %432 = vector.load %arg7[%c0_299, %c2_300, %c0_301, %c0_302] : memref<1x3x9x9xf32, #tpu.memory_space<vmem>>, vector<1x1x9x9xf32>
    %433 = vector.shape_cast %432 : vector<1x1x9x9xf32> to vector<9x9xf32>
    %434 = arith.index_cast %377 : i32 to index
    %c2_303 = arith.constant 2 : index
    %435 = memref.load %arg3[%434, %c2_303] : memref<16x3xf32, #tpu.memory_space<smem>>
    %436 = vector.broadcast %435 : f32 to vector<9x9xf32>
    %437 = arith.mulf %433, %436 : vector<9x9xf32>
    %438 = arith.addf %431, %437 : vector<9x9xf32>
    %439 = arith.maximumf %418, %438 : vector<9x9xf32>
    %c0_304 = arith.constant 0 : index
    %c0_305 = arith.constant 0 : index
    %c0_306 = arith.constant 0 : index
    %c0_307 = arith.constant 0 : index
    %440 = vector.load %arg8[%c0_304, %c0_305, %c0_306, %c0_307] : memref<1x3x9x9xf32, #tpu.memory_space<vmem>>, vector<1x1x9x9xf32>
    %441 = vector.shape_cast %440 : vector<1x1x9x9xf32> to vector<9x9xf32>
    %442 = arith.index_cast %377 : i32 to index
    %c0_308 = arith.constant 0 : index
    %443 = memref.load %arg3[%442, %c0_308] : memref<16x3xf32, #tpu.memory_space<smem>>
    %444 = vector.broadcast %443 : f32 to vector<9x9xf32>
    %445 = arith.mulf %441, %444 : vector<9x9xf32>
    %c0_309 = arith.constant 0 : index
    %c1_310 = arith.constant 1 : index
    %c0_311 = arith.constant 0 : index
    %c0_312 = arith.constant 0 : index
    %446 = vector.load %arg8[%c0_309, %c1_310, %c0_311, %c0_312] : memref<1x3x9x9xf32, #tpu.memory_space<vmem>>, vector<1x1x9x9xf32>
    %447 = vector.shape_cast %446 : vector<1x1x9x9xf32> to vector<9x9xf32>
    %448 = arith.index_cast %377 : i32 to index
    %c1_313 = arith.constant 1 : index
    %449 = memref.load %arg3[%448, %c1_313] : memref<16x3xf32, #tpu.memory_space<smem>>
    %450 = vector.broadcast %449 : f32 to vector<9x9xf32>
    %451 = arith.mulf %447, %450 : vector<9x9xf32>
    %452 = arith.addf %445, %451 : vector<9x9xf32>
    %c0_314 = arith.constant 0 : index
    %c2_315 = arith.constant 2 : index
    %c0_316 = arith.constant 0 : index
    %c0_317 = arith.constant 0 : index
    %453 = vector.load %arg8[%c0_314, %c2_315, %c0_316, %c0_317] : memref<1x3x9x9xf32, #tpu.memory_space<vmem>>, vector<1x1x9x9xf32>
    %454 = vector.shape_cast %453 : vector<1x1x9x9xf32> to vector<9x9xf32>
    %455 = arith.index_cast %377 : i32 to index
    %c2_318 = arith.constant 2 : index
    %456 = memref.load %arg3[%455, %c2_318] : memref<16x3xf32, #tpu.memory_space<smem>>
    %457 = vector.broadcast %456 : f32 to vector<9x9xf32>
    %458 = arith.mulf %454, %457 : vector<9x9xf32>
    %459 = arith.addf %452, %458 : vector<9x9xf32>
    %460 = arith.maximumf %439, %459 : vector<9x9xf32>
    %461 = arith.index_cast %377 : i32 to index
    %462 = memref.load %arg4[%461] : memref<16xf32, #tpu.memory_space<smem>>
    %463 = vector.broadcast %462 : f32 to vector<9x9xf32>
    %464 = arith.addf %460, %463 : vector<9x9xf32>
    %cst_319 = arith.constant 0.000000e+00 : f32
    %465 = vector.broadcast %cst_319 : f32 to vector<9x9xf32>
    %466 = arith.maximumf %464, %465 : vector<9x9xf32>
    %c0_320 = arith.constant 0 : index
    %c4 = arith.constant 4 : index
    %c0_321 = arith.constant 0 : index
    %c0_322 = arith.constant 0 : index
    %467 = vector.load %arg9[%c0_320, %c4, %c0_321, %c0_322] : memref<1x8x9x9xf32, #tpu.memory_space<vmem>>, vector<1x1x9x9xf32>
    %468 = vector.shape_cast %467 : vector<1x1x9x9xf32> to vector<9x9xf32>
    %469 = vector.shape_cast %466 : vector<9x9xf32> to vector<1x1x9x9xf32>
    tpu.vector_store %arg9[%c0_320, %c4, %c0_321, %c0_322], %469 {strides = array<i32>} : memref<1x8x9x9xf32, #tpu.memory_space<vmem>>, vector<1x1x9x9xf32>,
    %c8_i32_323 = arith.constant 8 : i32
    %470 = arith.muli %arg2, %c8_i32_323 : i32
    %c5_i32 = arith.constant 5 : i32
    %471 = arith.addi %470, %c5_i32 : i32
    %c0_324 = arith.constant 0 : index
    %c0_325 = arith.constant 0 : index
    %c0_326 = arith.constant 0 : index
    %c0_327 = arith.constant 0 : index
    %472 = vector.load %arg5[%c0_324, %c0_325, %c0_326, %c0_327] : memref<1x3x9x9xf32, #tpu.memory_space<vmem>>, vector<1x1x9x9xf32>
    %473 = vector.shape_cast %472 : vector<1x1x9x9xf32> to vector<9x9xf32>
    %474 = arith.index_cast %471 : i32 to index
    %c0_328 = arith.constant 0 : index
    %475 = memref.load %arg3[%474, %c0_328] : memref<16x3xf32, #tpu.memory_space<smem>>
    %476 = vector.broadcast %475 : f32 to vector<9x9xf32>
    %477 = arith.mulf %473, %476 : vector<9x9xf32>
    %c0_329 = arith.constant 0 : index
    %c1_330 = arith.constant 1 : index
    %c0_331 = arith.constant 0 : index
    %c0_332 = arith.constant 0 : index
    %478 = vector.load %arg5[%c0_329, %c1_330, %c0_331, %c0_332] : memref<1x3x9x9xf32, #tpu.memory_space<vmem>>, vector<1x1x9x9xf32>
    %479 = vector.shape_cast %478 : vector<1x1x9x9xf32> to vector<9x9xf32>
    %480 = arith.index_cast %471 : i32 to index
    %c1_333 = arith.constant 1 : index
    %481 = memref.load %arg3[%480, %c1_333] : memref<16x3xf32, #tpu.memory_space<smem>>
    %482 = vector.broadcast %481 : f32 to vector<9x9xf32>
    %483 = arith.mulf %479, %482 : vector<9x9xf32>
    %484 = arith.addf %477, %483 : vector<9x9xf32>
    %c0_334 = arith.constant 0 : index
    %c2_335 = arith.constant 2 : index
    %c0_336 = arith.constant 0 : index
    %c0_337 = arith.constant 0 : index
    %485 = vector.load %arg5[%c0_334, %c2_335, %c0_336, %c0_337] : memref<1x3x9x9xf32, #tpu.memory_space<vmem>>, vector<1x1x9x9xf32>
    %486 = vector.shape_cast %485 : vector<1x1x9x9xf32> to vector<9x9xf32>
    %487 = arith.index_cast %471 : i32 to index
    %c2_338 = arith.constant 2 : index
    %488 = memref.load %arg3[%487, %c2_338] : memref<16x3xf32, #tpu.memory_space<smem>>
    %489 = vector.broadcast %488 : f32 to vector<9x9xf32>
    %490 = arith.mulf %486, %489 : vector<9x9xf32>
    %491 = arith.addf %484, %490 : vector<9x9xf32>
    %c0_339 = arith.constant 0 : index
    %c0_340 = arith.constant 0 : index
    %c0_341 = arith.constant 0 : index
    %c0_342 = arith.constant 0 : index
    %492 = vector.load %arg6[%c0_339, %c0_340, %c0_341, %c0_342] : memref<1x3x9x9xf32, #tpu.memory_space<vmem>>, vector<1x1x9x9xf32>
    %493 = vector.shape_cast %492 : vector<1x1x9x9xf32> to vector<9x9xf32>
    %494 = arith.index_cast %471 : i32 to index
    %c0_343 = arith.constant 0 : index
    %495 = memref.load %arg3[%494, %c0_343] : memref<16x3xf32, #tpu.memory_space<smem>>
    %496 = vector.broadcast %495 : f32 to vector<9x9xf32>
    %497 = arith.mulf %493, %496 : vector<9x9xf32>
    %c0_344 = arith.constant 0 : index
    %c1_345 = arith.constant 1 : index
    %c0_346 = arith.constant 0 : index
    %c0_347 = arith.constant 0 : index
    %498 = vector.load %arg6[%c0_344, %c1_345, %c0_346, %c0_347] : memref<1x3x9x9xf32, #tpu.memory_space<vmem>>, vector<1x1x9x9xf32>
    %499 = vector.shape_cast %498 : vector<1x1x9x9xf32> to vector<9x9xf32>
    %500 = arith.index_cast %471 : i32 to index
    %c1_348 = arith.constant 1 : index
    %501 = memref.load %arg3[%500, %c1_348] : memref<16x3xf32, #tpu.memory_space<smem>>
    %502 = vector.broadcast %501 : f32 to vector<9x9xf32>
    %503 = arith.mulf %499, %502 : vector<9x9xf32>
    %504 = arith.addf %497, %503 : vector<9x9xf32>
    %c0_349 = arith.constant 0 : index
    %c2_350 = arith.constant 2 : index
    %c0_351 = arith.constant 0 : index
    %c0_352 = arith.constant 0 : index
    %505 = vector.load %arg6[%c0_349, %c2_350, %c0_351, %c0_352] : memref<1x3x9x9xf32, #tpu.memory_space<vmem>>, vector<1x1x9x9xf32>
    %506 = vector.shape_cast %505 : vector<1x1x9x9xf32> to vector<9x9xf32>
    %507 = arith.index_cast %471 : i32 to index
    %c2_353 = arith.constant 2 : index
    %508 = memref.load %arg3[%507, %c2_353] : memref<16x3xf32, #tpu.memory_space<smem>>
    %509 = vector.broadcast %508 : f32 to vector<9x9xf32>
    %510 = arith.mulf %506, %509 : vector<9x9xf32>
    %511 = arith.addf %504, %510 : vector<9x9xf32>
    %512 = arith.maximumf %491, %511 : vector<9x9xf32>
    %c0_354 = arith.constant 0 : index
    %c0_355 = arith.constant 0 : index
    %c0_356 = arith.constant 0 : index
    %c0_357 = arith.constant 0 : index
    %513 = vector.load %arg7[%c0_354, %c0_355, %c0_356, %c0_357] : memref<1x3x9x9xf32, #tpu.memory_space<vmem>>, vector<1x1x9x9xf32>
    %514 = vector.shape_cast %513 : vector<1x1x9x9xf32> to vector<9x9xf32>
    %515 = arith.index_cast %471 : i32 to index
    %c0_358 = arith.constant 0 : index
    %516 = memref.load %arg3[%515, %c0_358] : memref<16x3xf32, #tpu.memory_space<smem>>
    %517 = vector.broadcast %516 : f32 to vector<9x9xf32>
    %518 = arith.mulf %514, %517 : vector<9x9xf32>
    %c0_359 = arith.constant 0 : index
    %c1_360 = arith.constant 1 : index
    %c0_361 = arith.constant 0 : index
    %c0_362 = arith.constant 0 : index
    %519 = vector.load %arg7[%c0_359, %c1_360, %c0_361, %c0_362] : memref<1x3x9x9xf32, #tpu.memory_space<vmem>>, vector<1x1x9x9xf32>
    %520 = vector.shape_cast %519 : vector<1x1x9x9xf32> to vector<9x9xf32>
    %521 = arith.index_cast %471 : i32 to index
    %c1_363 = arith.constant 1 : index
    %522 = memref.load %arg3[%521, %c1_363] : memref<16x3xf32, #tpu.memory_space<smem>>
    %523 = vector.broadcast %522 : f32 to vector<9x9xf32>
    %524 = arith.mulf %520, %523 : vector<9x9xf32>
    %525 = arith.addf %518, %524 : vector<9x9xf32>
    %c0_364 = arith.constant 0 : index
    %c2_365 = arith.constant 2 : index
    %c0_366 = arith.constant 0 : index
    %c0_367 = arith.constant 0 : index
    %526 = vector.load %arg7[%c0_364, %c2_365, %c0_366, %c0_367] : memref<1x3x9x9xf32, #tpu.memory_space<vmem>>, vector<1x1x9x9xf32>
    %527 = vector.shape_cast %526 : vector<1x1x9x9xf32> to vector<9x9xf32>
    %528 = arith.index_cast %471 : i32 to index
    %c2_368 = arith.constant 2 : index
    %529 = memref.load %arg3[%528, %c2_368] : memref<16x3xf32, #tpu.memory_space<smem>>
    %530 = vector.broadcast %529 : f32 to vector<9x9xf32>
    %531 = arith.mulf %527, %530 : vector<9x9xf32>
    %532 = arith.addf %525, %531 : vector<9x9xf32>
    %533 = arith.maximumf %512, %532 : vector<9x9xf32>
    %c0_369 = arith.constant 0 : index
    %c0_370 = arith.constant 0 : index
    %c0_371 = arith.constant 0 : index
    %c0_372 = arith.constant 0 : index
    %534 = vector.load %arg8[%c0_369, %c0_370, %c0_371, %c0_372] : memref<1x3x9x9xf32, #tpu.memory_space<vmem>>, vector<1x1x9x9xf32>
    %535 = vector.shape_cast %534 : vector<1x1x9x9xf32> to vector<9x9xf32>
    %536 = arith.index_cast %471 : i32 to index
    %c0_373 = arith.constant 0 : index
    %537 = memref.load %arg3[%536, %c0_373] : memref<16x3xf32, #tpu.memory_space<smem>>
    %538 = vector.broadcast %537 : f32 to vector<9x9xf32>
    %539 = arith.mulf %535, %538 : vector<9x9xf32>
    %c0_374 = arith.constant 0 : index
    %c1_375 = arith.constant 1 : index
    %c0_376 = arith.constant 0 : index
    %c0_377 = arith.constant 0 : index
    %540 = vector.load %arg8[%c0_374, %c1_375, %c0_376, %c0_377] : memref<1x3x9x9xf32, #tpu.memory_space<vmem>>, vector<1x1x9x9xf32>
    %541 = vector.shape_cast %540 : vector<1x1x9x9xf32> to vector<9x9xf32>
    %542 = arith.index_cast %471 : i32 to index
    %c1_378 = arith.constant 1 : index
    %543 = memref.load %arg3[%542, %c1_378] : memref<16x3xf32, #tpu.memory_space<smem>>
    %544 = vector.broadcast %543 : f32 to vector<9x9xf32>
    %545 = arith.mulf %541, %544 : vector<9x9xf32>
    %546 = arith.addf %539, %545 : vector<9x9xf32>
    %c0_379 = arith.constant 0 : index
    %c2_380 = arith.constant 2 : index
    %c0_381 = arith.constant 0 : index
    %c0_382 = arith.constant 0 : index
    %547 = vector.load %arg8[%c0_379, %c2_380, %c0_381, %c0_382] : memref<1x3x9x9xf32, #tpu.memory_space<vmem>>, vector<1x1x9x9xf32>
    %548 = vector.shape_cast %547 : vector<1x1x9x9xf32> to vector<9x9xf32>
    %549 = arith.index_cast %471 : i32 to index
    %c2_383 = arith.constant 2 : index
    %550 = memref.load %arg3[%549, %c2_383] : memref<16x3xf32, #tpu.memory_space<smem>>
    %551 = vector.broadcast %550 : f32 to vector<9x9xf32>
    %552 = arith.mulf %548, %551 : vector<9x9xf32>
    %553 = arith.addf %546, %552 : vector<9x9xf32>
    %554 = arith.maximumf %533, %553 : vector<9x9xf32>
    %555 = arith.index_cast %471 : i32 to index
    %556 = memref.load %arg4[%555] : memref<16xf32, #tpu.memory_space<smem>>
    %557 = vector.broadcast %556 : f32 to vector<9x9xf32>
    %558 = arith.addf %554, %557 : vector<9x9xf32>
    %cst_384 = arith.constant 0.000000e+00 : f32
    %559 = vector.broadcast %cst_384 : f32 to vector<9x9xf32>
    %560 = arith.maximumf %558, %559 : vector<9x9xf32>
    %c0_385 = arith.constant 0 : index
    %c5 = arith.constant 5 : index
    %c0_386 = arith.constant 0 : index
    %c0_387 = arith.constant 0 : index
    %561 = vector.load %arg9[%c0_385, %c5, %c0_386, %c0_387] : memref<1x8x9x9xf32, #tpu.memory_space<vmem>>, vector<1x1x9x9xf32>
    %562 = vector.shape_cast %561 : vector<1x1x9x9xf32> to vector<9x9xf32>
    %563 = vector.shape_cast %560 : vector<9x9xf32> to vector<1x1x9x9xf32>
    tpu.vector_store %arg9[%c0_385, %c5, %c0_386, %c0_387], %563 {strides = array<i32>} : memref<1x8x9x9xf32, #tpu.memory_space<vmem>>, vector<1x1x9x9xf32>,
    %c8_i32_388 = arith.constant 8 : i32
    %564 = arith.muli %arg2, %c8_i32_388 : i32
    %c6_i32 = arith.constant 6 : i32
    %565 = arith.addi %564, %c6_i32 : i32
    %c0_389 = arith.constant 0 : index
    %c0_390 = arith.constant 0 : index
    %c0_391 = arith.constant 0 : index
    %c0_392 = arith.constant 0 : index
    %566 = vector.load %arg5[%c0_389, %c0_390, %c0_391, %c0_392] : memref<1x3x9x9xf32, #tpu.memory_space<vmem>>, vector<1x1x9x9xf32>
    %567 = vector.shape_cast %566 : vector<1x1x9x9xf32> to vector<9x9xf32>
    %568 = arith.index_cast %565 : i32 to index
    %c0_393 = arith.constant 0 : index
    %569 = memref.load %arg3[%568, %c0_393] : memref<16x3xf32, #tpu.memory_space<smem>>
    %570 = vector.broadcast %569 : f32 to vector<9x9xf32>
    %571 = arith.mulf %567, %570 : vector<9x9xf32>
    %c0_394 = arith.constant 0 : index
    %c1_395 = arith.constant 1 : index
    %c0_396 = arith.constant 0 : index
    %c0_397 = arith.constant 0 : index
    %572 = vector.load %arg5[%c0_394, %c1_395, %c0_396, %c0_397] : memref<1x3x9x9xf32, #tpu.memory_space<vmem>>, vector<1x1x9x9xf32>
    %573 = vector.shape_cast %572 : vector<1x1x9x9xf32> to vector<9x9xf32>
    %574 = arith.index_cast %565 : i32 to index
    %c1_398 = arith.constant 1 : index
    %575 = memref.load %arg3[%574, %c1_398] : memref<16x3xf32, #tpu.memory_space<smem>>
    %576 = vector.broadcast %575 : f32 to vector<9x9xf32>
    %577 = arith.mulf %573, %576 : vector<9x9xf32>
    %578 = arith.addf %571, %577 : vector<9x9xf32>
    %c0_399 = arith.constant 0 : index
    %c2_400 = arith.constant 2 : index
    %c0_401 = arith.constant 0 : index
    %c0_402 = arith.constant 0 : index
    %579 = vector.load %arg5[%c0_399, %c2_400, %c0_401, %c0_402] : memref<1x3x9x9xf32, #tpu.memory_space<vmem>>, vector<1x1x9x9xf32>
    %580 = vector.shape_cast %579 : vector<1x1x9x9xf32> to vector<9x9xf32>
    %581 = arith.index_cast %565 : i32 to index
    %c2_403 = arith.constant 2 : index
    %582 = memref.load %arg3[%581, %c2_403] : memref<16x3xf32, #tpu.memory_space<smem>>
    %583 = vector.broadcast %582 : f32 to vector<9x9xf32>
    %584 = arith.mulf %580, %583 : vector<9x9xf32>
    %585 = arith.addf %578, %584 : vector<9x9xf32>
    %c0_404 = arith.constant 0 : index
    %c0_405 = arith.constant 0 : index
    %c0_406 = arith.constant 0 : index
    %c0_407 = arith.constant 0 : index
    %586 = vector.load %arg6[%c0_404, %c0_405, %c0_406, %c0_407] : memref<1x3x9x9xf32, #tpu.memory_space<vmem>>, vector<1x1x9x9xf32>
    %587 = vector.shape_cast %586 : vector<1x1x9x9xf32> to vector<9x9xf32>
    %588 = arith.index_cast %565 : i32 to index
    %c0_408 = arith.constant 0 : index
    %589 = memref.load %arg3[%588, %c0_408] : memref<16x3xf32, #tpu.memory_space<smem>>
    %590 = vector.broadcast %589 : f32 to vector<9x9xf32>
    %591 = arith.mulf %587, %590 : vector<9x9xf32>
    %c0_409 = arith.constant 0 : index
    %c1_410 = arith.constant 1 : index
    %c0_411 = arith.constant 0 : index
    %c0_412 = arith.constant 0 : index
    %592 = vector.load %arg6[%c0_409, %c1_410, %c0_411, %c0_412] : memref<1x3x9x9xf32, #tpu.memory_space<vmem>>, vector<1x1x9x9xf32>
    %593 = vector.shape_cast %592 : vector<1x1x9x9xf32> to vector<9x9xf32>
    %594 = arith.index_cast %565 : i32 to index
    %c1_413 = arith.constant 1 : index
    %595 = memref.load %arg3[%594, %c1_413] : memref<16x3xf32, #tpu.memory_space<smem>>
    %596 = vector.broadcast %595 : f32 to vector<9x9xf32>
    %597 = arith.mulf %593, %596 : vector<9x9xf32>
    %598 = arith.addf %591, %597 : vector<9x9xf32>
    %c0_414 = arith.constant 0 : index
    %c2_415 = arith.constant 2 : index
    %c0_416 = arith.constant 0 : index
    %c0_417 = arith.constant 0 : index
    %599 = vector.load %arg6[%c0_414, %c2_415, %c0_416, %c0_417] : memref<1x3x9x9xf32, #tpu.memory_space<vmem>>, vector<1x1x9x9xf32>
    %600 = vector.shape_cast %599 : vector<1x1x9x9xf32> to vector<9x9xf32>
    %601 = arith.index_cast %565 : i32 to index
    %c2_418 = arith.constant 2 : index
    %602 = memref.load %arg3[%601, %c2_418] : memref<16x3xf32, #tpu.memory_space<smem>>
    %603 = vector.broadcast %602 : f32 to vector<9x9xf32>
    %604 = arith.mulf %600, %603 : vector<9x9xf32>
    %605 = arith.addf %598, %604 : vector<9x9xf32>
    %606 = arith.maximumf %585, %605 : vector<9x9xf32>
    %c0_419 = arith.constant 0 : index
    %c0_420 = arith.constant 0 : index
    %c0_421 = arith.constant 0 : index
    %c0_422 = arith.constant 0 : index
    %607 = vector.load %arg7[%c0_419, %c0_420, %c0_421, %c0_422] : memref<1x3x9x9xf32, #tpu.memory_space<vmem>>, vector<1x1x9x9xf32>
    %608 = vector.shape_cast %607 : vector<1x1x9x9xf32> to vector<9x9xf32>
    %609 = arith.index_cast %565 : i32 to index
    %c0_423 = arith.constant 0 : index
    %610 = memref.load %arg3[%609, %c0_423] : memref<16x3xf32, #tpu.memory_space<smem>>
    %611 = vector.broadcast %610 : f32 to vector<9x9xf32>
    %612 = arith.mulf %608, %611 : vector<9x9xf32>
    %c0_424 = arith.constant 0 : index
    %c1_425 = arith.constant 1 : index
    %c0_426 = arith.constant 0 : index
    %c0_427 = arith.constant 0 : index
    %613 = vector.load %arg7[%c0_424, %c1_425, %c0_426, %c0_427] : memref<1x3x9x9xf32, #tpu.memory_space<vmem>>, vector<1x1x9x9xf32>
    %614 = vector.shape_cast %613 : vector<1x1x9x9xf32> to vector<9x9xf32>
    %615 = arith.index_cast %565 : i32 to index
    %c1_428 = arith.constant 1 : index
    %616 = memref.load %arg3[%615, %c1_428] : memref<16x3xf32, #tpu.memory_space<smem>>
    %617 = vector.broadcast %616 : f32 to vector<9x9xf32>
    %618 = arith.mulf %614, %617 : vector<9x9xf32>
    %619 = arith.addf %612, %618 : vector<9x9xf32>
    %c0_429 = arith.constant 0 : index
    %c2_430 = arith.constant 2 : index
    %c0_431 = arith.constant 0 : index
    %c0_432 = arith.constant 0 : index
    %620 = vector.load %arg7[%c0_429, %c2_430, %c0_431, %c0_432] : memref<1x3x9x9xf32, #tpu.memory_space<vmem>>, vector<1x1x9x9xf32>
    %621 = vector.shape_cast %620 : vector<1x1x9x9xf32> to vector<9x9xf32>
    %622 = arith.index_cast %565 : i32 to index
    %c2_433 = arith.constant 2 : index
    %623 = memref.load %arg3[%622, %c2_433] : memref<16x3xf32, #tpu.memory_space<smem>>
    %624 = vector.broadcast %623 : f32 to vector<9x9xf32>
    %625 = arith.mulf %621, %624 : vector<9x9xf32>
    %626 = arith.addf %619, %625 : vector<9x9xf32>
    %627 = arith.maximumf %606, %626 : vector<9x9xf32>
    %c0_434 = arith.constant 0 : index
    %c0_435 = arith.constant 0 : index
    %c0_436 = arith.constant 0 : index
    %c0_437 = arith.constant 0 : index
    %628 = vector.load %arg8[%c0_434, %c0_435, %c0_436, %c0_437] : memref<1x3x9x9xf32, #tpu.memory_space<vmem>>, vector<1x1x9x9xf32>
    %629 = vector.shape_cast %628 : vector<1x1x9x9xf32> to vector<9x9xf32>
    %630 = arith.index_cast %565 : i32 to index
    %c0_438 = arith.constant 0 : index
    %631 = memref.load %arg3[%630, %c0_438] : memref<16x3xf32, #tpu.memory_space<smem>>
    %632 = vector.broadcast %631 : f32 to vector<9x9xf32>
    %633 = arith.mulf %629, %632 : vector<9x9xf32>
    %c0_439 = arith.constant 0 : index
    %c1_440 = arith.constant 1 : index
    %c0_441 = arith.constant 0 : index
    %c0_442 = arith.constant 0 : index
    %634 = vector.load %arg8[%c0_439, %c1_440, %c0_441, %c0_442] : memref<1x3x9x9xf32, #tpu.memory_space<vmem>>, vector<1x1x9x9xf32>
    %635 = vector.shape_cast %634 : vector<1x1x9x9xf32> to vector<9x9xf32>
    %636 = arith.index_cast %565 : i32 to index
    %c1_443 = arith.constant 1 : index
    %637 = memref.load %arg3[%636, %c1_443] : memref<16x3xf32, #tpu.memory_space<smem>>
    %638 = vector.broadcast %637 : f32 to vector<9x9xf32>
    %639 = arith.mulf %635, %638 : vector<9x9xf32>
    %640 = arith.addf %633, %639 : vector<9x9xf32>
    %c0_444 = arith.constant 0 : index
    %c2_445 = arith.constant 2 : index
    %c0_446 = arith.constant 0 : index
    %c0_447 = arith.constant 0 : index
    %641 = vector.load %arg8[%c0_444, %c2_445, %c0_446, %c0_447] : memref<1x3x9x9xf32, #tpu.memory_space<vmem>>, vector<1x1x9x9xf32>
    %642 = vector.shape_cast %641 : vector<1x1x9x9xf32> to vector<9x9xf32>
    %643 = arith.index_cast %565 : i32 to index
    %c2_448 = arith.constant 2 : index
    %644 = memref.load %arg3[%643, %c2_448] : memref<16x3xf32, #tpu.memory_space<smem>>
    %645 = vector.broadcast %644 : f32 to vector<9x9xf32>
    %646 = arith.mulf %642, %645 : vector<9x9xf32>
    %647 = arith.addf %640, %646 : vector<9x9xf32>
    %648 = arith.maximumf %627, %647 : vector<9x9xf32>
    %649 = arith.index_cast %565 : i32 to index
    %650 = memref.load %arg4[%649] : memref<16xf32, #tpu.memory_space<smem>>
    %651 = vector.broadcast %650 : f32 to vector<9x9xf32>
    %652 = arith.addf %648, %651 : vector<9x9xf32>
    %cst_449 = arith.constant 0.000000e+00 : f32
    %653 = vector.broadcast %cst_449 : f32 to vector<9x9xf32>
    %654 = arith.maximumf %652, %653 : vector<9x9xf32>
    %c0_450 = arith.constant 0 : index
    %c6 = arith.constant 6 : index
    %c0_451 = arith.constant 0 : index
    %c0_452 = arith.constant 0 : index
    %655 = vector.load %arg9[%c0_450, %c6, %c0_451, %c0_452] : memref<1x8x9x9xf32, #tpu.memory_space<vmem>>, vector<1x1x9x9xf32>
    %656 = vector.shape_cast %655 : vector<1x1x9x9xf32> to vector<9x9xf32>
    %657 = vector.shape_cast %654 : vector<9x9xf32> to vector<1x1x9x9xf32>
    tpu.vector_store %arg9[%c0_450, %c6, %c0_451, %c0_452], %657 {strides = array<i32>} : memref<1x8x9x9xf32, #tpu.memory_space<vmem>>, vector<1x1x9x9xf32>,
    %c8_i32_453 = arith.constant 8 : i32
    %658 = arith.muli %arg2, %c8_i32_453 : i32
    %c7_i32 = arith.constant 7 : i32
    %659 = arith.addi %658, %c7_i32 : i32
    %c0_454 = arith.constant 0 : index
    %c0_455 = arith.constant 0 : index
    %c0_456 = arith.constant 0 : index
    %c0_457 = arith.constant 0 : index
    %660 = vector.load %arg5[%c0_454, %c0_455, %c0_456, %c0_457] : memref<1x3x9x9xf32, #tpu.memory_space<vmem>>, vector<1x1x9x9xf32>
    %661 = vector.shape_cast %660 : vector<1x1x9x9xf32> to vector<9x9xf32>
    %662 = arith.index_cast %659 : i32 to index
    %c0_458 = arith.constant 0 : index
    %663 = memref.load %arg3[%662, %c0_458] : memref<16x3xf32, #tpu.memory_space<smem>>
    %664 = vector.broadcast %663 : f32 to vector<9x9xf32>
    %665 = arith.mulf %661, %664 : vector<9x9xf32>
    %c0_459 = arith.constant 0 : index
    %c1_460 = arith.constant 1 : index
    %c0_461 = arith.constant 0 : index
    %c0_462 = arith.constant 0 : index
    %666 = vector.load %arg5[%c0_459, %c1_460, %c0_461, %c0_462] : memref<1x3x9x9xf32, #tpu.memory_space<vmem>>, vector<1x1x9x9xf32>
    %667 = vector.shape_cast %666 : vector<1x1x9x9xf32> to vector<9x9xf32>
    %668 = arith.index_cast %659 : i32 to index
    %c1_463 = arith.constant 1 : index
    %669 = memref.load %arg3[%668, %c1_463] : memref<16x3xf32, #tpu.memory_space<smem>>
    %670 = vector.broadcast %669 : f32 to vector<9x9xf32>
    %671 = arith.mulf %667, %670 : vector<9x9xf32>
    %672 = arith.addf %665, %671 : vector<9x9xf32>
    %c0_464 = arith.constant 0 : index
    %c2_465 = arith.constant 2 : index
    %c0_466 = arith.constant 0 : index
    %c0_467 = arith.constant 0 : index
    %673 = vector.load %arg5[%c0_464, %c2_465, %c0_466, %c0_467] : memref<1x3x9x9xf32, #tpu.memory_space<vmem>>, vector<1x1x9x9xf32>
    %674 = vector.shape_cast %673 : vector<1x1x9x9xf32> to vector<9x9xf32>
    %675 = arith.index_cast %659 : i32 to index
    %c2_468 = arith.constant 2 : index
    %676 = memref.load %arg3[%675, %c2_468] : memref<16x3xf32, #tpu.memory_space<smem>>
    %677 = vector.broadcast %676 : f32 to vector<9x9xf32>
    %678 = arith.mulf %674, %677 : vector<9x9xf32>
    %679 = arith.addf %672, %678 : vector<9x9xf32>
    %c0_469 = arith.constant 0 : index
    %c0_470 = arith.constant 0 : index
    %c0_471 = arith.constant 0 : index
    %c0_472 = arith.constant 0 : index
    %680 = vector.load %arg6[%c0_469, %c0_470, %c0_471, %c0_472] : memref<1x3x9x9xf32, #tpu.memory_space<vmem>>, vector<1x1x9x9xf32>
    %681 = vector.shape_cast %680 : vector<1x1x9x9xf32> to vector<9x9xf32>
    %682 = arith.index_cast %659 : i32 to index
    %c0_473 = arith.constant 0 : index
    %683 = memref.load %arg3[%682, %c0_473] : memref<16x3xf32, #tpu.memory_space<smem>>
    %684 = vector.broadcast %683 : f32 to vector<9x9xf32>
    %685 = arith.mulf %681, %684 : vector<9x9xf32>
    %c0_474 = arith.constant 0 : index
    %c1_475 = arith.constant 1 : index
    %c0_476 = arith.constant 0 : index
    %c0_477 = arith.constant 0 : index
    %686 = vector.load %arg6[%c0_474, %c1_475, %c0_476, %c0_477] : memref<1x3x9x9xf32, #tpu.memory_space<vmem>>, vector<1x1x9x9xf32>
    %687 = vector.shape_cast %686 : vector<1x1x9x9xf32> to vector<9x9xf32>
    %688 = arith.index_cast %659 : i32 to index
    %c1_478 = arith.constant 1 : index
    %689 = memref.load %arg3[%688, %c1_478] : memref<16x3xf32, #tpu.memory_space<smem>>
    %690 = vector.broadcast %689 : f32 to vector<9x9xf32>
    %691 = arith.mulf %687, %690 : vector<9x9xf32>
    %692 = arith.addf %685, %691 : vector<9x9xf32>
    %c0_479 = arith.constant 0 : index
    %c2_480 = arith.constant 2 : index
    %c0_481 = arith.constant 0 : index
    %c0_482 = arith.constant 0 : index
    %693 = vector.load %arg6[%c0_479, %c2_480, %c0_481, %c0_482] : memref<1x3x9x9xf32, #tpu.memory_space<vmem>>, vector<1x1x9x9xf32>
    %694 = vector.shape_cast %693 : vector<1x1x9x9xf32> to vector<9x9xf32>
    %695 = arith.index_cast %659 : i32 to index
    %c2_483 = arith.constant 2 : index
    %696 = memref.load %arg3[%695, %c2_483] : memref<16x3xf32, #tpu.memory_space<smem>>
    %697 = vector.broadcast %696 : f32 to vector<9x9xf32>
    %698 = arith.mulf %694, %697 : vector<9x9xf32>
    %699 = arith.addf %692, %698 : vector<9x9xf32>
    %700 = arith.maximumf %679, %699 : vector<9x9xf32>
    %c0_484 = arith.constant 0 : index
    %c0_485 = arith.constant 0 : index
    %c0_486 = arith.constant 0 : index
    %c0_487 = arith.constant 0 : index
    %701 = vector.load %arg7[%c0_484, %c0_485, %c0_486, %c0_487] : memref<1x3x9x9xf32, #tpu.memory_space<vmem>>, vector<1x1x9x9xf32>
    %702 = vector.shape_cast %701 : vector<1x1x9x9xf32> to vector<9x9xf32>
    %703 = arith.index_cast %659 : i32 to index
    %c0_488 = arith.constant 0 : index
    %704 = memref.load %arg3[%703, %c0_488] : memref<16x3xf32, #tpu.memory_space<smem>>
    %705 = vector.broadcast %704 : f32 to vector<9x9xf32>
    %706 = arith.mulf %702, %705 : vector<9x9xf32>
    %c0_489 = arith.constant 0 : index
    %c1_490 = arith.constant 1 : index
    %c0_491 = arith.constant 0 : index
    %c0_492 = arith.constant 0 : index
    %707 = vector.load %arg7[%c0_489, %c1_490, %c0_491, %c0_492] : memref<1x3x9x9xf32, #tpu.memory_space<vmem>>, vector<1x1x9x9xf32>
    %708 = vector.shape_cast %707 : vector<1x1x9x9xf32> to vector<9x9xf32>
    %709 = arith.index_cast %659 : i32 to index
    %c1_493 = arith.constant 1 : index
    %710 = memref.load %arg3[%709, %c1_493] : memref<16x3xf32, #tpu.memory_space<smem>>
    %711 = vector.broadcast %710 : f32 to vector<9x9xf32>
    %712 = arith.mulf %708, %711 : vector<9x9xf32>
    %713 = arith.addf %706, %712 : vector<9x9xf32>
    %c0_494 = arith.constant 0 : index
    %c2_495 = arith.constant 2 : index
    %c0_496 = arith.constant 0 : index
    %c0_497 = arith.constant 0 : index
    %714 = vector.load %arg7[%c0_494, %c2_495, %c0_496, %c0_497] : memref<1x3x9x9xf32, #tpu.memory_space<vmem>>, vector<1x1x9x9xf32>
    %715 = vector.shape_cast %714 : vector<1x1x9x9xf32> to vector<9x9xf32>
    %716 = arith.index_cast %659 : i32 to index
    %c2_498 = arith.constant 2 : index
    %717 = memref.load %arg3[%716, %c2_498] : memref<16x3xf32, #tpu.memory_space<smem>>
    %718 = vector.broadcast %717 : f32 to vector<9x9xf32>
    %719 = arith.mulf %715, %718 : vector<9x9xf32>
    %720 = arith.addf %713, %719 : vector<9x9xf32>
    %721 = arith.maximumf %700, %720 : vector<9x9xf32>
    %c0_499 = arith.constant 0 : index
    %c0_500 = arith.constant 0 : index
    %c0_501 = arith.constant 0 : index
    %c0_502 = arith.constant 0 : index
    %722 = vector.load %arg8[%c0_499, %c0_500, %c0_501, %c0_502] : memref<1x3x9x9xf32, #tpu.memory_space<vmem>>, vector<1x1x9x9xf32>
    %723 = vector.shape_cast %722 : vector<1x1x9x9xf32> to vector<9x9xf32>
    %724 = arith.index_cast %659 : i32 to index
    %c0_503 = arith.constant 0 : index
    %725 = memref.load %arg3[%724, %c0_503] : memref<16x3xf32, #tpu.memory_space<smem>>
    %726 = vector.broadcast %725 : f32 to vector<9x9xf32>
    %727 = arith.mulf %723, %726 : vector<9x9xf32>
    %c0_504 = arith.constant 0 : index
    %c1_505 = arith.constant 1 : index
    %c0_506 = arith.constant 0 : index
    %c0_507 = arith.constant 0 : index
    %728 = vector.load %arg8[%c0_504, %c1_505, %c0_506, %c0_507] : memref<1x3x9x9xf32, #tpu.memory_space<vmem>>, vector<1x1x9x9xf32>
    %729 = vector.shape_cast %728 : vector<1x1x9x9xf32> to vector<9x9xf32>
    %730 = arith.index_cast %659 : i32 to index
    %c1_508 = arith.constant 1 : index
    %731 = memref.load %arg3[%730, %c1_508] : memref<16x3xf32, #tpu.memory_space<smem>>
    %732 = vector.broadcast %731 : f32 to vector<9x9xf32>
    %733 = arith.mulf %729, %732 : vector<9x9xf32>
    %734 = arith.addf %727, %733 : vector<9x9xf32>
    %c0_509 = arith.constant 0 : index
    %c2_510 = arith.constant 2 : index
    %c0_511 = arith.constant 0 : index
    %c0_512 = arith.constant 0 : index
    %735 = vector.load %arg8[%c0_509, %c2_510, %c0_511, %c0_512] : memref<1x3x9x9xf32, #tpu.memory_space<vmem>>, vector<1x1x9x9xf32>
    %736 = vector.shape_cast %735 : vector<1x1x9x9xf32> to vector<9x9xf32>
    %737 = arith.index_cast %659 : i32 to index
    %c2_513 = arith.constant 2 : index
    %738 = memref.load %arg3[%737, %c2_513] : memref<16x3xf32, #tpu.memory_space<smem>>
    %739 = vector.broadcast %738 : f32 to vector<9x9xf32>
    %740 = arith.mulf %736, %739 : vector<9x9xf32>
    %741 = arith.addf %734, %740 : vector<9x9xf32>
    %742 = arith.maximumf %721, %741 : vector<9x9xf32>
    %743 = arith.index_cast %659 : i32 to index
    %744 = memref.load %arg4[%743] : memref<16xf32, #tpu.memory_space<smem>>
    %745 = vector.broadcast %744 : f32 to vector<9x9xf32>
    %746 = arith.addf %742, %745 : vector<9x9xf32>
    %cst_514 = arith.constant 0.000000e+00 : f32
    %747 = vector.broadcast %cst_514 : f32 to vector<9x9xf32>
    %748 = arith.maximumf %746, %747 : vector<9x9xf32>
    %c0_515 = arith.constant 0 : index
    %c7 = arith.constant 7 : index
    %c0_516 = arith.constant 0 : index
    %c0_517 = arith.constant 0 : index
    %749 = vector.load %arg9[%c0_515, %c7, %c0_516, %c0_517] : memref<1x8x9x9xf32, #tpu.memory_space<vmem>>, vector<1x1x9x9xf32>
    %750 = vector.shape_cast %749 : vector<1x1x9x9xf32> to vector<9x9xf32>
    %751 = vector.shape_cast %748 : vector<9x9xf32> to vector<1x1x9x9xf32>
    tpu.vector_store %arg9[%c0_515, %c7, %c0_516, %c0_517], %751 {strides = array<i32>} : memref<1x8x9x9xf32, #tpu.memory_space<vmem>>, vector<1x1x9x9xf32>,
    return
  }
  func.func @transform_0(%arg0: i32, %arg1: i32, %arg2: i32) -> (i32, i32) {
    %c0_i32 = arith.constant 0 : i32
    %c0_i32_0 = arith.constant 0 : i32
    %c0_i32_1 = arith.constant 0 : i32
    return %c0_i32, %c0_i32_0 : i32, i32
  }
  func.func @transform_1(%arg0: i32, %arg1: i32, %arg2: i32) -> i32 {
    %c0_i32 = arith.constant 0 : i32
    %c0_i32_0 = arith.constant 0 : i32
    return %c0_i32 : i32
  }
  func.func @transform_2(%arg0: i32, %arg1: i32, %arg2: i32) -> (i32, i32, i32, i32) {
    %c0_i32 = arith.constant 0 : i32
    %c0_i32_0 = arith.constant 0 : i32
    %c0_i32_1 = arith.constant 0 : i32
    return %arg0, %c0_i32, %arg1, %c0_i32_0 : i32, i32, i32, i32
  }
  func.func @transform_3(%arg0: i32, %arg1: i32, %arg2: i32) -> (i32, i32, i32, i32) {
    %c0_i32 = arith.constant 0 : i32
    %c0_i32_0 = arith.constant 0 : i32
    %c0_i32_1 = arith.constant 0 : i32
    return %arg0, %c0_i32, %arg1, %c0_i32_0 : i32, i32, i32, i32
  }
  func.func @transform_4(%arg0: i32, %arg1: i32, %arg2: i32) -> (i32, i32, i32, i32) {
    %c0_i32 = arith.constant 0 : i32
    %c0_i32_0 = arith.constant 0 : i32
    %c0_i32_1 = arith.constant 0 : i32
    return %arg0, %c0_i32, %arg1, %c0_i32_0 : i32, i32, i32, i32
  }
  func.func @transform_5(%arg0: i32, %arg1: i32, %arg2: i32) -> (i32, i32, i32, i32) {
    %c0_i32 = arith.constant 0 : i32
    %c0_i32_0 = arith.constant 0 : i32
    %c0_i32_1 = arith.constant 0 : i32
    return %arg0, %c0_i32, %arg1, %c0_i32_0 : i32, i32, i32, i32
  }
  func.func @transform_6(%arg0: i32, %arg1: i32, %arg2: i32) -> (i32, i32, i32, i32) {
    %c0_i32 = arith.constant 0 : i32
    %c0_i32_0 = arith.constant 0 : i32
    return %arg0, %arg2, %arg1, %c0_i32 : i32, i32, i32, i32
  }
}

</mosaic_0001>

<llo_original>
// kernel: model_forward.2
$region0: #{model_forward.2}
  #allocation0 [shape = 'u32[]', space=smem, size = 0x4, offset = 0x4, fixed_abs, tag = 'smem constant byte address 0x4 - core index']
  #allocation1 [shape = 'u32[144,128]{1,0:T(1,128)}', space=vmem, size = 0x12000, scoped, tag = 'internal scratch']
  %s0 = inlined_call_operand.vmem [shape: f32[2,3,256], index: 0, kind: input, shape index: {}]
  %s1 = inlined_call_operand.vmem [shape: f32[3,4], index: 1, kind: output, shape index: {}]
  %s2 = sld [smem:[#allocation0]]
  $region41: #{model_forward.2} parent=0
    _
  %s4 = ssub.s32 1, %s2
  %s5 = scalar_select 0, %s4, %s2
  loop: start=0, step=1, limit=4
  $region2: #{model_forward.2} parent=0 // loop_pre_header
    _
  $region3: #{model_forward.2} parent=0 // loop_header
    %s7 = sphi 0, %s11
    %p8 = scmp.ge.s32.totalorder %s7, 4
    %s14 = sphi 0, %s26
    %s15 = sphi 0, %s22
    %s16 = sphi 0, %s14
    %s17 = sphi 0, %s15
    %s18 = sphi 0, %s16
    %s19 = sphi 0, %s17
    %s31 = sphi 0, %s33
    %s34 = sphi 0, %s31
    %s35 = sphi 0, %s34
    %s51 = sphi 0, %s35
    %s55 = sphi 0, %s55
    %s57 = sphi 0, %s55
    %s58 = sphi 0, %s57
    %s72 = sphi 0, %s58
  $region4: #{model_forward.2} parent=0 // loop_header_branch
    %10 = sbr.rel (%p8) target = $region8
  $region5: #{model_forward.2} parent=0 // loop_body
    %s12 = ssub.s32 %s7, 1
    %s13 = ssub.s32 %s7, 2
    %s20 = sadd.s32 1, %s15
    %p21 = scmp.ge.s32.totalorder %s20, 1
    %s22 = scalar_select %p21, 0, %s20
    %s23 = sadd.s32 1, %s14
    %s24 = scalar_select %p21, %s23, %s14
    %p25 = scmp.ge.s32.totalorder %s24, 2
    %s26 = scalar_select %p25, 0, %s24
    %s27 = ssub.s32 %s14, %s26
    %s28 = ssub.s32 %s15, %s22
    %s29 = sor.u32 %s27, %s28
    %p30 = scmp.eq.s32.totalorder %s29, 0
    %s32 = sadd.s32 %s31, 1
    %s33 = scalar_select %p30, %s31, %s32
    %p36 = pneg %p30
    %p37 = scmp.eq.s32.totalorder %s7, 1
    %p38 = por %p36, %p37
    %p39 = scmp.ne.s32.totalorder %s31, %s34
    %p40 = scmp.eq.s32.totalorder %s7, 0
    %p41 = por %p39, %p40
    %p42 = scmp.ne.s32.totalorder %s31, %s34
    %p43 = scmp.eq.s32.totalorder %s12, 1
    %p44 = por %p42, %p43
    %p45 = scmp.ne.s32.totalorder %s34, %s35
    %p46 = scmp.eq.s32.totalorder %s12, 0
    %p47 = por %p45, %p46
    %p48 = scmp.ne.s32.totalorder %s34, %s35
    %p49 = scmp.eq.s32.totalorder %s13, 1
    %p50 = por %p48, %p49
    %p52 = scmp.ne.s32.totalorder %s35, %s51
    %p53 = scmp.eq.s32.totalorder %s13, 0
    %p54 = por %p52, %p53
    %s56 = sadd.s32 %s55, 1
    %p59 = scmp.eq.s32.totalorder %s7, 1
    %p60 = scmp.ne.s32.totalorder %s55, %s57
    %p61 = scmp.eq.s32.totalorder %s7, 0
    %p62 = por %p60, %p61
    %p63 = scmp.ne.s32.totalorder %s55, %s57
    %p64 = scmp.eq.s32.totalorder %s12, 1
    %p65 = por %p63, %p64
    %p66 = scmp.ne.s32.totalorder %s57, %s58
    %p67 = scmp.eq.s32.totalorder %s12, 0
    %p68 = por %p66, %p67
    %p69 = scmp.ne.s32.totalorder %s57, %s58
    %p70 = scmp.eq.s32.totalorder %s13, 1
    %p71 = por %p69, %p70
    %p73 = scmp.ne.s32.totalorder %s58, %s72
    %p74 = scmp.eq.s32.totalorder %s13, 0
    %p75 = por %p73, %p74
    %p76 = scmp.le.s32.totalorder 1, %s7
    %p77 = scmp.lt.s32.totalorder %s7, 3
    %p78 = pnand %p76, %p77
    %p79 = pneg %p78
    // Predicated region
    $region9: #{model_forward.2} parent=5 // pred_check
      _
    $region10: #{model_forward.2} parent=5 // pred_check_branch
      %81 = sbr.rel (%p78) target = $region12
    $region11: #{model_forward.2} parent=5 // pred_region
      %s82 = ssub.s32 %s7, 1
    $region12: #{model_forward.2} parent=5 // pred_fallthru
      _
    %p83 = scmp.lt.s32.totalorder %s7, 2
    // Predicated region
    $region13: #{model_forward.2} parent=5 // pred_check
      %p84 = pneg %p83
    $region14: #{model_forward.2} parent=5 // pred_check_branch
      %86 = sbr.rel (%p84) target = $region16
    $region15: #{model_forward.2} parent=5 // pred_region
      // Predicated region
      $region17: #{model_forward.2} parent=15 // pred_check
        %p87 = pneg %p41
      $region18: #{model_forward.2} parent=15 // pred_check_branch
        %89 = sbr.rel (%p87) target = $region20
      $region19: #{model_forward.2} parent=15 // pred_region
        %s90 = smul.u32 2, %s15
        %p91 = scmp.lt.s32.totalorder %s14, 1
        %s92 = scalar_select %p91, %s14, 1
        %p93 = scmp.lt.s32.totalorder %s90, 1
        %s94 = scalar_select %p93, %s90, 1
        %s95 = smul.addr %s92, 2
        %s96 = sadd.s32 %s94, %s95
        %s97 = smul.addr %s96, 4
        %s98 = scalar_lea.vmem %s0, %s97
        %s99 = smul.u32 2, %s15
      $region20: #{model_forward.2} parent=15 // pred_fallthru
        _
    $region16: #{model_forward.2} parent=5 // pred_fallthru
      _
    %p100 = scmp.le.s32.totalorder 1, %s7
    %p101 = scmp.lt.s32.totalorder %s7, 3
    %p102 = pnand %p100, %p101
    %p103 = pneg %p102
    // Predicated region
    $region21: #{model_forward.2} parent=5 // pred_check
      _
    $region22: #{model_forward.2} parent=5 // pred_check_branch
      %105 = sbr.rel (%p102) target = $region24
    $region23: #{model_forward.2} parent=5 // pred_region
      %s106 = ssub.s32 %s7, 1
      %s107 = smul.u32 2, %s17
      %p108 = scmp.lt.s32.totalorder %s16, 1
      %s109 = scalar_select %p108, %s16, 1
      %p110 = scmp.lt.s32.totalorder %s107, 1
      %s111 = scalar_select %p110, %s107, 1
      %s112 = smul.addr %s109, 2
      %s113 = sadd.s32 %s111, %s112
      %s114 = smul.addr %s113, 4
      %s115 = scalar_lea.vmem %s0, %s114
      %p116 = pneg %p47
      %p117 = pneg %p44
      %p118 = pneg %p68
      %p119 = pneg %p65
      %s120 = smul.u32 2, %s17
      %p121 = scmp.lt.s32.totalorder %s16, 1
      %s122 = scalar_select %p121, %s16, 1
      %p123 = scmp.lt.s32.totalorder %s120, 1
      %s124 = scalar_select %p123, %s120, 1
      %s125 = smul.addr %s122, 2
      %s126 = sadd.s32 %s124, %s125
      %s127 = smul.addr %s126, 4
      %s128 = scalar_lea.vmem %s0, %s127
      %s129 = smul.u32 2, %s17
      %p130 = scmp.eq.s32.totalorder %s16, 0
      %p131 = scmp.eq.s32.totalorder %s17, 0
      %p132 = pnand %p130, %p131
      %p133 = pneg %p132
      // Predicated region
      $region25: #{model_forward.2} parent=23 // pred_check
        _
      $region26: #{model_forward.2} parent=23 // pred_check_branch
        %135 = sbr.rel (%p132) target = $region28
      $region27: #{model_forward.2} parent=23 // pred_region
        %vm136 = vcmask 26624
        %137 = vst.msk [vmem:[%s1] sm:$0x7] %vm136, 0.0
      $region28: #{model_forward.2} parent=23 // pred_fallthru
        _
      %v138 = vld [vmem:[%s128] sm:$0x77]
      %v140 = vlaneseq
      %v141 = vshrl.u32 %v140, 7
      %v142 = vsub.s32 0, %v141
      %v143 = vrot.slane %v138, %v142
      %v144 = vlaneseq
      %v145 = vshrl.u32 %v144, 7
      %v146 = vsub.s32 4, %v145
      %v147 = vrot.slane %v138, %v146
      %v150 = vlaneseq
      %v151 = vshrl.u32 %v150, 7
      %v152 = vsub.s32 0, %v151
      %v153 = vrot.slane %v143, %v152
      %v154 = vlaneseq
      %v155 = vshrl.u32 %v154, 7
      %v156 = vsub.s32 0, %v155
      %v157 = vrot.slane %v147, %v156
      %v160 = vcombine.low %v153, %v157
      %v162 = vmul.f32 %v138, %v160
      %v164 = vcombine.high %v162, %v162
      %vm166 = vcmask 1042432
      %v167 = vsel %vm166, %v162, 0.0
      %v168 = vsel %vm166, %v164, 0.0
      %v169 = vadd.f32 %v167, %v168
      %170 = vadd.xlane.f32.xlu0 %v169
      %v171 = vpop.xlane.xlu0 %170
      %v172 = vlaneseq
      %v173 = vshrl.u32 %v172, 7
      %v174 = vsub.s32 1, %v173
      %v175 = vrot.slane %v138, %v174
      %v176 = vlaneseq
      %v177 = vshrl.u32 %v176, 7
      %v178 = vsub.s32 5, %v177
      %v179 = vrot.slane %v138, %v178
      %v182 = vlaneseq
      %v183 = vshrl.u32 %v182, 7
      %v184 = vsub.s32 1, %v183
      %v185 = vrot.slane %v175, %v184
      %v186 = vlaneseq
      %v187 = vshrl.u32 %v186, 7
      %v188 = vsub.s32 1, %v187
      %v189 = vrot.slane %v179, %v188
      %v192 = vcombine.low %v185, %v189
      %v194 = vmul.f32 %v138, %v192
      %v196 = vcombine.high %v194, %v194
      %v198 = vsel %vm166, %v194, 0.0
      %v199 = vsel %vm166, %v196, 0.0
      %v200 = vadd.f32 %v198, %v199
      %201 = vadd.xlane.f32.xlu0 %v200
      %v202 = vpop.xlane.xlu0 %201
      %v203 = vlaneseq
      %v204 = vshrl.u32 %v203, 7
      %v205 = vsub.s32 2, %v204
      %v206 = vrot.slane %v138, %v205
      %v207 = vlaneseq
      %v208 = vshrl.u32 %v207, 7
      %v209 = vsub.s32 6, %v208
      %v210 = vrot.slane %v138, %v209
      %v213 = vlaneseq
      %v214 = vshrl.u32 %v213, 7
      %v215 = vsub.s32 2, %v214
      %v216 = vrot.slane %v206, %v215
      %v217 = vlaneseq
      %v218 = vshrl.u32 %v217, 7
      %v219 = vsub.s32 2, %v218
      %v220 = vrot.slane %v210, %v219
      %v223 = vcombine.low %v216, %v220
      %v225 = vmul.f32 %v138, %v223
      %v227 = vcombine.high %v225, %v225
      %v229 = vsel %vm166, %v225, 0.0
      %v230 = vsel %vm166, %v227, 0.0
      %v231 = vadd.f32 %v229, %v230
      %232 = vadd.xlane.f32.xlu0 %v231
      %v233 = vpop.xlane.xlu0 %232
      %v234 = vcombine.high %v138, %v138
      %v236 = vsel %vm166, %v138, 0.0
      %v237 = vsel %vm166, %v234, 0.0
      %v238 = vadd.f32 %v236, %v237
      %239 = vadd.xlane.f32.xlu0 %v238
      %v240 = vpop.xlane.xlu0 %239
      %v241 = vld [vmem:[%s1] sm:$0x7]
      %vm242 = vcmask 7168
      %v243 = vsel %vm242, %v171, %v202
      %vm244 = vcmask 15360
      %v245 = vsel %vm244, %v243, %v233
      %vm246 = vcmask 23552
      %v247 = vsel %vm246, %v245, %v240
      %v248 = vadd.f32 %v241, %v247
      %vm249 = vcmask 26624
      %250 = vst.msk [vmem:[%s1] sm:$0x7] %vm249, %v248
      // Predicated region
      $region29: #{model_forward.2} parent=23 // pred_check
        %p251 = pneg %p65
      $region30: #{model_forward.2} parent=23 // pred_check_branch
        %253 = sbr.rel (%p251) target = $region32
      $region31: #{model_forward.2} parent=23 // pred_region
        _
      $region32: #{model_forward.2} parent=23 // pred_fallthru
        _
      // Predicated region
      $region33: #{model_forward.2} parent=23 // pred_check
        %p254 = pneg %p65
      $region34: #{model_forward.2} parent=23 // pred_check_branch
        %256 = sbr.rel (%p254) target = $region36
      $region35: #{model_forward.2} parent=23 // pred_region
        _
      $region36: #{model_forward.2} parent=23 // pred_fallthru
        _
    $region24: #{model_forward.2} parent=5 // pred_fallthru
      _
    %p257 = scmp.le.s32.totalorder 2, %s7
    // Predicated region
    $region37: #{model_forward.2} parent=5 // pred_check
      %p258 = pneg %p257
    $region38: #{model_forward.2} parent=5 // pred_check_branch
      %260 = sbr.rel (%p258) target = $region40
    $region39: #{model_forward.2} parent=5 // pred_region
      %s261 = ssub.s32 %s7, 2
    $region40: #{model_forward.2} parent=5 // pred_fallthru
      _
  $region6: #{model_forward.2} parent=0 // loop_footer
    %s11 = sadd.s32 1, %s7
  $region7: #{model_forward.2} parent=0 // loop_footer_branch
    %6 = sbr.rel target = $region3
  $region8: #{model_forward.2} parent=0 // loop_exit
    _

// kernel: model_forward.3
$region0: #{model_forward.3}
  #allocation0 [shape = 'u32[]', space=smem, size = 0x4, offset = 0x4, fixed_abs, tag = 'smem constant byte address 0x4 - core index']
  #allocation1 [shape = 'u32[144,128]{1,0:T(1,128)}', space=vmem, size = 0x12000, scoped, tag = 'internal scratch']
  %s0 = inlined_call_operand.vmem [shape: f32[16,3], index: 0, kind: input, shape index: {}]
  %s1 = inlined_call_operand.vmem [shape: f32[16], index: 1, kind: input, shape index: {}]
  %s2 = inlined_call_operand.vmem [shape: f32[2,3,9,9], index: 2, kind: input, shape index: {}]
  %s3 = inlined_call_operand.vmem [shape: f32[2,3,9,9], index: 3, kind: input, shape index: {}]
  %s4 = inlined_call_operand.vmem [shape: f32[2,3,9,9], index: 4, kind: input, shape index: {}]
  %s5 = inlined_call_operand.vmem [shape: f32[2,3,9,9], index: 5, kind: input, shape index: {}]
  %s6 = inlined_call_operand.vmem [shape: f32[2,16,9,9], index: 6, kind: output, shape index: {}]
  %s7 = sld [smem:[#allocation0]]
  $region65: #{model_forward.3} parent=0
    _
  %s9 = ssub.s32 1, %s7
  %s10 = scalar_select 0, %s9, %s7
  $region1: #{model_forward.3} parent=0
    #allocation2 [shape = 'u8[8192]{0}', space=smem, size = 0x2000, scoped, tag = 'input window, operand 0, single buffered']
    #allocation3 [shape = 's32[2]{0}', space=sflag, size = 0x8, scoped, tag = 'scoped memory for model_forward.3']
    #allocation4 [shape = 'u8[512]{0}', space=smem, size = 0x200, scoped, tag = 'input window, operand 1, single buffered']
    #allocation5 [shape = 's32[1]{0}', space=sflag, size = 0x4, scoped, tag = 'scoped memory for model_forward.3']
    %11 = vsyncpa [#allocation3], 0
    %12 = vsyncpa [#allocation5], 0
    loop: start=0, step=1, limit=6
    $region2: #{model_forward.3} parent=1 // loop_pre_header
      _
    $region3: #{model_forward.3} parent=1 // loop_header
      %s14 = sphi 0, %s18
      %p15 = scmp.ge.s32.totalorder %s14, 6
      %s21 = sphi 0, %s40
      %s22 = sphi 0, %s36
      %s23 = sphi 0, %s32
      %s24 = sphi 0, %s21
      %s25 = sphi 0, %s22
      %s26 = sphi 0, %s23
      %s27 = sphi 0, %s24
      %s28 = sphi 0, %s25
      %s29 = sphi 0, %s26
      %s41 = sphi 0, %s41
      %s43 = sphi 0, %s41
      %s44 = sphi 0, %s43
      %s58 = sphi 0, %s44
      %s62 = sphi 0, %s62
      %s64 = sphi 0, %s62
      %s65 = sphi 0, %s64
      %s79 = sphi 0, %s65
      %s87 = sphi 0, %s89
      %s90 = sphi 0, %s87
      %s91 = sphi 0, %s90
      %s107 = sphi 0, %s91
      %s115 = sphi 0, %s117
      %s118 = sphi 0, %s115
      %s119 = sphi 0, %s118
      %s135 = sphi 0, %s119
      %s143 = sphi 0, %s145
      %s146 = sphi 0, %s143
      %s147 = sphi 0, %s146
      %s163 = sphi 0, %s147
      %s171 = sphi 0, %s173
      %s174 = sphi 0, %s171
      %s175 = sphi 0, %s174
      %s191 = sphi 0, %s175
      %s201 = sphi 0, %s203
      %s204 = sphi 0, %s201
      %s205 = sphi 0, %s204
      %s221 = sphi 0, %s205
    $region4: #{model_forward.3} parent=1 // loop_header_branch
      %17 = sbr.rel (%p15) target = $region8
    $region5: #{model_forward.3} parent=1 // loop_body
      %s19 = ssub.s32 %s14, 1
      %s20 = ssub.s32 %s14, 2
      %s30 = sadd.s32 1, %s23
      %p31 = scmp.ge.s32.totalorder %s30, 2
      %s32 = scalar_select %p31, 0, %s30
      %s33 = sadd.s32 1, %s22
      %s34 = scalar_select %p31, %s33, %s22
      %p35 = scmp.ge.s32.totalorder %s34, 1
      %s36 = scalar_select %p35, 0, %s34
      %s37 = sadd.s32 1, %s21
      %s38 = scalar_select %p35, %s37, %s21
      %p39 = scmp.ge.s32.totalorder %s38, 2
      %s40 = scalar_select %p39, 0, %s38
      %s42 = sadd.s32 %s41, 1
      %p45 = scmp.eq.s32.totalorder %s14, 3
      %p46 = scmp.ne.s32.totalorder %s41, %s43
      %p47 = scmp.eq.s32.totalorder %s14, 0
      %p48 = por %p46, %p47
      %p49 = scmp.ne.s32.totalorder %s41, %s43
      %p50 = scmp.eq.s32.totalorder %s19, 3
      %p51 = por %p49, %p50
      %p52 = scmp.ne.s32.totalorder %s43, %s44
      %p53 = scmp.eq.s32.totalorder %s19, 0
      %p54 = por %p52, %p53
      %p55 = scmp.ne.s32.totalorder %s43, %s44
      %p56 = scmp.eq.s32.totalorder %s20, 3
      %p57 = por %p55, %p56
      %p59 = scmp.ne.s32.totalorder %s44, %s58
      %p60 = scmp.eq.s32.totalorder %s20, 0
      %p61 = por %p59, %p60
      %s63 = sadd.s32 %s62, 1
      %p66 = scmp.eq.s32.totalorder %s14, 3
      %p67 = scmp.ne.s32.totalorder %s62, %s64
      %p68 = scmp.eq.s32.totalorder %s14, 0
      %p69 = por %p67, %p68
      %p70 = scmp.ne.s32.totalorder %s62, %s64
      %p71 = scmp.eq.s32.totalorder %s19, 3
      %p72 = por %p70, %p71
      %p73 = scmp.ne.s32.totalorder %s64, %s65
      %p74 = scmp.eq.s32.totalorder %s19, 0
      %p75 = por %p73, %p74
      %p76 = scmp.ne.s32.totalorder %s64, %s65
      %p77 = scmp.eq.s32.totalorder %s20, 3
      %p78 = por %p76, %p77
      %p80 = scmp.ne.s32.totalorder %s65, %s79
      %p81 = scmp.eq.s32.totalorder %s20, 0
      %p82 = por %p80, %p81
      %s83 = ssub.s32 %s21, %s40
      %s84 = ssub.s32 %s22, %s36
      %s85 = sor.u32 %s83, %s84
      %p86 = scmp.eq.s32.totalorder %s85, 0
      %s88 = sadd.s32 %s87, 1
      %s89 = scalar_select %p86, %s87, %s88
      %p92 = pneg %p86
      %p93 = scmp.eq.s32.totalorder %s14, 3
      %p94 = por %p92, %p93
      %p95 = scmp.ne.s32.totalorder %s87, %s90
      %p96 = scmp.eq.s32.totalorder %s14, 0
      %p97 = por %p95, %p96
      %p98 = scmp.ne.s32.totalorder %s87, %s90
      %p99 = scmp.eq.s32.totalorder %s19, 3
      %p100 = por %p98, %p99
      %p101 = scmp.ne.s32.totalorder %s90, %s91
      %p102 = scmp.eq.s32.totalorder %s19, 0
      %p103 = por %p101, %p102
      %p104 = scmp.ne.s32.totalorder %s90, %s91
      %p105 = scmp.eq.s32.totalorder %s20, 3
      %p106 = por %p104, %p105
      %p108 = scmp.ne.s32.totalorder %s91, %s107
      %p109 = scmp.eq.s32.totalorder %s20, 0
      %p110 = por %p108, %p109
      %s111 = ssub.s32 %s21, %s40
      %s112 = ssub.s32 %s22, %s36
      %s113 = sor.u32 %s111, %s112
      %p114 = scmp.eq.s32.totalorder %s113, 0
      %s116 = sadd.s32 %s115, 1
      %s117 = scalar_select %p114, %s115, %s116
      %p120 = pneg %p114
      %p121 = scmp.eq.s32.totalorder %s14, 3
      %p122 = por %p120, %p121
      %p123 = scmp.ne.s32.totalorder %s115, %s118
      %p124 = scmp.eq.s32.totalorder %s14, 0
      %p125 = por %p123, %p124
      %p126 = scmp.ne.s32.totalorder %s115, %s118
      %p127 = scmp.eq.s32.totalorder %s19, 3
      %p128 = por %p126, %p127
      %p129 = scmp.ne.s32.totalorder %s118, %s119
      %p130 = scmp.eq.s32.totalorder %s19, 0
      %p131 = por %p129, %p130
      %p132 = scmp.ne.s32.totalorder %s118, %s119
      %p133 = scmp.eq.s32.totalorder %s20, 3
      %p134 = por %p132, %p133
      %p136 = scmp.ne.s32.totalorder %s119, %s135
      %p137 = scmp.eq.s32.totalorder %s20, 0
      %p138 = por %p136, %p137
      %s139 = ssub.s32 %s21, %s40
      %s140 = ssub.s32 %s22, %s36
      %s141 = sor.u32 %s139, %s140
      %p142 = scmp.eq.s32.totalorder %s141, 0
      %s144 = sadd.s32 %s143, 1
      %s145 = scalar_select %p142, %s143, %s144
      %p148 = pneg %p142
      %p149 = scmp.eq.s32.totalorder %s14, 3
      %p150 = por %p148, %p149
      %p151 = scmp.ne.s32.totalorder %s143, %s146
      %p152 = scmp.eq.s32.totalorder %s14, 0
      %p153 = por %p151, %p152
      %p154 = scmp.ne.s32.totalorder %s143, %s146
      %p155 = scmp.eq.s32.totalorder %s19, 3
      %p156 = por %p154, %p155
      %p157 = scmp.ne.s32.totalorder %s146, %s147
      %p158 = scmp.eq.s32.totalorder %s19, 0
      %p159 = por %p157, %p158
      %p160 = scmp.ne.s32.totalorder %s146, %s147
      %p161 = scmp.eq.s32.totalorder %s20, 3
      %p162 = por %p160, %p161
      %p164 = scmp.ne.s32.totalorder %s147, %s163
      %p165 = scmp.eq.s32.totalorder %s20, 0
      %p166 = por %p164, %p165
      %s167 = ssub.s32 %s21, %s40
      %s168 = ssub.s32 %s22, %s36
      %s169 = sor.u32 %s167, %s168
      %p170 = scmp.eq.s32.totalorder %s169, 0
      %s172 = sadd.s32 %s171, 1
      %s173 = scalar_select %p170, %s171, %s172
      %p176 = pneg %p170
      %p177 = scmp.eq.s32.totalorder %s14, 3
      %p178 = por %p176, %p177
      %p179 = scmp.ne.s32.totalorder %s171, %s174
      %p180 = scmp.eq.s32.totalorder %s14, 0
      %p181 = por %p179, %p180
      %p182 = scmp.ne.s32.totalorder %s171, %s174
      %p183 = scmp.eq.s32.totalorder %s19, 3
      %p184 = por %p182, %p183
      %p185 = scmp.ne.s32.totalorder %s174, %s175
      %p186 = scmp.eq.s32.totalorder %s19, 0
      %p187 = por %p185, %p186
      %p188 = scmp.ne.s32.totalorder %s174, %s175
      %p189 = scmp.eq.s32.totalorder %s20, 3
      %p190 = por %p188, %p189
      %p192 = scmp.ne.s32.totalorder %s175, %s191
      %p193 = scmp.eq.s32.totalorder %s20, 0
      %p194 = por %p192, %p193
      %s195 = ssub.s32 %s21, %s40
      %s196 = ssub.s32 %s23, %s32
      %s197 = sor.u32 %s195, %s196
      %s198 = ssub.s32 %s22, %s36
      %s199 = sor.u32 %s197, %s198
      %p200 = scmp.eq.s32.totalorder %s199, 0
      %s202 = sadd.s32 %s201, 1
      %s203 = scalar_select %p200, %s201, %s202
      %p206 = pneg %p200
      %p207 = scmp.eq.s32.totalorder %s14, 3
      %p208 = por %p206, %p207
      %p209 = scmp.ne.s32.totalorder %s201, %s204
      %p210 = scmp.eq.s32.totalorder %s14, 0
      %p211 = por %p209, %p210
      %p212 = scmp.ne.s32.totalorder %s201, %s204
      %p213 = scmp.eq.s32.totalorder %s19, 3
      %p214 = por %p212, %p213
      %p215 = scmp.ne.s32.totalorder %s204, %s205
      %p216 = scmp.eq.s32.totalorder %s19, 0
      %p217 = por %p215, %p216
      %p218 = scmp.ne.s32.totalorder %s204, %s205
      %p219 = scmp.eq.s32.totalorder %s20, 3
      %p220 = por %p218, %p219
      %p222 = scmp.ne.s32.totalorder %s205, %s221
      %p223 = scmp.eq.s32.totalorder %s20, 0
      %p224 = por %p222, %p223
      %p225 = scmp.le.s32.totalorder 1, %s14
      %p226 = scmp.lt.s32.totalorder %s14, 5
      %p227 = pnand %p225, %p226
      %p228 = pneg %p227
      // Predicated region
      $region9: #{model_forward.3} parent=5 // pred_check
        _
      $region10: #{model_forward.3} parent=5 // pred_check_branch
        %230 = sbr.rel (%p227) target = $region12
      $region11: #{model_forward.3} parent=5 // pred_region
        %s231 = ssub.s32 %s14, 1
        // Predicated region
        $region13: #{model_forward.3} parent=11 // pred_check
          %p232 = pneg %p54
        $region14: #{model_forward.3} parent=11 // pred_check_branch
          %234 = sbr.rel (%p232) target = $region16
        $region15: #{model_forward.3} parent=11 // pred_region
          %s236 = ssub.s32 256, 256
          %237 = vsyncadd [#allocation3], %s236
          %s238 = sshll.u32 %s0, 4
          %s239 = int_to_ptr.vmem [resolvable:$true] %s238
          %244 = dma.vmem_to_smem %s239, 256, [#allocation2], [#allocation3], 128, 128, 8
        $region16: #{model_forward.3} parent=11 // pred_fallthru
          _
        // Predicated region
        $region17: #{model_forward.3} parent=11 // pred_check
          %p245 = pneg %p75
        $region18: #{model_forward.3} parent=11 // pred_check_branch
          %247 = sbr.rel (%p245) target = $region20
        $region19: #{model_forward.3} parent=11 // pred_region
          %s249 = ssub.s32 16, 16
          %250 = vsyncadd [#allocation5], %s249
          %s252 = sshll.u32 %s1, 4
          %s253 = int_to_ptr.vmem [resolvable:$true] %s252
          %255 = dma.vmem_to_smem %s253, 16, [#allocation4], [#allocation5]
        $region20: #{model_forward.3} parent=11 // pred_fallthru
          _
      $region12: #{model_forward.3} parent=5 // pred_fallthru
        _
      %p256 = scmp.lt.s32.totalorder %s14, 4
      // Predicated region
      $region21: #{model_forward.3} parent=5 // pred_check
        %p257 = pneg %p256
      $region22: #{model_forward.3} parent=5 // pred_check_branch
        %259 = sbr.rel (%p257) target = $region24
      $region23: #{model_forward.3} parent=5 // pred_region
        // Predicated region
        $region25: #{model_forward.3} parent=23 // pred_check
          %p260 = pneg %p97
        $region26: #{model_forward.3} parent=23 // pred_check_branch
          %262 = sbr.rel (%p260) target = $region28
        $region27: #{model_forward.3} parent=23 // pred_region
          %s263 = smul.u32 2, %s22
          %p264 = scmp.lt.s32.totalorder %s21, 1
          %s265 = scalar_select %p264, %s21, 1
          %p266 = scmp.lt.s32.totalorder %s263, 1
          %s267 = scalar_select %p266, %s263, 1
          %s268 = smul.addr %s265, 6
          %s269 = sadd.s32 %s267, %s268
          %s270 = smul.addr %s269, 8
          %s271 = scalar_lea.vmem %s2, %s270
          %s272 = smul.u32 2, %s22
        $region28: #{model_forward.3} parent=23 // pred_fallthru
          _
        // Predicated region
        $region29: #{model_forward.3} parent=23 // pred_check
          %p273 = pneg %p125
        $region30: #{model_forward.3} parent=23 // pred_check_branch
          %275 = sbr.rel (%p273) target = $region32
        $region31: #{model_forward.3} parent=23 // pred_region
          %s276 = smul.u32 2, %s22
          %p277 = scmp.lt.s32.totalorder %s21, 1
          %s278 = scalar_select %p277, %s21, 1
          %p279 = scmp.lt.s32.totalorder %s276, 1
          %s280 = scalar_select %p279, %s276, 1
          %s281 = smul.addr %s278, 6
          %s282 = sadd.s32 %s280, %s281
          %s283 = smul.addr %s282, 8
          %s284 = scalar_lea.vmem %s3, %s283
          %s285 = smul.u32 2, %s22
        $region32: #{model_forward.3} parent=23 // pred_fallthru
          _
        // Predicated region
        $region33: #{model_forward.3} parent=23 // pred_check
          %p286 = pneg %p153
        $region34: #{model_forward.3} parent=23 // pred_check_branch
          %288 = sbr.rel (%p286) target = $region36
        $region35: #{model_forward.3} parent=23 // pred_region
          %s289 = smul.u32 2, %s22
          %p290 = scmp.lt.s32.totalorder %s21, 1
          %s291 = scalar_select %p290, %s21, 1
          %p292 = scmp.lt.s32.totalorder %s289, 1
          %s293 = scalar_select %p292, %s289, 1
          %s294 = smul.addr %s291, 6
          %s295 = sadd.s32 %s293, %s294
          %s296 = smul.addr %s295, 8
          %s297 = scalar_lea.vmem %s4, %s296
          %s298 = smul.u32 2, %s22
        $region36: #{model_forward.3} parent=23 // pred_fallthru
          _
        // Predicated region
        $region37: #{model_forward.3} parent=23 // pred_check
          %p299 = pneg %p181
        $region38: #{model_forward.3} parent=23 // pred_check_branch
          %301 = sbr.rel (%p299) target = $region40
        $region39: #{model_forward.3} parent=23 // pred_region
          %s302 = smul.u32 2, %s22
          %p303 = scmp.lt.s32.totalorder %s21, 1
          %s304 = scalar_select %p303, %s21, 1
          %p305 = scmp.lt.s32.totalorder %s302, 1
          %s306 = scalar_select %p305, %s302, 1
          %s307 = smul.addr %s304, 6
          %s308 = sadd.s32 %s306, %s307
          %s309 = smul.addr %s308, 8
          %s310 = scalar_lea.vmem %s5, %s309
          %s311 = smul.u32 2, %s22
        $region40: #{model_forward.3} parent=23 // pred_fallthru
          _
      $region24: #{model_forward.3} parent=5 // pred_fallthru
        _
      %p312 = scmp.le.s32.totalorder 1, %s14
      %p313 = scmp.lt.s32.totalorder %s14, 5
      %p314 = pnand %p312, %p313
      %p315 = pneg %p314
      // Predicated region
      $region41: #{model_forward.3} parent=5 // pred_check
        _
      $region42: #{model_forward.3} parent=5 // pred_check_branch
        %317 = sbr.rel (%p314) target = $region44
      $region43: #{model_forward.3} parent=5 // pred_region
        %s318 = ssub.s32 %s14, 1
        // Predicated region
        $region45: #{model_forward.3} parent=43 // pred_check
          %p319 = pneg %p54
        $region46: #{model_forward.3} parent=43 // pred_check_branch
          %321 = sbr.rel (%p319) target = $region48
        $region47: #{model_forward.3} parent=43 // pred_region
          %322 = dma.done [#allocation3], 256
        $region48: #{model_forward.3} parent=43 // pred_fallthru
          _
        // Predicated region
        $region49: #{model_forward.3} parent=43 // pred_check
          %p323 = pneg %p75
        $region50: #{model_forward.3} parent=43 // pred_check_branch
          %325 = sbr.rel (%p323) target = $region52
        $region51: #{model_forward.3} parent=43 // pred_region
          %326 = dma.done [#allocation5], 16
        $region52: #{model_forward.3} parent=43 // pred_fallthru
          _
        %327 = sfence
        %p328 = pneg %p54
        %p329 = pneg %p51
        %p330 = pneg %p75
        %p331 = pneg %p72
        %s332 = smul.u32 2, %s25
        %p333 = scmp.lt.s32.totalorder %s24, 1
        %s334 = scalar_select %p333, %s24, 1
        %p335 = scmp.lt.s32.totalorder %s332, 1
        %s336 = scalar_select %p335, %s332, 1
        %s337 = smul.addr %s334, 6
        %s338 = sadd.s32 %s336, %s337
        %s339 = smul.addr %s338, 8
        %s340 = scalar_lea.vmem %s2, %s339
        %p341 = pneg %p103
        %p342 = pneg %p100
        %s343 = smul.u32 2, %s25
        %p344 = scmp.lt.s32.totalorder %s24, 1
        %s345 = scalar_select %p344, %s24, 1
        %p346 = scmp.lt.s32.totalorder %s343, 1
        %s347 = scalar_select %p346, %s343, 1
        %s348 = smul.addr %s345, 6
        %s349 = sadd.s32 %s347, %s348
        %s350 = smul.addr %s349, 8
        %s351 = scalar_lea.vmem %s3, %s350
        %p352 = pneg %p131
        %p353 = pneg %p128
        %s354 = smul.u32 2, %s25
        %p355 = scmp.lt.s32.totalorder %s24, 1
        %s356 = scalar_select %p355, %s24, 1
        %p357 = scmp.lt.s32.totalorder %s354, 1
        %s358 = scalar_select %p357, %s354, 1
        %s359 = smul.addr %s356, 6
        %s360 = sadd.s32 %s358, %s359
        %s361 = smul.addr %s360, 8
        %s362 = scalar_lea.vmem %s4, %s361
        %p363 = pneg %p159
        %p364 = pneg %p156
        %s365 = smul.u32 2, %s25
        %p366 = scmp.lt.s32.totalorder %s24, 1
        %s367 = scalar_select %p366, %s24, 1
        %p368 = scmp.lt.s32.totalorder %s365, 1
        %s369 = scalar_select %p368, %s365, 1
        %s370 = smul.addr %s367, 6
        %s371 = sadd.s32 %s369, %s370
        %s372 = smul.addr %s371, 8
        %s373 = scalar_lea.vmem %s5, %s372
        %p374 = pneg %p187
        %p375 = pneg %p184
        %p376 = pneg %p217
        %p377 = pneg %p214
        %s378 = smul.u32 8, %s26
        %s379 = smul.u32 2, %s25
        %p380 = scmp.lt.s32.totalorder %s24, 1
        %s381 = scalar_select %p380, %s24, 1
        %p382 = scmp.lt.s32.totalorder %s378, 15
        %s383 = scalar_select %p382, %s378, 15
        %p384 = scmp.lt.s32.totalorder %s379, 1
        %s385 = scalar_select %p384, %s379, 1
        %s386 = smul.addr %s383, 2
        %s387 = sadd.s32 %s385, %s386
        %s388 = smul.addr %s381, 32
        %s389 = sadd.s32 %s387, %s388
        %s390 = smul.addr %s389, 8
        %s391 = scalar_lea.vmem %s6, %s390
        %s392 = smul.u32 2, %s25
        %p393 = scmp.lt.s32.totalorder %s24, 1
        %s394 = scalar_select %p393, %s24, 1
        %p395 = scmp.lt.s32.totalorder %s392, 1
        %s396 = scalar_select %p395, %s392, 1
        %s397 = smul.addr %s394, 6
        %s398 = sadd.s32 %s396, %s397
        %s399 = smul.addr %s398, 8
        %s400 = scalar_lea.vmem %s2, %s399
        %s401 = smul.u32 2, %s25
        %s402 = smul.u32 2, %s25
        %p403 = scmp.lt.s32.totalorder %s24, 1
        %s404 = scalar_select %p403, %s24, 1
        %p405 = scmp.lt.s32.totalorder %s402, 1
        %s406 = scalar_select %p405, %s402, 1
        %s407 = smul.addr %s404, 6
        %s408 = sadd.s32 %s406, %s407
        %s409 = smul.addr %s408, 8
        %s410 = scalar_lea.vmem %s3, %s409
        %s411 = smul.u32 2, %s25
        %s412 = smul.u32 2, %s25
        %p413 = scmp.lt.s32.totalorder %s24, 1
        %s414 = scalar_select %p413, %s24, 1
        %p415 = scmp.lt.s32.totalorder %s412, 1
        %s416 = scalar_select %p415, %s412, 1
        %s417 = smul.addr %s414, 6
        %s418 = sadd.s32 %s416, %s417
        %s419 = smul.addr %s418, 8
        %s420 = scalar_lea.vmem %s4, %s419
        %s421 = smul.u32 2, %s25
        %s422 = smul.u32 2, %s25
        %p423 = scmp.lt.s32.totalorder %s24, 1
        %s424 = scalar_select %p423, %s24, 1
        %p425 = scmp.lt.s32.totalorder %s422, 1
        %s426 = scalar_select %p425, %s422, 1
        %s427 = smul.addr %s424, 6
        %s428 = sadd.s32 %s426, %s427
        %s429 = smul.addr %s428, 8
        %s430 = scalar_lea.vmem %s5, %s429
        %s431 = smul.u32 2, %s25
        %s432 = smul.u32 8, %s26
        %s433 = smul.u32 2, %s25
        %p434 = scmp.lt.s32.totalorder %s24, 1
        %s435 = scalar_select %p434, %s24, 1
        %p436 = scmp.lt.s32.totalorder %s432, 15
        %s437 = scalar_select %p436, %s432, 15
        %p438 = scmp.lt.s32.totalorder %s433, 1
        %s439 = scalar_select %p438, %s433, 1
        %s440 = smul.addr %s437, 2
        %s441 = sadd.s32 %s439, %s440
        %s442 = smul.addr %s435, 32
        %s443 = sadd.s32 %s441, %s442
        %s444 = smul.addr %s443, 8
        %s445 = scalar_lea.vmem %s6, %s444
        %s446 = smul.u32 8, %s26
        %s447 = smul.u32 2, %s25
        %s448 = smul.u32 %s26, 8
        %v449 = vld [vmem:[%s400] sm:$0xff]
        %v450 = vld [vmem:[%s400 + $0x8] sm:$0x1]
        %s451 = smul.u32 %s448, 128
        %s452 = sld [smem:[#allocation2 + %s451]]
        %v453 = vstv %s452
        %v454 = vmul.f32 %v449, %v453
        %v455 = vmul.f32 %v450, %v453
        %s456 = scalar_lea.vmem %s400, 16
        %v457 = vld [vmem:[%s456] sm:$0xff]
        %v458 = vld [vmem:[%s456 + $0x8] sm:$0x1]
        %s459 = sadd.s32 %s451, 1
        %s460 = sld [smem:[#allocation2 + %s459]]
        %v461 = vstv %s460
        %v462 = vmul.f32 %v457, %v461
        %v463 = vmul.f32 %v458, %v461
        %v464 = vadd.f32 %v454, %v462
        %v465 = vadd.f32 %v455, %v463
        %s466 = scalar_lea.vmem %s400, 32
        %v467 = vld [vmem:[%s466] sm:$0xff]
        %v468 = vld [vmem:[%s466 + $0x8] sm:$0x1]
        %s469 = sadd.s32 %s451, 2
        %s470 = sld [smem:[#allocation2 + %s469]]
        %v471 = vstv %s470
        %v472 = vmul.f32 %v467, %v471
        %v473 = vmul.f32 %v468, %v471
        %v474 = vadd.f32 %v464, %v472
        %v475 = vadd.f32 %v465, %v473
        %v476 = vld [vmem:[%s410] sm:$0xff]
        %v477 = vld [vmem:[%s410 + $0x8] sm:$0x1]
        %v478 = vmul.f32 %v476, %v453
        %v479 = vmul.f32 %v477, %v453
        %s480 = scalar_lea.vmem %s410, 16
        %v481 = vld [vmem:[%s480] sm:$0xff]
        %v482 = vld [vmem:[%s480 + $0x8] sm:$0x1]
        %v483 = vmul.f32 %v481, %v461
        %v484 = vmul.f32 %v482, %v461
        %v485 = vadd.f32 %v478, %v483
        %v486 = vadd.f32 %v479, %v484
        %s487 = scalar_lea.vmem %s410, 32
        %v488 = vld [vmem:[%s487] sm:$0xff]
        %v489 = vld [vmem:[%s487 + $0x8] sm:$0x1]
        %v490 = vmul.f32 %v488, %v471
        %v491 = vmul.f32 %v489, %v471
        %v492 = vadd.f32 %v485, %v490
        %v493 = vadd.f32 %v486, %v491
        %v494 = vmax.f32 %v474, %v492
        %v495 = vmax.f32 %v475, %v493
        %v496 = vld [vmem:[%s420] sm:$0xff]
        %v497 = vld [vmem:[%s420 + $0x8] sm:$0x1]
        %v498 = vmul.f32 %v496, %v453
        %v499 = vmul.f32 %v497, %v453
        %s500 = scalar_lea.vmem %s420, 16
        %v501 = vld [vmem:[%s500] sm:$0xff]
        %v502 = vld [vmem:[%s500 + $0x8] sm:$0x1]
        %v503 = vmul.f32 %v501, %v461
        %v504 = vmul.f32 %v502, %v461
        %v505 = vadd.f32 %v498, %v503
        %v506 = vadd.f32 %v499, %v504
        %s507 = scalar_lea.vmem %s420, 32
        %v508 = vld [vmem:[%s507] sm:$0xff]
        %v509 = vld [vmem:[%s507 + $0x8] sm:$0x1]
        %v510 = vmul.f32 %v508, %v471
        %v511 = vmul.f32 %v509, %v471
        %v512 = vadd.f32 %v505, %v510
        %v513 = vadd.f32 %v506, %v511
        %v514 = vmax.f32 %v494, %v512
        %v515 = vmax.f32 %v495, %v513
        %v516 = vld [vmem:[%s430] sm:$0xff]
        %v517 = vld [vmem:[%s430 + $0x8] sm:$0x1]
        %v518 = vmul.f32 %v516, %v453
        %v519 = vmul.f32 %v517, %v453
        %s520 = scalar_lea.vmem %s430, 16
        %v521 = vld [vmem:[%s520] sm:$0xff]
        %v522 = vld [vmem:[%s520 + $0x8] sm:$0x1]
        %v523 = vmul.f32 %v521, %v461
        %v524 = vmul.f32 %v522, %v461
        %v525 = vadd.f32 %v518, %v523
        %v526 = vadd.f32 %v519, %v524
        %s527 = scalar_lea.vmem %s430, 32
        %v528 = vld [vmem:[%s527] sm:$0xff]
        %v529 = vld [vmem:[%s527 + $0x8] sm:$0x1]
        %v530 = vmul.f32 %v528, %v471
        %v531 = vmul.f32 %v529, %v471
        %v532 = vadd.f32 %v525, %v530
        %v533 = vadd.f32 %v526, %v531
        %v534 = vmax.f32 %v514, %v532
        %v535 = vmax.f32 %v515, %v533
        %s536 = sld [smem:[#allocation4 + %s448]]
        %v537 = vstv %s536
        %v538 = vadd.f32 %v534, %v537
        %v539 = vadd.f32 %v535, %v537
        %v540 = vmax.f32 %v538, 0.0
        %v541 = vmax.f32 %v539, 0.0
        %vm542 = vcmask 72704
        %543 = vst.msk [vmem:[%s445] sm:$0xff] %vm542, %v540
        %vm544 = vcmask 65536
        %545 = vst.msk [vmem:[%s445 + $0x8] sm:$0x1] %vm544, %v541
        %s546 = sadd.s32 %s448, 1
        %v547 = vld [vmem:[%s400] sm:$0xff]
        %v548 = vld [vmem:[%s400 + $0x8] sm:$0x1]
        %s549 = smul.u32 %s546, 128
        %s550 = sld [smem:[#allocation2 + %s549]]
        %v551 = vstv %s550
        %v552 = vmul.f32 %v547, %v551
        %v553 = vmul.f32 %v548, %v551
        %v554 = vld [vmem:[%s456] sm:$0xff]
        %v555 = vld [vmem:[%s456 + $0x8] sm:$0x1]
        %s556 = sadd.s32 %s549, 1
        %s557 = sld [smem:[#allocation2 + %s556]]
        %v558 = vstv %s557
        %v559 = vmul.f32 %v554, %v558
        %v560 = vmul.f32 %v555, %v558
        %v561 = vadd.f32 %v552, %v559
        %v562 = vadd.f32 %v553, %v560
        %v563 = vld [vmem:[%s466] sm:$0xff]
        %v564 = vld [vmem:[%s466 + $0x8] sm:$0x1]
        %s565 = sadd.s32 %s549, 2
        %s566 = sld [smem:[#allocation2 + %s565]]
        %v567 = vstv %s566
        %v568 = vmul.f32 %v563, %v567
        %v569 = vmul.f32 %v564, %v567
        %v570 = vadd.f32 %v561, %v568
        %v571 = vadd.f32 %v562, %v569
        %v572 = vld [vmem:[%s410] sm:$0xff]
        %v573 = vld [vmem:[%s410 + $0x8] sm:$0x1]
        %v574 = vmul.f32 %v572, %v551
        %v575 = vmul.f32 %v573, %v551
        %v576 = vld [vmem:[%s480] sm:$0xff]
        %v577 = vld [vmem:[%s480 + $0x8] sm:$0x1]
        %v578 = vmul.f32 %v576, %v558
        %v579 = vmul.f32 %v577, %v558
        %v580 = vadd.f32 %v574, %v578
        %v581 = vadd.f32 %v575, %v579
        %v582 = vld [vmem:[%s487] sm:$0xff]
        %v583 = vld [vmem:[%s487 + $0x8] sm:$0x1]
        %v584 = vmul.f32 %v582, %v567
        %v585 = vmul.f32 %v583, %v567
        %v586 = vadd.f32 %v580, %v584
        %v587 = vadd.f32 %v581, %v585
        %v588 = vmax.f32 %v570, %v586
        %v589 = vmax.f32 %v571, %v587
        %v590 = vld [vmem:[%s420] sm:$0xff]
        %v591 = vld [vmem:[%s420 + $0x8] sm:$0x1]
        %v592 = vmul.f32 %v590, %v551
        %v593 = vmul.f32 %v591, %v551
        %v594 = vld [vmem:[%s500] sm:$0xff]
        %v595 = vld [vmem:[%s500 + $0x8] sm:$0x1]
        %v596 = vmul.f32 %v594, %v558
        %v597 = vmul.f32 %v595, %v558
        %v598 = vadd.f32 %v592, %v596
        %v599 = vadd.f32 %v593, %v597
        %v600 = vld [vmem:[%s507] sm:$0xff]
        %v601 = vld [vmem:[%s507 + $0x8] sm:$0x1]
        %v602 = vmul.f32 %v600, %v567
        %v603 = vmul.f32 %v601, %v567
        %v604 = vadd.f32 %v598, %v602
        %v605 = vadd.f32 %v599, %v603
        %v606 = vmax.f32 %v588, %v604
        %v607 = vmax.f32 %v589, %v605
        %v608 = vld [vmem:[%s430] sm:$0xff]
        %v609 = vld [vmem:[%s430 + $0x8] sm:$0x1]
        %v610 = vmul.f32 %v608, %v551
        %v611 = vmul.f32 %v609, %v551
        %v612 = vld [vmem:[%s520] sm:$0xff]
        %v613 = vld [vmem:[%s520 + $0x8] sm:$0x1]
        %v614 = vmul.f32 %v612, %v558
        %v615 = vmul.f32 %v613, %v558
        %v616 = vadd.f32 %v610, %v614
        %v617 = vadd.f32 %v611, %v615
        %v618 = vld [vmem:[%s527] sm:$0xff]
        %v619 = vld [vmem:[%s527 + $0x8] sm:$0x1]
        %v620 = vmul.f32 %v618, %v567
        %v621 = vmul.f32 %v619, %v567
        %v622 = vadd.f32 %v616, %v620
        %v623 = vadd.f32 %v617, %v621
        %v624 = vmax.f32 %v606, %v622
        %v625 = vmax.f32 %v607, %v623
        %s626 = sld [smem:[#allocation4 + %s546]]
        %v627 = vstv %s626
        %v628 = vadd.f32 %v624, %v627
        %v629 = vadd.f32 %v625, %v627
        %v630 = vmax.f32 %v628, 0.0
        %v631 = vmax.f32 %v629, 0.0
        %s632 = scalar_lea.vmem %s445, 16
        %633 = vst.msk [vmem:[%s632] sm:$0xff] %vm542, %v630
        %634 = vst.msk [vmem:[%s632 + $0x8] sm:$0x1] %vm544, %v631
        %s635 = sadd.s32 %s448, 2
        %v636 = vld [vmem:[%s400] sm:$0xff]
        %v637 = vld [vmem:[%s400 + $0x8] sm:$0x1]
        %s638 = smul.u32 %s635, 128
        %s639 = sld [smem:[#allocation2 + %s638]]
        %v640 = vstv %s639
        %v641 = vmul.f32 %v636, %v640
        %v642 = vmul.f32 %v637, %v640
        %v643 = vld [vmem:[%s456] sm:$0xff]
        %v644 = vld [vmem:[%s456 + $0x8] sm:$0x1]
        %s645 = sadd.s32 %s638, 1
        %s646 = sld [smem:[#allocation2 + %s645]]
        %v647 = vstv %s646
        %v648 = vmul.f32 %v643, %v647
        %v649 = vmul.f32 %v644, %v647
        %v650 = vadd.f32 %v641, %v648
        %v651 = vadd.f32 %v642, %v649
        %v652 = vld [vmem:[%s466] sm:$0xff]
        %v653 = vld [vmem:[%s466 + $0x8] sm:$0x1]
        %s654 = sadd.s32 %s638, 2
        %s655 = sld [smem:[#allocation2 + %s654]]
        %v656 = vstv %s655
        %v657 = vmul.f32 %v652, %v656
        %v658 = vmul.f32 %v653, %v656
        %v659 = vadd.f32 %v650, %v657
        %v660 = vadd.f32 %v651, %v658
        %v661 = vld [vmem:[%s410] sm:$0xff]
        %v662 = vld [vmem:[%s410 + $0x8] sm:$0x1]
        %v663 = vmul.f32 %v661, %v640
        %v664 = vmul.f32 %v662, %v640
        %v665 = vld [vmem:[%s480] sm:$0xff]
        %v666 = vld [vmem:[%s480 + $0x8] sm:$0x1]
        %v667 = vmul.f32 %v665, %v647
        %v668 = vmul.f32 %v666, %v647
        %v669 = vadd.f32 %v663, %v667
        %v670 = vadd.f32 %v664, %v668
        %v671 = vld [vmem:[%s487] sm:$0xff]
        %v672 = vld [vmem:[%s487 + $0x8] sm:$0x1]
        %v673 = vmul.f32 %v671, %v656
        %v674 = vmul.f32 %v672, %v656
        %v675 = vadd.f32 %v669, %v673
        %v676 = vadd.f32 %v670, %v674
        %v677 = vmax.f32 %v659, %v675
        %v678 = vmax.f32 %v660, %v676
        %v679 = vld [vmem:[%s420] sm:$0xff]
        %v680 = vld [vmem:[%s420 + $0x8] sm:$0x1]
        %v681 = vmul.f32 %v679, %v640
        %v682 = vmul.f32 %v680, %v640
        %v683 = vld [vmem:[%s500] sm:$0xff]
        %v684 = vld [vmem:[%s500 + $0x8] sm:$0x1]
        %v685 = vmul.f32 %v683, %v647
        %v686 = vmul.f32 %v684, %v647
        %v687 = vadd.f32 %v681, %v685
        %v688 = vadd.f32 %v682, %v686
        %v689 = vld [vmem:[%s507] sm:$0xff]
        %v690 = vld [vmem:[%s507 + $0x8] sm:$0x1]
        %v691 = vmul.f32 %v689, %v656
        %v692 = vmul.f32 %v690, %v656
        %v693 = vadd.f32 %v687, %v691
        %v694 = vadd.f32 %v688, %v692
        %v695 = vmax.f32 %v677, %v693
        %v696 = vmax.f32 %v678, %v694
        %v697 = vld [vmem:[%s430] sm:$0xff]
        %v698 = vld [vmem:[%s430 + $0x8] sm:$0x1]
        %v699 = vmul.f32 %v697, %v640
        %v700 = vmul.f32 %v698, %v640
        %v701 = vld [vmem:[%s520] sm:$0xff]
        %v702 = vld [vmem:[%s520 + $0x8] sm:$0x1]
        %v703 = vmul.f32 %v701, %v647
        %v704 = vmul.f32 %v702, %v647
        %v705 = vadd.f32 %v699, %v703
        %v706 = vadd.f32 %v700, %v704
        %v707 = vld [vmem:[%s527] sm:$0xff]
        %v708 = vld [vmem:[%s527 + $0x8] sm:$0x1]
        %v709 = vmul.f32 %v707, %v656
        %v710 = vmul.f32 %v708, %v656
        %v711 = vadd.f32 %v705, %v709
        %v712 = vadd.f32 %v706, %v710
        %v713 = vmax.f32 %v695, %v711
        %v714 = vmax.f32 %v696, %v712
        %s715 = sld [smem:[#allocation4 + %s635]]
        %v716 = vstv %s715
        %v717 = vadd.f32 %v713, %v716
        %v718 = vadd.f32 %v714, %v716
        %v719 = vmax.f32 %v717, 0.0
        %v720 = vmax.f32 %v718, 0.0
        %s721 = scalar_lea.vmem %s445, 32
        %722 = vst.msk [vmem:[%s721] sm:$0xff] %vm542, %v719
        %723 = vst.msk [vmem:[%s721 + $0x8] sm:$0x1] %vm544, %v720
        %s724 = sadd.s32 %s448, 3
        %v725 = vld [vmem:[%s400] sm:$0xff]
        %v726 = vld [vmem:[%s400 + $0x8] sm:$0x1]
        %s727 = smul.u32 %s724, 128
        %s728 = sld [smem:[#allocation2 + %s727]]
        %v729 = vstv %s728
        %v730 = vmul.f32 %v725, %v729
        %v731 = vmul.f32 %v726, %v729
        %v732 = vld [vmem:[%s456] sm:$0xff]
        %v733 = vld [vmem:[%s456 + $0x8] sm:$0x1]
        %s734 = sadd.s32 %s727, 1
        %s735 = sld [smem:[#allocation2 + %s734]]
        %v736 = vstv %s735
        %v737 = vmul.f32 %v732, %v736
        %v738 = vmul.f32 %v733, %v736
        %v739 = vadd.f32 %v730, %v737
        %v740 = vadd.f32 %v731, %v738
        %v741 = vld [vmem:[%s466] sm:$0xff]
        %v742 = vld [vmem:[%s466 + $0x8] sm:$0x1]
        %s743 = sadd.s32 %s727, 2
        %s744 = sld [smem:[#allocation2 + %s743]]
        %v745 = vstv %s744
        %v746 = vmul.f32 %v741, %v745
        %v747 = vmul.f32 %v742, %v745
        %v748 = vadd.f32 %v739, %v746
        %v749 = vadd.f32 %v740, %v747
        %v750 = vld [vmem:[%s410] sm:$0xff]
        %v751 = vld [vmem:[%s410 + $0x8] sm:$0x1]
        %v752 = vmul.f32 %v750, %v729
        %v753 = vmul.f32 %v751, %v729
        %v754 = vld [vmem:[%s480] sm:$0xff]
        %v755 = vld [vmem:[%s480 + $0x8] sm:$0x1]
        %v756 = vmul.f32 %v754, %v736
        %v757 = vmul.f32 %v755, %v736
        %v758 = vadd.f32 %v752, %v756
        %v759 = vadd.f32 %v753, %v757
        %v760 = vld [vmem:[%s487] sm:$0xff]
        %v761 = vld [vmem:[%s487 + $0x8] sm:$0x1]
        %v762 = vmul.f32 %v760, %v745
        %v763 = vmul.f32 %v761, %v745
        %v764 = vadd.f32 %v758, %v762
        %v765 = vadd.f32 %v759, %v763
        %v766 = vmax.f32 %v748, %v764
        %v767 = vmax.f32 %v749, %v765
        %v768 = vld [vmem:[%s420] sm:$0xff]
        %v769 = vld [vmem:[%s420 + $0x8] sm:$0x1]
        %v770 = vmul.f32 %v768, %v729
        %v771 = vmul.f32 %v769, %v729
        %v772 = vld [vmem:[%s500] sm:$0xff]
        %v773 = vld [vmem:[%s500 + $0x8] sm:$0x1]
        %v774 = vmul.f32 %v772, %v736
        %v775 = vmul.f32 %v773, %v736
        %v776 = vadd.f32 %v770, %v774
        %v777 = vadd.f32 %v771, %v775
        %v778 = vld [vmem:[%s507] sm:$0xff]
        %v779 = vld [vmem:[%s507 + $0x8] sm:$0x1]
        %v780 = vmul.f32 %v778, %v745
        %v781 = vmul.f32 %v779, %v745
        %v782 = vadd.f32 %v776, %v780
        %v783 = vadd.f32 %v777, %v781
        %v784 = vmax.f32 %v766, %v782
        %v785 = vmax.f32 %v767, %v783
        %v786 = vld [vmem:[%s430] sm:$0xff]
        %v787 = vld [vmem:[%s430 + $0x8] sm:$0x1]
        %v788 = vmul.f32 %v786, %v729
        %v789 = vmul.f32 %v787, %v729
        %v790 = vld [vmem:[%s520] sm:$0xff]
        %v791 = vld [vmem:[%s520 + $0x8] sm:$0x1]
        %v792 = vmul.f32 %v790, %v736
        %v793 = vmul.f32 %v791, %v736
        %v794 = vadd.f32 %v788, %v792
        %v795 = vadd.f32 %v789, %v793
        %v796 = vld [vmem:[%s527] sm:$0xff]
        %v797 = vld [vmem:[%s527 + $0x8] sm:$0x1]
        %v798 = vmul.f32 %v796, %v745
        %v799 = vmul.f32 %v797, %v745
        %v800 = vadd.f32 %v794, %v798
        %v801 = vadd.f32 %v795, %v799
        %v802 = vmax.f32 %v784, %v800
        %v803 = vmax.f32 %v785, %v801
        %s804 = sld [smem:[#allocation4 + %s724]]
        %v805 = vstv %s804
        %v806 = vadd.f32 %v802, %v805
        %v807 = vadd.f32 %v803, %v805
        %v808 = vmax.f32 %v806, 0.0
        %v809 = vmax.f32 %v807, 0.0
        %s810 = scalar_lea.vmem %s445, 48
        %811 = vst.msk [vmem:[%s810] sm:$0xff] %vm542, %v808
        %812 = vst.msk [vmem:[%s810 + $0x8] sm:$0x1] %vm544, %v809
        %s813 = sadd.s32 %s448, 4
        %v814 = vld [vmem:[%s400] sm:$0xff]
        %v815 = vld [vmem:[%s400 + $0x8] sm:$0x1]
        %s816 = smul.u32 %s813, 128
        %s817 = sld [smem:[#allocation2 + %s816]]
        %v818 = vstv %s817
        %v819 = vmul.f32 %v814, %v818
        %v820 = vmul.f32 %v815, %v818
        %v821 = vld [vmem:[%s456] sm:$0xff]
        %v822 = vld [vmem:[%s456 + $0x8] sm:$0x1]
        %s823 = sadd.s32 %s816, 1
        %s824 = sld [smem:[#allocation2 + %s823]]
        %v825 = vstv %s824
        %v826 = vmul.f32 %v821, %v825
        %v827 = vmul.f32 %v822, %v825
        %v828 = vadd.f32 %v819, %v826
        %v829 = vadd.f32 %v820, %v827
        %v830 = vld [vmem:[%s466] sm:$0xff]
        %v831 = vld [vmem:[%s466 + $0x8] sm:$0x1]
        %s832 = sadd.s32 %s816, 2
        %s833 = sld [smem:[#allocation2 + %s832]]
        %v834 = vstv %s833
        %v835 = vmul.f32 %v830, %v834
        %v836 = vmul.f32 %v831, %v834
        %v837 = vadd.f32 %v828, %v835
        %v838 = vadd.f32 %v829, %v836
        %v839 = vld [vmem:[%s410] sm:$0xff]
        %v840 = vld [vmem:[%s410 + $0x8] sm:$0x1]
        %v841 = vmul.f32 %v839, %v818
        %v842 = vmul.f32 %v840, %v818
        %v843 = vld [vmem:[%s480] sm:$0xff]
        %v844 = vld [vmem:[%s480 + $0x8] sm:$0x1]
        %v845 = vmul.f32 %v843, %v825
        %v846 = vmul.f32 %v844, %v825
        %v847 = vadd.f32 %v841, %v845
        %v848 = vadd.f32 %v842, %v846
        %v849 = vld [vmem:[%s487] sm:$0xff]
        %v850 = vld [vmem:[%s487 + $0x8] sm:$0x1]
        %v851 = vmul.f32 %v849, %v834
        %v852 = vmul.f32 %v850, %v834
        %v853 = vadd.f32 %v847, %v851
        %v854 = vadd.f32 %v848, %v852
        %v855 = vmax.f32 %v837, %v853
        %v856 = vmax.f32 %v838, %v854
        %v857 = vld [vmem:[%s420] sm:$0xff]
        %v858 = vld [vmem:[%s420 + $0x8] sm:$0x1]
        %v859 = vmul.f32 %v857, %v818
        %v860 = vmul.f32 %v858, %v818
        %v861 = vld [vmem:[%s500] sm:$0xff]
        %v862 = vld [vmem:[%s500 + $0x8] sm:$0x1]
        %v863 = vmul.f32 %v861, %v825
        %v864 = vmul.f32 %v862, %v825
        %v865 = vadd.f32 %v859, %v863
        %v866 = vadd.f32 %v860, %v864
        %v867 = vld [vmem:[%s507] sm:$0xff]
        %v868 = vld [vmem:[%s507 + $0x8] sm:$0x1]
        %v869 = vmul.f32 %v867, %v834
        %v870 = vmul.f32 %v868, %v834
        %v871 = vadd.f32 %v865, %v869
        %v872 = vadd.f32 %v866, %v870
        %v873 = vmax.f32 %v855, %v871
        %v874 = vmax.f32 %v856, %v872
        %v875 = vld [vmem:[%s430] sm:$0xff]
        %v876 = vld [vmem:[%s430 + $0x8] sm:$0x1]
        %v877 = vmul.f32 %v875, %v818
        %v878 = vmul.f32 %v876, %v818
        %v879 = vld [vmem:[%s520] sm:$0xff]
        %v880 = vld [vmem:[%s520 + $0x8] sm:$0x1]
        %v881 = vmul.f32 %v879, %v825
        %v882 = vmul.f32 %v880, %v825
        %v883 = vadd.f32 %v877, %v881
        %v884 = vadd.f32 %v878, %v882
        %v885 = vld [vmem:[%s527] sm:$0xff]
        %v886 = vld [vmem:[%s527 + $0x8] sm:$0x1]
        %v887 = vmul.f32 %v885, %v834
        %v888 = vmul.f32 %v886, %v834
        %v889 = vadd.f32 %v883, %v887
        %v890 = vadd.f32 %v884, %v888
        %v891 = vmax.f32 %v873, %v889
        %v892 = vmax.f32 %v874, %v890
        %s893 = sld [smem:[#allocation4 + %s813]]
        %v894 = vstv %s893
        %v895 = vadd.f32 %v891, %v894
        %v896 = vadd.f32 %v892, %v894
        %v897 = vmax.f32 %v895, 0.0
        %v898 = vmax.f32 %v896, 0.0
        %s899 = scalar_lea.vmem %s445, 64
        %900 = vst.msk [vmem:[%s899] sm:$0xff] %vm542, %v897
        %901 = vst.msk [vmem:[%s899 + $0x8] sm:$0x1] %vm544, %v898
        %s902 = sadd.s32 %s448, 5
        %v903 = vld [vmem:[%s400] sm:$0xff]
        %v904 = vld [vmem:[%s400 + $0x8] sm:$0x1]
        %s905 = smul.u32 %s902, 128
        %s906 = sld [smem:[#allocation2 + %s905]]
        %v907 = vstv %s906
        %v908 = vmul.f32 %v903, %v907
        %v909 = vmul.f32 %v904, %v907
        %v910 = vld [vmem:[%s456] sm:$0xff]
        %v911 = vld [vmem:[%s456 + $0x8] sm:$0x1]
        %s912 = sadd.s32 %s905, 1
        %s913 = sld [smem:[#allocation2 + %s912]]
        %v914 = vstv %s913
        %v915 = vmul.f32 %v910, %v914
        %v916 = vmul.f32 %v911, %v914
        %v917 = vadd.f32 %v908, %v915
        %v918 = vadd.f32 %v909, %v916
        %v919 = vld [vmem:[%s466] sm:$0xff]
        %v920 = vld [vmem:[%s466 + $0x8] sm:$0x1]
        %s921 = sadd.s32 %s905, 2
        %s922 = sld [smem:[#allocation2 + %s921]]
        %v923 = vstv %s922
        %v924 = vmul.f32 %v919, %v923
        %v925 = vmul.f32 %v920, %v923
        %v926 = vadd.f32 %v917, %v924
        %v927 = vadd.f32 %v918, %v925
        %v928 = vld [vmem:[%s410] sm:$0xff]
        %v929 = vld [vmem:[%s410 + $0x8] sm:$0x1]
        %v930 = vmul.f32 %v928, %v907
        %v931 = vmul.f32 %v929, %v907
        %v932 = vld [vmem:[%s480] sm:$0xff]
        %v933 = vld [vmem:[%s480 + $0x8] sm:$0x1]
        %v934 = vmul.f32 %v932, %v914
        %v935 = vmul.f32 %v933, %v914
        %v936 = vadd.f32 %v930, %v934
        %v937 = vadd.f32 %v931, %v935
        %v938 = vld [vmem:[%s487] sm:$0xff]
        %v939 = vld [vmem:[%s487 + $0x8] sm:$0x1]
        %v940 = vmul.f32 %v938, %v923
        %v941 = vmul.f32 %v939, %v923
        %v942 = vadd.f32 %v936, %v940
        %v943 = vadd.f32 %v937, %v941
        %v944 = vmax.f32 %v926, %v942
        %v945 = vmax.f32 %v927, %v943
        %v946 = vld [vmem:[%s420] sm:$0xff]
        %v947 = vld [vmem:[%s420 + $0x8] sm:$0x1]
        %v948 = vmul.f32 %v946, %v907
        %v949 = vmul.f32 %v947, %v907
        %v950 = vld [vmem:[%s500] sm:$0xff]
        %v951 = vld [vmem:[%s500 + $0x8] sm:$0x1]
        %v952 = vmul.f32 %v950, %v914
        %v953 = vmul.f32 %v951, %v914
        %v954 = vadd.f32 %v948, %v952
        %v955 = vadd.f32 %v949, %v953
        %v956 = vld [vmem:[%s507] sm:$0xff]
        %v957 = vld [vmem:[%s507 + $0x8] sm:$0x1]
        %v958 = vmul.f32 %v956, %v923
        %v959 = vmul.f32 %v957, %v923
        %v960 = vadd.f32 %v954, %v958
        %v961 = vadd.f32 %v955, %v959
        %v962 = vmax.f32 %v944, %v960
        %v963 = vmax.f32 %v945, %v961
        %v964 = vld [vmem:[%s430] sm:$0xff]
        %v965 = vld [vmem:[%s430 + $0x8] sm:$0x1]
        %v966 = vmul.f32 %v964, %v907
        %v967 = vmul.f32 %v965, %v907
        %v968 = vld [vmem:[%s520] sm:$0xff]
        %v969 = vld [vmem:[%s520 + $0x8] sm:$0x1]
        %v970 = vmul.f32 %v968, %v914
        %v971 = vmul.f32 %v969, %v914
        %v972 = vadd.f32 %v966, %v970
        %v973 = vadd.f32 %v967, %v971
        %v974 = vld [vmem:[%s527] sm:$0xff]
        %v975 = vld [vmem:[%s527 + $0x8] sm:$0x1]
        %v976 = vmul.f32 %v974, %v923
        %v977 = vmul.f32 %v975, %v923
        %v978 = vadd.f32 %v972, %v976
        %v979 = vadd.f32 %v973, %v977
        %v980 = vmax.f32 %v962, %v978
        %v981 = vmax.f32 %v963, %v979
        %s982 = sld [smem:[#allocation4 + %s902]]
        %v983 = vstv %s982
        %v984 = vadd.f32 %v980, %v983
        %v985 = vadd.f32 %v981, %v983
        %v986 = vmax.f32 %v984, 0.0
        %v987 = vmax.f32 %v985, 0.0
        %s988 = scalar_lea.vmem %s445, 80
        %989 = vst.msk [vmem:[%s988] sm:$0xff] %vm542, %v986
        %990 = vst.msk [vmem:[%s988 + $0x8] sm:$0x1] %vm544, %v987
        %s991 = sadd.s32 %s448, 6
        %v992 = vld [vmem:[%s400] sm:$0xff]
        %v993 = vld [vmem:[%s400 + $0x8] sm:$0x1]
        %s994 = smul.u32 %s991, 128
        %s995 = sld [smem:[#allocation2 + %s994]]
        %v996 = vstv %s995
        %v997 = vmul.f32 %v992, %v996
        %v998 = vmul.f32 %v993, %v996
        %v999 = vld [vmem:[%s456] sm:$0xff]
        %v1000 = vld [vmem:[%s456 + $0x8] sm:$0x1]
        %s1001 = sadd.s32 %s994, 1
        %s1002 = sld [smem:[#allocation2 + %s1001]]
        %v1003 = vstv %s1002
        %v1004 = vmul.f32 %v999, %v1003
        %v1005 = vmul.f32 %v1000, %v1003
        %v1006 = vadd.f32 %v997, %v1004
        %v1007 = vadd.f32 %v998, %v1005
        %v1008 = vld [vmem:[%s466] sm:$0xff]
        %v1009 = vld [vmem:[%s466 + $0x8] sm:$0x1]
        %s1010 = sadd.s32 %s994, 2
        %s1011 = sld [smem:[#allocation2 + %s1010]]
        %v1012 = vstv %s1011
        %v1013 = vmul.f32 %v1008, %v1012
        %v1014 = vmul.f32 %v1009, %v1012
        %v1015 = vadd.f32 %v1006, %v1013
        %v1016 = vadd.f32 %v1007, %v1014
        %v1017 = vld [vmem:[%s410] sm:$0xff]
        %v1018 = vld [vmem:[%s410 + $0x8] sm:$0x1]
        %v1019 = vmul.f32 %v1017, %v996
        %v1020 = vmul.f32 %v1018, %v996
        %v1021 = vld [vmem:[%s480] sm:$0xff]
        %v1022 = vld [vmem:[%s480 + $0x8] sm:$0x1]
        %v1023 = vmul.f32 %v1021, %v1003
        %v1024 = vmul.f32 %v1022, %v1003
        %v1025 = vadd.f32 %v1019, %v1023
        %v1026 = vadd.f32 %v1020, %v1024
        %v1027 = vld [vmem:[%s487] sm:$0xff]
        %v1028 = vld [vmem:[%s487 + $0x8] sm:$0x1]
        %v1029 = vmul.f32 %v1027, %v1012
        %v1030 = vmul.f32 %v1028, %v1012
        %v1031 = vadd.f32 %v1025, %v1029
        %v1032 = vadd.f32 %v1026, %v1030
        %v1033 = vmax.f32 %v1015, %v1031
        %v1034 = vmax.f32 %v1016, %v1032
        %v1035 = vld [vmem:[%s420] sm:$0xff]
        %v1036 = vld [vmem:[%s420 + $0x8] sm:$0x1]
        %v1037 = vmul.f32 %v1035, %v996
        %v1038 = vmul.f32 %v1036, %v996
        %v1039 = vld [vmem:[%s500] sm:$0xff]
        %v1040 = vld [vmem:[%s500 + $0x8] sm:$0x1]
        %v1041 = vmul.f32 %v1039, %v1003
        %v1042 = vmul.f32 %v1040, %v1003
        %v1043 = vadd.f32 %v1037, %v1041
        %v1044 = vadd.f32 %v1038, %v1042
        %v1045 = vld [vmem:[%s507] sm:$0xff]
        %v1046 = vld [vmem:[%s507 + $0x8] sm:$0x1]
        %v1047 = vmul.f32 %v1045, %v1012
        %v1048 = vmul.f32 %v1046, %v1012
        %v1049 = vadd.f32 %v1043, %v1047
        %v1050 = vadd.f32 %v1044, %v1048
        %v1051 = vmax.f32 %v1033, %v1049
        %v1052 = vmax.f32 %v1034, %v1050
        %v1053 = vld [vmem:[%s430] sm:$0xff]
        %v1054 = vld [vmem:[%s430 + $0x8] sm:$0x1]
        %v1055 = vmul.f32 %v1053, %v996
        %v1056 = vmul.f32 %v1054, %v996
        %v1057 = vld [vmem:[%s520] sm:$0xff]
        %v1058 = vld [vmem:[%s520 + $0x8] sm:$0x1]
        %v1059 = vmul.f32 %v1057, %v1003
        %v1060 = vmul.f32 %v1058, %v1003
        %v1061 = vadd.f32 %v1055, %v1059
        %v1062 = vadd.f32 %v1056, %v1060
        %v1063 = vld [vmem:[%s527] sm:$0xff]
        %v1064 = vld [vmem:[%s527 + $0x8] sm:$0x1]
        %v1065 = vmul.f32 %v1063, %v1012
        %v1066 = vmul.f32 %v1064, %v1012
        %v1067 = vadd.f32 %v1061, %v1065
        %v1068 = vadd.f32 %v1062, %v1066
        %v1069 = vmax.f32 %v1051, %v1067
        %v1070 = vmax.f32 %v1052, %v1068
        %s1071 = sld [smem:[#allocation4 + %s991]]
        %v1072 = vstv %s1071
        %v1073 = vadd.f32 %v1069, %v1072
        %v1074 = vadd.f32 %v1070, %v1072
        %v1075 = vmax.f32 %v1073, 0.0
        %v1076 = vmax.f32 %v1074, 0.0
        %s1077 = scalar_lea.vmem %s445, 96
        %1078 = vst.msk [vmem:[%s1077] sm:$0xff] %vm542, %v1075
        %1079 = vst.msk [vmem:[%s1077 + $0x8] sm:$0x1] %vm544, %v1076
        %s1080 = sadd.s32 %s448, 7
        %v1081 = vld [vmem:[%s400] sm:$0xff]
        %v1082 = vld [vmem:[%s400 + $0x8] sm:$0x1]
        %s1083 = smul.u32 %s1080, 128
        %s1084 = sld [smem:[#allocation2 + %s1083]]
        %v1085 = vstv %s1084
        %v1086 = vmul.f32 %v1081, %v1085
        %v1087 = vmul.f32 %v1082, %v1085
        %v1088 = vld [vmem:[%s456] sm:$0xff]
        %v1089 = vld [vmem:[%s456 + $0x8] sm:$0x1]
        %s1090 = sadd.s32 %s1083, 1
        %s1091 = sld [smem:[#allocation2 + %s1090]]
        %v1092 = vstv %s1091
        %v1093 = vmul.f32 %v1088, %v1092
        %v1094 = vmul.f32 %v1089, %v1092
        %v1095 = vadd.f32 %v1086, %v1093
        %v1096 = vadd.f32 %v1087, %v1094
        %v1097 = vld [vmem:[%s466] sm:$0xff]
        %v1098 = vld [vmem:[%s466 + $0x8] sm:$0x1]
        %s1099 = sadd.s32 %s1083, 2
        %s1100 = sld [smem:[#allocation2 + %s1099]]
        %v1101 = vstv %s1100
        %v1102 = vmul.f32 %v1097, %v1101
        %v1103 = vmul.f32 %v1098, %v1101
        %v1104 = vadd.f32 %v1095, %v1102
        %v1105 = vadd.f32 %v1096, %v1103
        %v1106 = vld [vmem:[%s410] sm:$0xff]
        %v1107 = vld [vmem:[%s410 + $0x8] sm:$0x1]
        %v1108 = vmul.f32 %v1106, %v1085
        %v1109 = vmul.f32 %v1107, %v1085
        %v1110 = vld [vmem:[%s480] sm:$0xff]
        %v1111 = vld [vmem:[%s480 + $0x8] sm:$0x1]
        %v1112 = vmul.f32 %v1110, %v1092
        %v1113 = vmul.f32 %v1111, %v1092
        %v1114 = vadd.f32 %v1108, %v1112
        %v1115 = vadd.f32 %v1109, %v1113
        %v1116 = vld [vmem:[%s487] sm:$0xff]
        %v1117 = vld [vmem:[%s487 + $0x8] sm:$0x1]
        %v1118 = vmul.f32 %v1116, %v1101
        %v1119 = vmul.f32 %v1117, %v1101
        %v1120 = vadd.f32 %v1114, %v1118
        %v1121 = vadd.f32 %v1115, %v1119
        %v1122 = vmax.f32 %v1104, %v1120
        %v1123 = vmax.f32 %v1105, %v1121
        %v1124 = vld [vmem:[%s420] sm:$0xff]
        %v1125 = vld [vmem:[%s420 + $0x8] sm:$0x1]
        %v1126 = vmul.f32 %v1124, %v1085
        %v1127 = vmul.f32 %v1125, %v1085
        %v1128 = vld [vmem:[%s500] sm:$0xff]
        %v1129 = vld [vmem:[%s500 + $0x8] sm:$0x1]
        %v1130 = vmul.f32 %v1128, %v1092
        %v1131 = vmul.f32 %v1129, %v1092
        %v1132 = vadd.f32 %v1126, %v1130
        %v1133 = vadd.f32 %v1127, %v1131
        %v1134 = vld [vmem:[%s507] sm:$0xff]
        %v1135 = vld [vmem:[%s507 + $0x8] sm:$0x1]
        %v1136 = vmul.f32 %v1134, %v1101
        %v1137 = vmul.f32 %v1135, %v1101
        %v1138 = vadd.f32 %v1132, %v1136
        %v1139 = vadd.f32 %v1133, %v1137
        %v1140 = vmax.f32 %v1122, %v1138
        %v1141 = vmax.f32 %v1123, %v1139
        %v1142 = vld [vmem:[%s430] sm:$0xff]
        %v1143 = vld [vmem:[%s430 + $0x8] sm:$0x1]
        %v1144 = vmul.f32 %v1142, %v1085
        %v1145 = vmul.f32 %v1143, %v1085
        %v1146 = vld [vmem:[%s520] sm:$0xff]
        %v1147 = vld [vmem:[%s520 + $0x8] sm:$0x1]
        %v1148 = vmul.f32 %v1146, %v1092
        %v1149 = vmul.f32 %v1147, %v1092
        %v1150 = vadd.f32 %v1144, %v1148
        %v1151 = vadd.f32 %v1145, %v1149
        %v1152 = vld [vmem:[%s527] sm:$0xff]
        %v1153 = vld [vmem:[%s527 + $0x8] sm:$0x1]
        %v1154 = vmul.f32 %v1152, %v1101
        %v1155 = vmul.f32 %v1153, %v1101
        %v1156 = vadd.f32 %v1150, %v1154
        %v1157 = vadd.f32 %v1151, %v1155
        %v1158 = vmax.f32 %v1140, %v1156
        %v1159 = vmax.f32 %v1141, %v1157
        %s1160 = sld [smem:[#allocation4 + %s1080]]
        %v1161 = vstv %s1160
        %v1162 = vadd.f32 %v1158, %v1161
        %v1163 = vadd.f32 %v1159, %v1161
        %v1164 = vmax.f32 %v1162, 0.0
        %v1165 = vmax.f32 %v1163, 0.0
        %s1166 = scalar_lea.vmem %s445, 112
        %1167 = vst.msk [vmem:[%s1166] sm:$0xff] %vm542, %v1164
        %1168 = vst.msk [vmem:[%s1166 + $0x8] sm:$0x1] %vm544, %v1165
        %s1169 = smul.u32 8, %s26
        %s1170 = smul.u32 2, %s25
        %p1171 = scmp.lt.s32.totalorder %s24, 1
        %s1172 = scalar_select %p1171, %s24, 1
        %p1173 = scmp.lt.s32.totalorder %s1169, 15
        %s1174 = scalar_select %p1173, %s1169, 15
        %p1175 = scmp.lt.s32.totalorder %s1170, 1
        %s1176 = scalar_select %p1175, %s1170, 1
        %s1177 = smul.addr %s1174, 2
        %s1178 = sadd.s32 %s1176, %s1177
        %s1179 = smul.addr %s1172, 32
        %s1180 = sadd.s32 %s1178, %s1179
        %s1181 = smul.addr %s1180, 8
        %s1182 = scalar_lea.vmem %s6, %s1181
        // Predicated region
        $region53: #{model_forward.3} parent=43 // pred_check
          %p1183 = pneg %p214
        $region54: #{model_forward.3} parent=43 // pred_check_branch
          %1185 = sbr.rel (%p1183) target = $region56
        $region55: #{model_forward.3} parent=43 // pred_region
          %s1186 = smul.u32 8, %s26
          %s1187 = smul.u32 2, %s25
        $region56: #{model_forward.3} parent=43 // pred_fallthru
          _
      $region44: #{model_forward.3} parent=5 // pred_fallthru
        _
      %p1188 = scmp.le.s32.totalorder 2, %s14
      // Predicated region
      $region57: #{model_forward.3} parent=5 // pred_check
        %p1189 = pneg %p1188
      $region58: #{model_forward.3} parent=5 // pred_check_branch
        %1191 = sbr.rel (%p1189) target = $region60
      $region59: #{model_forward.3} parent=5 // pred_region
        %s1192 = ssub.s32 %s14, 2
        // Predicated region
        $region61: #{model_forward.3} parent=59 // pred_check
          %p1193 = pneg %p220
        $region62: #{model_forward.3} parent=59 // pred_check_branch
          %1195 = sbr.rel (%p1193) target = $region64
        $region63: #{model_forward.3} parent=59 // pred_region
          %s1196 = smul.u32 8, %s29
          %s1197 = smul.u32 2, %s28
          %p1198 = scmp.lt.s32.totalorder %s27, 1
          %s1199 = scalar_select %p1198, %s27, 1
          %p1200 = scmp.lt.s32.totalorder %s1196, 15
          %s1201 = scalar_select %p1200, %s1196, 15
          %p1202 = scmp.lt.s32.totalorder %s1197, 1
          %s1203 = scalar_select %p1202, %s1197, 1
          %s1204 = smul.addr %s1201, 2
          %s1205 = sadd.s32 %s1203, %s1204
          %s1206 = smul.addr %s1199, 32
          %s1207 = sadd.s32 %s1205, %s1206
          %s1208 = smul.addr %s1207, 8
          %s1209 = scalar_lea.vmem %s6, %s1208
        $region64: #{model_forward.3} parent=59 // pred_fallthru
          _
      $region60: #{model_forward.3} parent=5 // pred_fallthru
        _
    $region6: #{model_forward.3} parent=1 // loop_footer
      %s18 = sadd.s32 1, %s14
    $region7: #{model_forward.3} parent=1 // loop_footer_branch
      %13 = sbr.rel target = $region3
    $region8: #{model_forward.3} parent=1 // loop_exit
      _
    %1210 = vsyncpa [#allocation3], 1
    %s1211 = scalar_lea.sflag [#allocation3], 1
    %1212 = vsyncpa %s1211, 1
    %1213 = vsyncpa [#allocation5], 1

</llo_original>
